<compile_context>
chip_gen: v7x
topology: tpu7x:2x2x1
jax: 0.10.0
libtpu: 0.0.40
codegen_flags: <defaults>
</compile_context>

<pallas_src>
import jax
import jax.numpy as jnp
from jax.experimental import pallas as pl
from jax.experimental.pallas import tpu as pltpu

COMPUTE_DTYPE = jnp.bfloat16     # MXU operand dtype (accumulation is f32)
LN_EPS = 1e-5
MASK_BIAS = -1e30                # finite; avoids NaN for fully-masked rows


# ----------------------------------------------------------------------------- kernel
def encoder_layer_kernel(x_ref, mb_ref, relw_ref,
                         wq_ref, wk_ref, wv_ref, bu_ref, bv_ref, wo_ref,
                         g1_ref, be1_ref, w1_ref, c1_ref, w2_ref, c2_ref,
                         g2_ref, be2_ref, o_ref, carry_ref):
    """One grid step = one (batch b, layer l) pair.  grid = (B, L).

    x_ref : (T, M)       encoder input (read only at l == 0)
    mb_ref: (1, T)       additive key-mask bias (0 valid / -1e30 masked)
    relw_ref: (E, 2T-1)  relative-position table window, transposed, bf16
    wq/wk/wv: (M, H*E)   head-major projection matrices (bf16)
    bu/bv   : (1, H*E)   flattened head-major biases (f32)
    wo      : (H*E, M)   fused output projection (bf16)
    g/be    : (1, M)     LayerNorm affine params; w1 (M,I) c1 (1,I) w2 (I,M) c2 (1,M)
    carry_ref: (T, M)    f32 activation carried across the layer axis
    """
    T, M = carry_ref.shape
    HE = bu_ref.shape[-1]
    E = relw_ref.shape[0]
    H = HE // E
    inv_scale = 1.0 / (float(E) ** 0.5)
    cdt = COMPUTE_DTYPE

    l = pl.program_id(1)

    @pl.when(l == 0)
    def _init():
        carry_ref[...] = x_ref[...]

    h_in = carry_ref[...]                               # (T, M) f32
    hc = h_in.astype(cdt)

    # fused Q/K/V projections (heads packed head-major along the last dim)
    qall = jnp.dot(hc, wq_ref[...], preferred_element_type=jnp.float32)   # (T, H*E)
    kall = jnp.dot(hc, wk_ref[...], preferred_element_type=jnp.float32)
    vall = jnp.dot(hc, wv_ref[...], preferred_element_type=jnp.float32)

    # hoisted bias adds + one bf16 cast per tensor (not per head)
    qu = (qall + bu_ref[...]).astype(cdt)               # (T, H*E)
    qv = (qall + bv_ref[...]).astype(cdt)
    kb = kall.astype(cdt)
    vb = vall.astype(cdt)

    relw = relw_ref[...]                                # (E, 2T-1) bf16
    mb = mb_ref[...]                                    # (1, T)

    head_outs = []
    for h in range(H):                                  # static unroll over heads
        lo = h * E
        qh_u = qu[:, lo:lo + E]
        qh_v = qv[:, lo:lo + E]
        kh = kb[:, lo:lo + E]
        vh = vb[:, lo:lo + E]

        # content term on the MXU: (q + b_u) @ k^T
        content = jax.lax.dot_general(
            qh_u, kh, dimension_numbers=(((1,), (1,)), ((), ())),
            preferred_element_type=jnp.float32)                          # (T, T)

        # relative-position term on the MXU against the (E, 2T-1) window,
        # then relative shift: posterm[q, k] = srel[q, k - q + T - 1].
        srel = jnp.dot(qh_v, relw, preferred_element_type=jnp.float32)   # (T, 2T-1)
        rows = [srel[q:q + 1, T - 1 - q:2 * T - 1 - q] for q in range(T)]
        posterm = jnp.concatenate(rows, axis=0)                          # (T, T)

        scores = (content + posterm) * inv_scale + mb                    # mask keys
        scores = scores - jnp.max(scores, axis=-1, keepdims=True)
        e_s = jnp.exp(scores)
        att = e_s * pl.reciprocal(jnp.sum(e_s, axis=-1, keepdims=True),
                                  approx=True)                           # softmax(k)

        head_outs.append(
            jnp.dot(att.astype(cdt), vh, preferred_element_type=jnp.float32))  # (T, E)

    # fused output projection: one (T, H*E) @ (H*E, M) matmul
    slab = jnp.concatenate(head_outs, axis=1).astype(cdt)                # (T, H*E)
    attn_out = jnp.dot(slab, wo_ref[...], preferred_element_type=jnp.float32)  # (T, M)

    def layer_norm(a, g, b):
        mu = jnp.mean(a, axis=-1, keepdims=True)
        var = jnp.mean((a - mu) ** 2, axis=-1, keepdims=True)
        return (a - mu) * jax.lax.rsqrt(var + LN_EPS) * g + b

    # residual + LayerNorm (attention), all f32
    x1 = layer_norm(h_in + attn_out, g1_ref[...], be1_ref[...])

    # FFN: Linear -> ReLU -> Linear (bf16 operands, f32 accumulation)
    hid = jnp.maximum(
        jnp.dot(x1.astype(cdt), w1_ref[...], preferred_element_type=jnp.float32)
        + c1_ref[...], 0.0)
    ffn = (jnp.dot(hid.astype(cdt), w2_ref[...], preferred_element_type=jnp.float32)
           + c2_ref[...])

    # residual + LayerNorm (FFN)
    x2 = layer_norm(x1 + ffn, g2_ref[...], be2_ref[...])

    carry_ref[...] = x2

    @pl.when(l == pl.num_programs(1) - 1)
    def _emit():
        o_ref[...] = x2.astype(o_ref.dtype)


# ----------------------------------------------------------------------------- wrapper
def encoder_pallas(x, mask, layers, pos_table, offset):
    """RelativePositionTransformerEncoder forward (eval mode, post-norm)."""
    B, T, M = x.shape
    E, H = layers[0]['bu'].shape
    HE = H * E
    I = layers[0]['w1'].shape[1]
    L = len(layers)
    cdt = COMPUTE_DTYPE
    f32 = jnp.float32

    # ---- glue (plain JAX): head-major re-layouts, stacked over layers --------
    def stack(key, fn=lambda a: a):
        return jnp.stack([fn(lp[key]) for lp in layers], axis=0)

    wq_s = stack('wq', lambda w: jnp.transpose(w, (0, 2, 1)).reshape(M, HE)).astype(cdt)
    wk_s = stack('wk', lambda w: jnp.transpose(w, (0, 2, 1)).reshape(M, HE)).astype(cdt)
    wv_s = stack('wv', lambda w: jnp.transpose(w, (0, 2, 1)).reshape(M, HE)).astype(cdt)
    bu_s = stack('bu', lambda b: b.T.reshape(1, HE)).astype(f32)
    bv_s = stack('bv', lambda b: b.T.reshape(1, HE)).astype(f32)
    wo_s = stack('wo', lambda w: jnp.transpose(w, (1, 0, 2)).reshape(HE, M)).astype(cdt)
    g1_s, be1_s = stack('g1').astype(f32), stack('be1').astype(f32)
    w1_s, c1_s = stack('w1').astype(cdt), stack('c1').astype(f32)
    w2_s, c2_s = stack('w2').astype(cdt), stack('c2').astype(f32)
    g2_s, be2_s = stack('g2').astype(f32), stack('be2').astype(f32)

    # (E, 2T-1) window of the relative-position table (replaces the old (T,T,E) p):
    # p[q, k] = pos_table[k - q + offset] = relw[:, k - q + T - 1]
    relw_t = pos_table[offset - (T - 1): offset + T].T.astype(cdt)       # (E, 2T-1)

    # additive key mask, finite so fully-masked rows stay finite
    mask_bias = jnp.where(mask, 0.0, MASK_BIAS).astype(f32)[:, None, :]  # (B, 1, T)

    per_b = lambda b, l: (b, 0, 0)
    per_l = lambda b, l: (l, 0, 0)
    const2 = lambda b, l: (0, 0)

    in_specs = [
        pl.BlockSpec((None, T, M), per_b),        # x
        pl.BlockSpec((None, 1, T), per_b),        # mask bias
        pl.BlockSpec((E, 2 * T - 1), const2),     # relative-position window
        pl.BlockSpec((None, M, HE), per_l),       # wq
        pl.BlockSpec((None, M, HE), per_l),       # wk
        pl.BlockSpec((None, M, HE), per_l),       # wv
        pl.BlockSpec((None, 1, HE), per_l),       # bu
        pl.BlockSpec((None, 1, HE), per_l),       # bv
        pl.BlockSpec((None, HE, M), per_l),       # wo
        pl.BlockSpec((None, 1, M), per_l),        # ln1 gamma
        pl.BlockSpec((None, 1, M), per_l),        # ln1 beta
        pl.BlockSpec((None, M, I), per_l),        # ffn w1
        pl.BlockSpec((None, 1, I), per_l),        # ffn b1
        pl.BlockSpec((None, I, M), per_l),        # ffn w2
        pl.BlockSpec((None, 1, M), per_l),        # ffn b2
        pl.BlockSpec((None, 1, M), per_l),        # ln2 gamma
        pl.BlockSpec((None, 1, M), per_l),        # ln2 beta
    ]

    return pl.pallas_call(
        encoder_layer_kernel,
        out_shape=jax.ShapeDtypeStruct((B, T, M), f32),
        grid=(B, L),
        in_specs=in_specs,
        out_specs=pl.BlockSpec((None, T, M), per_b),
        scratch_shapes=[pltpu.VMEM((T, M), f32)],     # activation carry across layers
        compiler_params=pltpu.CompilerParams(
            dimension_semantics=("parallel", "arbitrary"),
            vmem_limit_bytes=32 * 1024 * 1024,        # sized well above resident set
        ),
    )(x.astype(f32), mask_bias, relw_t,
      wq_s, wk_s, wv_s, bu_s, bv_s, wo_s,
      g1_s, be1_s, w1_s, c1_s, w2_s, c2_s, g2_s, be2_s)


# ----------------------------------------------------------------------------- pure-JAX reference
def ref_encoder(x, mask, layers, pos_table, offset):
    """Module-faithful reference; matmul operands rounded to COMPUTE_DTYPE to
    mirror the kernel's bf16 MXU operands (accumulation stays f32)."""
    T = x.shape[1]
    pos = jnp.arange(T)
    rel = pos[None, :] - pos[:, None] + offset
    p = pos_table[rel]                                  # (T, T, E)

    def c(a):                                           # bf16-round, compute in f32
        return a.astype(COMPUTE_DTYPE).astype(jnp.float32)

    def ln(a, g, b):
        mu = a.mean(-1, keepdims=True)
        v = ((a - mu) ** 2).mean(-1, keepdims=True)
        return (a - mu) / jnp.sqrt(v + LN_EPS) * g + b

    for lp in layers:
        E = lp['bu'].shape[0]
        q = jnp.einsum('btm,meh->bteh', c(x), c(lp['wq']))
        k = jnp.einsum('btm,meh->bteh', c(x), c(lp['wk']))
        v = jnp.einsum('btm,meh->bteh', c(x), c(lp['wv']))
        attn = (jnp.einsum('bqeh,bkeh->bqkh', c(q + lp['bu']), c(k))
                + jnp.einsum('bqeh,qke->bqkh', c(q + lp['bv']), c(p)))
        attn = attn / (E ** 0.5)
        attn = jnp.where(mask[:, None, :, None], attn, MASK_BIAS)
        attn = jax.nn.softmax(attn, axis=-2)
        y = jnp.einsum('bqkh,bkeh->bqeh', c(attn), c(v))
        y = jnp.einsum('bqeh,ehm->bqm', c(y), c(lp['wo']))
        x = ln(x + y, lp['g1'], lp['be1'])
        h1 = jnp.maximum(jnp.einsum('btm,mi->bti', c(x), c(lp['w1'])) + lp['c1'], 0.0)
        f = jnp.einsum('bti,im->btm', c(h1), c(lp['w2'])) + lp['c2']
        x = ln(x + f, lp['g2'], lp['be2'])
    return x


# ----------------------------------------------------------------------------- main
if __name__ == "__main__":
    # small but lane-dense shapes: n_model=128 -> n_embed = 128 // 8 = 16
    B, T, M, H, I, L = 2, 16, 128, 8, 256, 2
    E = M // 8
    MAX_LEN = 1024
    OFFSET = sum(divmod(MAX_LEN, 2))                    # 512

    key = jax.random.PRNGKey(0)
    keys = jax.random.split(key, 2 + L)

    x = jax.random.normal(keys[0], (B, T, M), jnp.float32)
    mask = jnp.ones((B, T), dtype=bool).at[1, T - 3:].set(False)   # ragged 2nd batch
    # synthetic positional-embedding table (reset_parameters() xavier-overwrites
    # the sinusoids in the module anyway)
    pos_table = 0.5 * jax.random.normal(keys[1], (MAX_LEN, E), jnp.float32)

    layers = []
    s = 0.1
    for li in range(L):
        ks = jax.random.split(keys[2 + li], 10)
        layers.append(dict(
            wq=s * jax.random.normal(ks[0], (M, E, H), jnp.float32),
            wk=s * jax.random.normal(ks[1], (M, E, H), jnp.float32),
            wv=s * jax.random.normal(ks[2], (M, E, H), jnp.float32),
            bu=s * jax.random.normal(ks[3], (E, H), jnp.float32),
            bv=s * jax.random.normal(ks[4], (E, H), jnp.float32),
            wo=s * jax.random.normal(ks[5], (E, H, M), jnp.float32),
            g1=jnp.ones((1, M), jnp.float32), be1=jnp.zeros((1, M), jnp.float32),
            w1=s * jax.random.normal(ks[6], (M, I), jnp.float32),
            c1=0.1 * jax.random.normal(ks[7], (1, I), jnp.float32),
            w2=s * jax.random.normal(ks[8], (I, M), jnp.float32),
            c2=0.1 * jax.random.normal(ks[9], (1, M), jnp.float32),
            g2=jnp.ones((1, M), jnp.float32), be2=jnp.zeros((1, M), jnp.float32),
        ))

    out = encoder_pallas(x, mask, layers, pos_table, OFFSET)
    out = jax.block_until_ready(out)

    ref = ref_encoder(x, mask, layers, pos_table, OFFSET)
    assert out.shape == (B, T, M)
    # tolerance covers bf16 matmul operands + approx-reciprocal softmax;
    # structural bugs (wrong shift / mask / fusion) would be O(0.1 .. 10).
    assert bool(jnp.allclose(out, ref, rtol=2e-2, atol=2e-2)), \
        "kernel does not match reference"

    print("KERNEL_OK")
</pallas_src>

<mosaic_0001>
module attributes {stable_mosaic.version = 11 : i64} {
  func.func @encoder_layer_kernel(%arg0: i32, %arg1: i32, %arg2: memref<1x16x128xf32, #tpu.memory_space<vmem>>, %arg3: memref<1x1x16xf32, #tpu.memory_space<vmem>>, %arg4: memref<16x31xbf16, #tpu.memory_space<vmem>>, %arg5: memref<1x128x128xbf16, #tpu.memory_space<vmem>>, %arg6: memref<1x128x128xbf16, #tpu.memory_space<vmem>>, %arg7: memref<1x128x128xbf16, #tpu.memory_space<vmem>>, %arg8: memref<1x1x128xf32, #tpu.memory_space<vmem>>, %arg9: memref<1x1x128xf32, #tpu.memory_space<vmem>>, %arg10: memref<1x128x128xbf16, #tpu.memory_space<vmem>>, %arg11: memref<1x1x128xf32, #tpu.memory_space<vmem>>, %arg12: memref<1x1x128xf32, #tpu.memory_space<vmem>>, %arg13: memref<1x128x256xbf16, #tpu.memory_space<vmem>>, %arg14: memref<1x1x256xf32, #tpu.memory_space<vmem>>, %arg15: memref<1x256x128xbf16, #tpu.memory_space<vmem>>, %arg16: memref<1x1x128xf32, #tpu.memory_space<vmem>>, %arg17: memref<1x1x128xf32, #tpu.memory_space<vmem>>, %arg18: memref<1x1x128xf32, #tpu.memory_space<vmem>>, %arg19: memref<1x16x128xf32, #tpu.memory_space<vmem>>, %arg20: memref<16x128xf32, #tpu.memory_space<vmem>>) attributes {dimension_semantics = [#tpu.dimension_semantics<parallel>, #tpu.dimension_semantics<arbitrary>], iteration_bounds = array<i64: 2, 2>, scalar_prefetch = 0 : i64, scratch_operands = 1 : i64, tpu.core_type = #tpu.core_type<tc>, window_params = [{transform_indices = @transform_0, window_bounds = array<i64: 1, 16, 128>}, {transform_indices = @transform_1, window_bounds = array<i64: 1, 1, 16>}, {pipeline_mode = #tpu.pipeline_mode<synchronous>, transform_indices = @transform_2, window_bounds = array<i64: 16, 31>}, {transform_indices = @transform_3, window_bounds = array<i64: 1, 128, 128>}, {transform_indices = @transform_4, window_bounds = array<i64: 1, 128, 128>}, {transform_indices = @transform_5, window_bounds = array<i64: 1, 128, 128>}, {transform_indices = @transform_6, window_bounds = array<i64: 1, 1, 128>}, {transform_indices = @transform_7, window_bounds = array<i64: 1, 1, 128>}, {transform_indices = @transform_8, window_bounds = array<i64: 1, 128, 128>}, {transform_indices = @transform_9, window_bounds = array<i64: 1, 1, 128>}, {transform_indices = @transform_10, window_bounds = array<i64: 1, 1, 128>}, {transform_indices = @transform_11, window_bounds = array<i64: 1, 128, 256>}, {transform_indices = @transform_12, window_bounds = array<i64: 1, 1, 256>}, {transform_indices = @transform_13, window_bounds = array<i64: 1, 256, 128>}, {transform_indices = @transform_14, window_bounds = array<i64: 1, 1, 128>}, {transform_indices = @transform_15, window_bounds = array<i64: 1, 1, 128>}, {transform_indices = @transform_16, window_bounds = array<i64: 1, 1, 128>}, {transform_indices = @transform_17, window_bounds = array<i64: 1, 16, 128>}]} {
    %c0_i32 = arith.constant 0 : i32
    %0 = arith.cmpi eq, %arg1, %c0_i32 : i32
    %1 = arith.extui %0 : i1 to i32
    %c0_i32_0 = arith.constant 0 : i32
    %2 = arith.cmpi ne, %1, %c0_i32_0 : i32
    scf.if %2 {
      %c0_116 = arith.constant 0 : index
      %c0_117 = arith.constant 0 : index
      %c0_118 = arith.constant 0 : index
      %430 = vector.load %arg2[%c0_116, %c0_117, %c0_118] : memref<1x16x128xf32, #tpu.memory_space<vmem>>, vector<1x16x128xf32>
      %431 = vector.shape_cast %430 : vector<1x16x128xf32> to vector<16x128xf32>
      %c0_119 = arith.constant 0 : index
      %c0_120 = arith.constant 0 : index
      %432 = vector.load %arg20[%c0_119, %c0_120] : memref<16x128xf32, #tpu.memory_space<vmem>>, vector<16x128xf32>
      tpu.vector_store %arg20[%c0_119, %c0_120], %431 {strides = array<i32>} : memref<16x128xf32, #tpu.memory_space<vmem>>, vector<16x128xf32>,
    } else {
    }
    %c0 = arith.constant 0 : index
    %c0_1 = arith.constant 0 : index
    %3 = vector.load %arg20[%c0, %c0_1] : memref<16x128xf32, #tpu.memory_space<vmem>>, vector<16x128xf32>
    %4 = arith.truncf %3 : vector<16x128xf32> to vector<16x128xbf16>
    %c0_2 = arith.constant 0 : index
    %c0_3 = arith.constant 0 : index
    %c0_4 = arith.constant 0 : index
    %5 = vector.load %arg5[%c0_2, %c0_3, %c0_4] : memref<1x128x128xbf16, #tpu.memory_space<vmem>>, vector<1x128x128xbf16>
    %6 = vector.shape_cast %5 : vector<1x128x128xbf16> to vector<128x128xbf16>
    %cst = arith.constant dense<0.000000e+00> : vector<16x128xf32>
    %7 = tpu.matmul %4, %6, %cst {dimension_numbers = #tpu.dot_dimension_numbers<[1], [0], [0], [1], [0, 0, 1, 1], [], []>} : vector<16x128xbf16>, vector<128x128xbf16>, vector<16x128xf32> -> vector<16x128xf32>
    %c0_5 = arith.constant 0 : index
    %c0_6 = arith.constant 0 : index
    %c0_7 = arith.constant 0 : index
    %8 = vector.load %arg6[%c0_5, %c0_6, %c0_7] : memref<1x128x128xbf16, #tpu.memory_space<vmem>>, vector<1x128x128xbf16>
    %9 = vector.shape_cast %8 : vector<1x128x128xbf16> to vector<128x128xbf16>
    %cst_8 = arith.constant dense<0.000000e+00> : vector<16x128xf32>
    %10 = tpu.matmul %4, %9, %cst_8 {dimension_numbers = #tpu.dot_dimension_numbers<[1], [0], [0], [1], [0, 0, 1, 1], [], []>} : vector<16x128xbf16>, vector<128x128xbf16>, vector<16x128xf32> -> vector<16x128xf32>
    %c0_9 = arith.constant 0 : index
    %c0_10 = arith.constant 0 : index
    %c0_11 = arith.constant 0 : index
    %11 = vector.load %arg7[%c0_9, %c0_10, %c0_11] : memref<1x128x128xbf16, #tpu.memory_space<vmem>>, vector<1x128x128xbf16>
    %12 = vector.shape_cast %11 : vector<1x128x128xbf16> to vector<128x128xbf16>
    %cst_12 = arith.constant dense<0.000000e+00> : vector<16x128xf32>
    %13 = tpu.matmul %4, %12, %cst_12 {dimension_numbers = #tpu.dot_dimension_numbers<[1], [0], [0], [1], [0, 0, 1, 1], [], []>} : vector<16x128xbf16>, vector<128x128xbf16>, vector<16x128xf32> -> vector<16x128xf32>
    %c0_13 = arith.constant 0 : index
    %c0_14 = arith.constant 0 : index
    %c0_15 = arith.constant 0 : index
    %14 = vector.load %arg8[%c0_13, %c0_14, %c0_15] : memref<1x1x128xf32, #tpu.memory_space<vmem>>, vector<1x1x128xf32>
    %15 = vector.shape_cast %14 : vector<1x1x128xf32> to vector<1x128xf32>
    %16 = vector.broadcast %15 : vector<1x128xf32> to vector<16x128xf32>
    %17 = arith.addf %7, %16 : vector<16x128xf32>
    %18 = arith.truncf %17 : vector<16x128xf32> to vector<16x128xbf16>
    %c0_16 = arith.constant 0 : index
    %c0_17 = arith.constant 0 : index
    %c0_18 = arith.constant 0 : index
    %19 = vector.load %arg9[%c0_16, %c0_17, %c0_18] : memref<1x1x128xf32, #tpu.memory_space<vmem>>, vector<1x1x128xf32>
    %20 = vector.shape_cast %19 : vector<1x1x128xf32> to vector<1x128xf32>
    %21 = vector.broadcast %20 : vector<1x128xf32> to vector<16x128xf32>
    %22 = arith.addf %7, %21 : vector<16x128xf32>
    %23 = arith.truncf %22 : vector<16x128xf32> to vector<16x128xbf16>
    %24 = arith.truncf %10 : vector<16x128xf32> to vector<16x128xbf16>
    %25 = arith.truncf %13 : vector<16x128xf32> to vector<16x128xbf16>
    %c0_19 = arith.constant 0 : index
    %c0_20 = arith.constant 0 : index
    %26 = vector.load %arg4[%c0_19, %c0_20] : memref<16x31xbf16, #tpu.memory_space<vmem>>, vector<16x31xbf16>
    %c0_21 = arith.constant 0 : index
    %c0_22 = arith.constant 0 : index
    %c0_23 = arith.constant 0 : index
    %27 = vector.load %arg3[%c0_21, %c0_22, %c0_23] : memref<1x1x16xf32, #tpu.memory_space<vmem>>, vector<1x1x16xf32>
    %28 = vector.shape_cast %27 : vector<1x1x16xf32> to vector<1x16xf32>
    %29 = vector.extract_strided_slice %18 {offsets = [0, 0], sizes = [16, 16], strides = [1, 1]} : vector<16x128xbf16> to vector<16x16xbf16>
    %30 = vector.extract_strided_slice %23 {offsets = [0, 0], sizes = [16, 16], strides = [1, 1]} : vector<16x128xbf16> to vector<16x16xbf16>
    %31 = vector.extract_strided_slice %24 {offsets = [0, 0], sizes = [16, 16], strides = [1, 1]} : vector<16x128xbf16> to vector<16x16xbf16>
    %32 = vector.extract_strided_slice %25 {offsets = [0, 0], sizes = [16, 16], strides = [1, 1]} : vector<16x128xbf16> to vector<16x16xbf16>
    %cst_24 = arith.constant dense<0.000000e+00> : vector<16x16xf32>
    %33 = tpu.matmul %29, %31, %cst_24 {dimension_numbers = #tpu.dot_dimension_numbers<[1], [1], [0], [0], [0, 0, 1, 0], [], []>} : vector<16x16xbf16>, vector<16x16xbf16>, vector<16x16xf32> -> vector<16x16xf32>
    %cst_25 = arith.constant dense<0.000000e+00> : vector<16x31xf32>
    %34 = tpu.matmul %30, %26, %cst_25 {dimension_numbers = #tpu.dot_dimension_numbers<[1], [0], [0], [1], [0, 0, 1, 1], [], []>} : vector<16x16xbf16>, vector<16x31xbf16>, vector<16x31xf32> -> vector<16x31xf32>
    %35 = vector.extract_strided_slice %34 {offsets = [0, 15], sizes = [1, 16], strides = [1, 1]} : vector<16x31xf32> to vector<1x16xf32>
    %36 = vector.extract_strided_slice %34 {offsets = [1, 14], sizes = [1, 16], strides = [1, 1]} : vector<16x31xf32> to vector<1x16xf32>
    %37 = vector.extract_strided_slice %34 {offsets = [2, 13], sizes = [1, 16], strides = [1, 1]} : vector<16x31xf32> to vector<1x16xf32>
    %38 = vector.extract_strided_slice %34 {offsets = [3, 12], sizes = [1, 16], strides = [1, 1]} : vector<16x31xf32> to vector<1x16xf32>
    %39 = vector.extract_strided_slice %34 {offsets = [4, 11], sizes = [1, 16], strides = [1, 1]} : vector<16x31xf32> to vector<1x16xf32>
    %40 = vector.extract_strided_slice %34 {offsets = [5, 10], sizes = [1, 16], strides = [1, 1]} : vector<16x31xf32> to vector<1x16xf32>
    %41 = vector.extract_strided_slice %34 {offsets = [6, 9], sizes = [1, 16], strides = [1, 1]} : vector<16x31xf32> to vector<1x16xf32>
    %42 = vector.extract_strided_slice %34 {offsets = [7, 8], sizes = [1, 16], strides = [1, 1]} : vector<16x31xf32> to vector<1x16xf32>
    %43 = vector.extract_strided_slice %34 {offsets = [8, 7], sizes = [1, 16], strides = [1, 1]} : vector<16x31xf32> to vector<1x16xf32>
    %44 = vector.extract_strided_slice %34 {offsets = [9, 6], sizes = [1, 16], strides = [1, 1]} : vector<16x31xf32> to vector<1x16xf32>
    %45 = vector.extract_strided_slice %34 {offsets = [10, 5], sizes = [1, 16], strides = [1, 1]} : vector<16x31xf32> to vector<1x16xf32>
    %46 = vector.extract_strided_slice %34 {offsets = [11, 4], sizes = [1, 16], strides = [1, 1]} : vector<16x31xf32> to vector<1x16xf32>
    %47 = vector.extract_strided_slice %34 {offsets = [12, 3], sizes = [1, 16], strides = [1, 1]} : vector<16x31xf32> to vector<1x16xf32>
    %48 = vector.extract_strided_slice %34 {offsets = [13, 2], sizes = [1, 16], strides = [1, 1]} : vector<16x31xf32> to vector<1x16xf32>
    %49 = vector.extract_strided_slice %34 {offsets = [14, 1], sizes = [1, 16], strides = [1, 1]} : vector<16x31xf32> to vector<1x16xf32>
    %50 = vector.extract_strided_slice %34 {offsets = [15, 0], sizes = [1, 16], strides = [1, 1]} : vector<16x31xf32> to vector<1x16xf32>
    %51 = tpu.concatenate %35, %36, %37, %38, %39, %40, %41, %42, %43, %44, %45, %46, %47, %48, %49, %50 in 0 : vector<1x16xf32>, vector<1x16xf32>, vector<1x16xf32>, vector<1x16xf32>, vector<1x16xf32>, vector<1x16xf32>, vector<1x16xf32>, vector<1x16xf32>, vector<1x16xf32>, vector<1x16xf32>, vector<1x16xf32>, vector<1x16xf32>, vector<1x16xf32>, vector<1x16xf32>, vector<1x16xf32>, vector<1x16xf32> -> vector<16x16xf32>
    %52 = arith.addf %33, %51 : vector<16x16xf32>
    %cst_26 = arith.constant 2.500000e-01 : f32
    %53 = vector.broadcast %cst_26 : f32 to vector<16x16xf32>
    %54 = arith.mulf %52, %53 : vector<16x16xf32>
    %55 = vector.broadcast %28 : vector<1x16xf32> to vector<16x16xf32>
    %56 = arith.addf %54, %55 : vector<16x16xf32>
    %cst_27 = arith.constant dense<0xFF800000> : vector<16xf32>
    %57 = vector.multi_reduction <maximumf>, %56, %cst_27 [1] : vector<16x16xf32> to vector<16xf32>
    %58 = vector.shape_cast %57 : vector<16xf32> to vector<16x1xf32>
    %59 = vector.broadcast %58 : vector<16x1xf32> to vector<16x16xf32>
    %60 = arith.subf %56, %59 : vector<16x16xf32>
    %61 = math.exp %60 : vector<16x16xf32>
    %cst_28 = arith.constant dense<0.000000e+00> : vector<16xf32>
    %62 = vector.multi_reduction <add>, %61, %cst_28 [1] : vector<16x16xf32> to vector<16xf32>
    %63 = vector.shape_cast %62 : vector<16xf32> to vector<16x1xf32>
    %64 = tpu.reciprocal %63 {approx = true} : vector<16x1xf32> -> vector<16x1xf32>
    %65 = vector.broadcast %64 : vector<16x1xf32> to vector<16x16xf32>
    %66 = arith.mulf %61, %65 : vector<16x16xf32>
    %67 = arith.truncf %66 : vector<16x16xf32> to vector<16x16xbf16>
    %cst_29 = arith.constant dense<0.000000e+00> : vector<16x16xf32>
    %68 = tpu.matmul %67, %32, %cst_29 {dimension_numbers = #tpu.dot_dimension_numbers<[1], [0], [0], [1], [0, 0, 1, 1], [], []>} : vector<16x16xbf16>, vector<16x16xbf16>, vector<16x16xf32> -> vector<16x16xf32>
    %69 = vector.extract_strided_slice %18 {offsets = [0, 16], sizes = [16, 16], strides = [1, 1]} : vector<16x128xbf16> to vector<16x16xbf16>
    %70 = vector.extract_strided_slice %23 {offsets = [0, 16], sizes = [16, 16], strides = [1, 1]} : vector<16x128xbf16> to vector<16x16xbf16>
    %71 = vector.extract_strided_slice %24 {offsets = [0, 16], sizes = [16, 16], strides = [1, 1]} : vector<16x128xbf16> to vector<16x16xbf16>
    %72 = vector.extract_strided_slice %25 {offsets = [0, 16], sizes = [16, 16], strides = [1, 1]} : vector<16x128xbf16> to vector<16x16xbf16>
    %cst_30 = arith.constant dense<0.000000e+00> : vector<16x16xf32>
    %73 = tpu.matmul %69, %71, %cst_30 {dimension_numbers = #tpu.dot_dimension_numbers<[1], [1], [0], [0], [0, 0, 1, 0], [], []>} : vector<16x16xbf16>, vector<16x16xbf16>, vector<16x16xf32> -> vector<16x16xf32>
    %cst_31 = arith.constant dense<0.000000e+00> : vector<16x31xf32>
    %74 = tpu.matmul %70, %26, %cst_31 {dimension_numbers = #tpu.dot_dimension_numbers<[1], [0], [0], [1], [0, 0, 1, 1], [], []>} : vector<16x16xbf16>, vector<16x31xbf16>, vector<16x31xf32> -> vector<16x31xf32>
    %75 = vector.extract_strided_slice %74 {offsets = [0, 15], sizes = [1, 16], strides = [1, 1]} : vector<16x31xf32> to vector<1x16xf32>
    %76 = vector.extract_strided_slice %74 {offsets = [1, 14], sizes = [1, 16], strides = [1, 1]} : vector<16x31xf32> to vector<1x16xf32>
    %77 = vector.extract_strided_slice %74 {offsets = [2, 13], sizes = [1, 16], strides = [1, 1]} : vector<16x31xf32> to vector<1x16xf32>
    %78 = vector.extract_strided_slice %74 {offsets = [3, 12], sizes = [1, 16], strides = [1, 1]} : vector<16x31xf32> to vector<1x16xf32>
    %79 = vector.extract_strided_slice %74 {offsets = [4, 11], sizes = [1, 16], strides = [1, 1]} : vector<16x31xf32> to vector<1x16xf32>
    %80 = vector.extract_strided_slice %74 {offsets = [5, 10], sizes = [1, 16], strides = [1, 1]} : vector<16x31xf32> to vector<1x16xf32>
    %81 = vector.extract_strided_slice %74 {offsets = [6, 9], sizes = [1, 16], strides = [1, 1]} : vector<16x31xf32> to vector<1x16xf32>
    %82 = vector.extract_strided_slice %74 {offsets = [7, 8], sizes = [1, 16], strides = [1, 1]} : vector<16x31xf32> to vector<1x16xf32>
    %83 = vector.extract_strided_slice %74 {offsets = [8, 7], sizes = [1, 16], strides = [1, 1]} : vector<16x31xf32> to vector<1x16xf32>
    %84 = vector.extract_strided_slice %74 {offsets = [9, 6], sizes = [1, 16], strides = [1, 1]} : vector<16x31xf32> to vector<1x16xf32>
    %85 = vector.extract_strided_slice %74 {offsets = [10, 5], sizes = [1, 16], strides = [1, 1]} : vector<16x31xf32> to vector<1x16xf32>
    %86 = vector.extract_strided_slice %74 {offsets = [11, 4], sizes = [1, 16], strides = [1, 1]} : vector<16x31xf32> to vector<1x16xf32>
    %87 = vector.extract_strided_slice %74 {offsets = [12, 3], sizes = [1, 16], strides = [1, 1]} : vector<16x31xf32> to vector<1x16xf32>
    %88 = vector.extract_strided_slice %74 {offsets = [13, 2], sizes = [1, 16], strides = [1, 1]} : vector<16x31xf32> to vector<1x16xf32>
    %89 = vector.extract_strided_slice %74 {offsets = [14, 1], sizes = [1, 16], strides = [1, 1]} : vector<16x31xf32> to vector<1x16xf32>
    %90 = vector.extract_strided_slice %74 {offsets = [15, 0], sizes = [1, 16], strides = [1, 1]} : vector<16x31xf32> to vector<1x16xf32>
    %91 = tpu.concatenate %75, %76, %77, %78, %79, %80, %81, %82, %83, %84, %85, %86, %87, %88, %89, %90 in 0 : vector<1x16xf32>, vector<1x16xf32>, vector<1x16xf32>, vector<1x16xf32>, vector<1x16xf32>, vector<1x16xf32>, vector<1x16xf32>, vector<1x16xf32>, vector<1x16xf32>, vector<1x16xf32>, vector<1x16xf32>, vector<1x16xf32>, vector<1x16xf32>, vector<1x16xf32>, vector<1x16xf32>, vector<1x16xf32> -> vector<16x16xf32>
    %92 = arith.addf %73, %91 : vector<16x16xf32>
    %cst_32 = arith.constant 2.500000e-01 : f32
    %93 = vector.broadcast %cst_32 : f32 to vector<16x16xf32>
    %94 = arith.mulf %92, %93 : vector<16x16xf32>
    %95 = vector.broadcast %28 : vector<1x16xf32> to vector<16x16xf32>
    %96 = arith.addf %94, %95 : vector<16x16xf32>
    %cst_33 = arith.constant dense<0xFF800000> : vector<16xf32>
    %97 = vector.multi_reduction <maximumf>, %96, %cst_33 [1] : vector<16x16xf32> to vector<16xf32>
    %98 = vector.shape_cast %97 : vector<16xf32> to vector<16x1xf32>
    %99 = vector.broadcast %98 : vector<16x1xf32> to vector<16x16xf32>
    %100 = arith.subf %96, %99 : vector<16x16xf32>
    %101 = math.exp %100 : vector<16x16xf32>
    %cst_34 = arith.constant dense<0.000000e+00> : vector<16xf32>
    %102 = vector.multi_reduction <add>, %101, %cst_34 [1] : vector<16x16xf32> to vector<16xf32>
    %103 = vector.shape_cast %102 : vector<16xf32> to vector<16x1xf32>
    %104 = tpu.reciprocal %103 {approx = true} : vector<16x1xf32> -> vector<16x1xf32>
    %105 = vector.broadcast %104 : vector<16x1xf32> to vector<16x16xf32>
    %106 = arith.mulf %101, %105 : vector<16x16xf32>
    %107 = arith.truncf %106 : vector<16x16xf32> to vector<16x16xbf16>
    %cst_35 = arith.constant dense<0.000000e+00> : vector<16x16xf32>
    %108 = tpu.matmul %107, %72, %cst_35 {dimension_numbers = #tpu.dot_dimension_numbers<[1], [0], [0], [1], [0, 0, 1, 1], [], []>} : vector<16x16xbf16>, vector<16x16xbf16>, vector<16x16xf32> -> vector<16x16xf32>
    %109 = vector.extract_strided_slice %18 {offsets = [0, 32], sizes = [16, 16], strides = [1, 1]} : vector<16x128xbf16> to vector<16x16xbf16>
    %110 = vector.extract_strided_slice %23 {offsets = [0, 32], sizes = [16, 16], strides = [1, 1]} : vector<16x128xbf16> to vector<16x16xbf16>
    %111 = vector.extract_strided_slice %24 {offsets = [0, 32], sizes = [16, 16], strides = [1, 1]} : vector<16x128xbf16> to vector<16x16xbf16>
    %112 = vector.extract_strided_slice %25 {offsets = [0, 32], sizes = [16, 16], strides = [1, 1]} : vector<16x128xbf16> to vector<16x16xbf16>
    %cst_36 = arith.constant dense<0.000000e+00> : vector<16x16xf32>
    %113 = tpu.matmul %109, %111, %cst_36 {dimension_numbers = #tpu.dot_dimension_numbers<[1], [1], [0], [0], [0, 0, 1, 0], [], []>} : vector<16x16xbf16>, vector<16x16xbf16>, vector<16x16xf32> -> vector<16x16xf32>
    %cst_37 = arith.constant dense<0.000000e+00> : vector<16x31xf32>
    %114 = tpu.matmul %110, %26, %cst_37 {dimension_numbers = #tpu.dot_dimension_numbers<[1], [0], [0], [1], [0, 0, 1, 1], [], []>} : vector<16x16xbf16>, vector<16x31xbf16>, vector<16x31xf32> -> vector<16x31xf32>
    %115 = vector.extract_strided_slice %114 {offsets = [0, 15], sizes = [1, 16], strides = [1, 1]} : vector<16x31xf32> to vector<1x16xf32>
    %116 = vector.extract_strided_slice %114 {offsets = [1, 14], sizes = [1, 16], strides = [1, 1]} : vector<16x31xf32> to vector<1x16xf32>
    %117 = vector.extract_strided_slice %114 {offsets = [2, 13], sizes = [1, 16], strides = [1, 1]} : vector<16x31xf32> to vector<1x16xf32>
    %118 = vector.extract_strided_slice %114 {offsets = [3, 12], sizes = [1, 16], strides = [1, 1]} : vector<16x31xf32> to vector<1x16xf32>
    %119 = vector.extract_strided_slice %114 {offsets = [4, 11], sizes = [1, 16], strides = [1, 1]} : vector<16x31xf32> to vector<1x16xf32>
    %120 = vector.extract_strided_slice %114 {offsets = [5, 10], sizes = [1, 16], strides = [1, 1]} : vector<16x31xf32> to vector<1x16xf32>
    %121 = vector.extract_strided_slice %114 {offsets = [6, 9], sizes = [1, 16], strides = [1, 1]} : vector<16x31xf32> to vector<1x16xf32>
    %122 = vector.extract_strided_slice %114 {offsets = [7, 8], sizes = [1, 16], strides = [1, 1]} : vector<16x31xf32> to vector<1x16xf32>
    %123 = vector.extract_strided_slice %114 {offsets = [8, 7], sizes = [1, 16], strides = [1, 1]} : vector<16x31xf32> to vector<1x16xf32>
    %124 = vector.extract_strided_slice %114 {offsets = [9, 6], sizes = [1, 16], strides = [1, 1]} : vector<16x31xf32> to vector<1x16xf32>
    %125 = vector.extract_strided_slice %114 {offsets = [10, 5], sizes = [1, 16], strides = [1, 1]} : vector<16x31xf32> to vector<1x16xf32>
    %126 = vector.extract_strided_slice %114 {offsets = [11, 4], sizes = [1, 16], strides = [1, 1]} : vector<16x31xf32> to vector<1x16xf32>
    %127 = vector.extract_strided_slice %114 {offsets = [12, 3], sizes = [1, 16], strides = [1, 1]} : vector<16x31xf32> to vector<1x16xf32>
    %128 = vector.extract_strided_slice %114 {offsets = [13, 2], sizes = [1, 16], strides = [1, 1]} : vector<16x31xf32> to vector<1x16xf32>
    %129 = vector.extract_strided_slice %114 {offsets = [14, 1], sizes = [1, 16], strides = [1, 1]} : vector<16x31xf32> to vector<1x16xf32>
    %130 = vector.extract_strided_slice %114 {offsets = [15, 0], sizes = [1, 16], strides = [1, 1]} : vector<16x31xf32> to vector<1x16xf32>
    %131 = tpu.concatenate %115, %116, %117, %118, %119, %120, %121, %122, %123, %124, %125, %126, %127, %128, %129, %130 in 0 : vector<1x16xf32>, vector<1x16xf32>, vector<1x16xf32>, vector<1x16xf32>, vector<1x16xf32>, vector<1x16xf32>, vector<1x16xf32>, vector<1x16xf32>, vector<1x16xf32>, vector<1x16xf32>, vector<1x16xf32>, vector<1x16xf32>, vector<1x16xf32>, vector<1x16xf32>, vector<1x16xf32>, vector<1x16xf32> -> vector<16x16xf32>
    %132 = arith.addf %113, %131 : vector<16x16xf32>
    %cst_38 = arith.constant 2.500000e-01 : f32
    %133 = vector.broadcast %cst_38 : f32 to vector<16x16xf32>
    %134 = arith.mulf %132, %133 : vector<16x16xf32>
    %135 = vector.broadcast %28 : vector<1x16xf32> to vector<16x16xf32>
    %136 = arith.addf %134, %135 : vector<16x16xf32>
    %cst_39 = arith.constant dense<0xFF800000> : vector<16xf32>
    %137 = vector.multi_reduction <maximumf>, %136, %cst_39 [1] : vector<16x16xf32> to vector<16xf32>
    %138 = vector.shape_cast %137 : vector<16xf32> to vector<16x1xf32>
    %139 = vector.broadcast %138 : vector<16x1xf32> to vector<16x16xf32>
    %140 = arith.subf %136, %139 : vector<16x16xf32>
    %141 = math.exp %140 : vector<16x16xf32>
    %cst_40 = arith.constant dense<0.000000e+00> : vector<16xf32>
    %142 = vector.multi_reduction <add>, %141, %cst_40 [1] : vector<16x16xf32> to vector<16xf32>
    %143 = vector.shape_cast %142 : vector<16xf32> to vector<16x1xf32>
    %144 = tpu.reciprocal %143 {approx = true} : vector<16x1xf32> -> vector<16x1xf32>
    %145 = vector.broadcast %144 : vector<16x1xf32> to vector<16x16xf32>
    %146 = arith.mulf %141, %145 : vector<16x16xf32>
    %147 = arith.truncf %146 : vector<16x16xf32> to vector<16x16xbf16>
    %cst_41 = arith.constant dense<0.000000e+00> : vector<16x16xf32>
    %148 = tpu.matmul %147, %112, %cst_41 {dimension_numbers = #tpu.dot_dimension_numbers<[1], [0], [0], [1], [0, 0, 1, 1], [], []>} : vector<16x16xbf16>, vector<16x16xbf16>, vector<16x16xf32> -> vector<16x16xf32>
    %149 = vector.extract_strided_slice %18 {offsets = [0, 48], sizes = [16, 16], strides = [1, 1]} : vector<16x128xbf16> to vector<16x16xbf16>
    %150 = vector.extract_strided_slice %23 {offsets = [0, 48], sizes = [16, 16], strides = [1, 1]} : vector<16x128xbf16> to vector<16x16xbf16>
    %151 = vector.extract_strided_slice %24 {offsets = [0, 48], sizes = [16, 16], strides = [1, 1]} : vector<16x128xbf16> to vector<16x16xbf16>
    %152 = vector.extract_strided_slice %25 {offsets = [0, 48], sizes = [16, 16], strides = [1, 1]} : vector<16x128xbf16> to vector<16x16xbf16>
    %cst_42 = arith.constant dense<0.000000e+00> : vector<16x16xf32>
    %153 = tpu.matmul %149, %151, %cst_42 {dimension_numbers = #tpu.dot_dimension_numbers<[1], [1], [0], [0], [0, 0, 1, 0], [], []>} : vector<16x16xbf16>, vector<16x16xbf16>, vector<16x16xf32> -> vector<16x16xf32>
    %cst_43 = arith.constant dense<0.000000e+00> : vector<16x31xf32>
    %154 = tpu.matmul %150, %26, %cst_43 {dimension_numbers = #tpu.dot_dimension_numbers<[1], [0], [0], [1], [0, 0, 1, 1], [], []>} : vector<16x16xbf16>, vector<16x31xbf16>, vector<16x31xf32> -> vector<16x31xf32>
    %155 = vector.extract_strided_slice %154 {offsets = [0, 15], sizes = [1, 16], strides = [1, 1]} : vector<16x31xf32> to vector<1x16xf32>
    %156 = vector.extract_strided_slice %154 {offsets = [1, 14], sizes = [1, 16], strides = [1, 1]} : vector<16x31xf32> to vector<1x16xf32>
    %157 = vector.extract_strided_slice %154 {offsets = [2, 13], sizes = [1, 16], strides = [1, 1]} : vector<16x31xf32> to vector<1x16xf32>
    %158 = vector.extract_strided_slice %154 {offsets = [3, 12], sizes = [1, 16], strides = [1, 1]} : vector<16x31xf32> to vector<1x16xf32>
    %159 = vector.extract_strided_slice %154 {offsets = [4, 11], sizes = [1, 16], strides = [1, 1]} : vector<16x31xf32> to vector<1x16xf32>
    %160 = vector.extract_strided_slice %154 {offsets = [5, 10], sizes = [1, 16], strides = [1, 1]} : vector<16x31xf32> to vector<1x16xf32>
    %161 = vector.extract_strided_slice %154 {offsets = [6, 9], sizes = [1, 16], strides = [1, 1]} : vector<16x31xf32> to vector<1x16xf32>
    %162 = vector.extract_strided_slice %154 {offsets = [7, 8], sizes = [1, 16], strides = [1, 1]} : vector<16x31xf32> to vector<1x16xf32>
    %163 = vector.extract_strided_slice %154 {offsets = [8, 7], sizes = [1, 16], strides = [1, 1]} : vector<16x31xf32> to vector<1x16xf32>
    %164 = vector.extract_strided_slice %154 {offsets = [9, 6], sizes = [1, 16], strides = [1, 1]} : vector<16x31xf32> to vector<1x16xf32>
    %165 = vector.extract_strided_slice %154 {offsets = [10, 5], sizes = [1, 16], strides = [1, 1]} : vector<16x31xf32> to vector<1x16xf32>
    %166 = vector.extract_strided_slice %154 {offsets = [11, 4], sizes = [1, 16], strides = [1, 1]} : vector<16x31xf32> to vector<1x16xf32>
    %167 = vector.extract_strided_slice %154 {offsets = [12, 3], sizes = [1, 16], strides = [1, 1]} : vector<16x31xf32> to vector<1x16xf32>
    %168 = vector.extract_strided_slice %154 {offsets = [13, 2], sizes = [1, 16], strides = [1, 1]} : vector<16x31xf32> to vector<1x16xf32>
    %169 = vector.extract_strided_slice %154 {offsets = [14, 1], sizes = [1, 16], strides = [1, 1]} : vector<16x31xf32> to vector<1x16xf32>
    %170 = vector.extract_strided_slice %154 {offsets = [15, 0], sizes = [1, 16], strides = [1, 1]} : vector<16x31xf32> to vector<1x16xf32>
    %171 = tpu.concatenate %155, %156, %157, %158, %159, %160, %161, %162, %163, %164, %165, %166, %167, %168, %169, %170 in 0 : vector<1x16xf32>, vector<1x16xf32>, vector<1x16xf32>, vector<1x16xf32>, vector<1x16xf32>, vector<1x16xf32>, vector<1x16xf32>, vector<1x16xf32>, vector<1x16xf32>, vector<1x16xf32>, vector<1x16xf32>, vector<1x16xf32>, vector<1x16xf32>, vector<1x16xf32>, vector<1x16xf32>, vector<1x16xf32> -> vector<16x16xf32>
    %172 = arith.addf %153, %171 : vector<16x16xf32>
    %cst_44 = arith.constant 2.500000e-01 : f32
    %173 = vector.broadcast %cst_44 : f32 to vector<16x16xf32>
    %174 = arith.mulf %172, %173 : vector<16x16xf32>
    %175 = vector.broadcast %28 : vector<1x16xf32> to vector<16x16xf32>
    %176 = arith.addf %174, %175 : vector<16x16xf32>
    %cst_45 = arith.constant dense<0xFF800000> : vector<16xf32>
    %177 = vector.multi_reduction <maximumf>, %176, %cst_45 [1] : vector<16x16xf32> to vector<16xf32>
    %178 = vector.shape_cast %177 : vector<16xf32> to vector<16x1xf32>
    %179 = vector.broadcast %178 : vector<16x1xf32> to vector<16x16xf32>
    %180 = arith.subf %176, %179 : vector<16x16xf32>
    %181 = math.exp %180 : vector<16x16xf32>
    %cst_46 = arith.constant dense<0.000000e+00> : vector<16xf32>
    %182 = vector.multi_reduction <add>, %181, %cst_46 [1] : vector<16x16xf32> to vector<16xf32>
    %183 = vector.shape_cast %182 : vector<16xf32> to vector<16x1xf32>
    %184 = tpu.reciprocal %183 {approx = true} : vector<16x1xf32> -> vector<16x1xf32>
    %185 = vector.broadcast %184 : vector<16x1xf32> to vector<16x16xf32>
    %186 = arith.mulf %181, %185 : vector<16x16xf32>
    %187 = arith.truncf %186 : vector<16x16xf32> to vector<16x16xbf16>
    %cst_47 = arith.constant dense<0.000000e+00> : vector<16x16xf32>
    %188 = tpu.matmul %187, %152, %cst_47 {dimension_numbers = #tpu.dot_dimension_numbers<[1], [0], [0], [1], [0, 0, 1, 1], [], []>} : vector<16x16xbf16>, vector<16x16xbf16>, vector<16x16xf32> -> vector<16x16xf32>
    %189 = vector.extract_strided_slice %18 {offsets = [0, 64], sizes = [16, 16], strides = [1, 1]} : vector<16x128xbf16> to vector<16x16xbf16>
    %190 = vector.extract_strided_slice %23 {offsets = [0, 64], sizes = [16, 16], strides = [1, 1]} : vector<16x128xbf16> to vector<16x16xbf16>
    %191 = vector.extract_strided_slice %24 {offsets = [0, 64], sizes = [16, 16], strides = [1, 1]} : vector<16x128xbf16> to vector<16x16xbf16>
    %192 = vector.extract_strided_slice %25 {offsets = [0, 64], sizes = [16, 16], strides = [1, 1]} : vector<16x128xbf16> to vector<16x16xbf16>
    %cst_48 = arith.constant dense<0.000000e+00> : vector<16x16xf32>
    %193 = tpu.matmul %189, %191, %cst_48 {dimension_numbers = #tpu.dot_dimension_numbers<[1], [1], [0], [0], [0, 0, 1, 0], [], []>} : vector<16x16xbf16>, vector<16x16xbf16>, vector<16x16xf32> -> vector<16x16xf32>
    %cst_49 = arith.constant dense<0.000000e+00> : vector<16x31xf32>
    %194 = tpu.matmul %190, %26, %cst_49 {dimension_numbers = #tpu.dot_dimension_numbers<[1], [0], [0], [1], [0, 0, 1, 1], [], []>} : vector<16x16xbf16>, vector<16x31xbf16>, vector<16x31xf32> -> vector<16x31xf32>
    %195 = vector.extract_strided_slice %194 {offsets = [0, 15], sizes = [1, 16], strides = [1, 1]} : vector<16x31xf32> to vector<1x16xf32>
    %196 = vector.extract_strided_slice %194 {offsets = [1, 14], sizes = [1, 16], strides = [1, 1]} : vector<16x31xf32> to vector<1x16xf32>
    %197 = vector.extract_strided_slice %194 {offsets = [2, 13], sizes = [1, 16], strides = [1, 1]} : vector<16x31xf32> to vector<1x16xf32>
    %198 = vector.extract_strided_slice %194 {offsets = [3, 12], sizes = [1, 16], strides = [1, 1]} : vector<16x31xf32> to vector<1x16xf32>
    %199 = vector.extract_strided_slice %194 {offsets = [4, 11], sizes = [1, 16], strides = [1, 1]} : vector<16x31xf32> to vector<1x16xf32>
    %200 = vector.extract_strided_slice %194 {offsets = [5, 10], sizes = [1, 16], strides = [1, 1]} : vector<16x31xf32> to vector<1x16xf32>
    %201 = vector.extract_strided_slice %194 {offsets = [6, 9], sizes = [1, 16], strides = [1, 1]} : vector<16x31xf32> to vector<1x16xf32>
    %202 = vector.extract_strided_slice %194 {offsets = [7, 8], sizes = [1, 16], strides = [1, 1]} : vector<16x31xf32> to vector<1x16xf32>
    %203 = vector.extract_strided_slice %194 {offsets = [8, 7], sizes = [1, 16], strides = [1, 1]} : vector<16x31xf32> to vector<1x16xf32>
    %204 = vector.extract_strided_slice %194 {offsets = [9, 6], sizes = [1, 16], strides = [1, 1]} : vector<16x31xf32> to vector<1x16xf32>
    %205 = vector.extract_strided_slice %194 {offsets = [10, 5], sizes = [1, 16], strides = [1, 1]} : vector<16x31xf32> to vector<1x16xf32>
    %206 = vector.extract_strided_slice %194 {offsets = [11, 4], sizes = [1, 16], strides = [1, 1]} : vector<16x31xf32> to vector<1x16xf32>
    %207 = vector.extract_strided_slice %194 {offsets = [12, 3], sizes = [1, 16], strides = [1, 1]} : vector<16x31xf32> to vector<1x16xf32>
    %208 = vector.extract_strided_slice %194 {offsets = [13, 2], sizes = [1, 16], strides = [1, 1]} : vector<16x31xf32> to vector<1x16xf32>
    %209 = vector.extract_strided_slice %194 {offsets = [14, 1], sizes = [1, 16], strides = [1, 1]} : vector<16x31xf32> to vector<1x16xf32>
    %210 = vector.extract_strided_slice %194 {offsets = [15, 0], sizes = [1, 16], strides = [1, 1]} : vector<16x31xf32> to vector<1x16xf32>
    %211 = tpu.concatenate %195, %196, %197, %198, %199, %200, %201, %202, %203, %204, %205, %206, %207, %208, %209, %210 in 0 : vector<1x16xf32>, vector<1x16xf32>, vector<1x16xf32>, vector<1x16xf32>, vector<1x16xf32>, vector<1x16xf32>, vector<1x16xf32>, vector<1x16xf32>, vector<1x16xf32>, vector<1x16xf32>, vector<1x16xf32>, vector<1x16xf32>, vector<1x16xf32>, vector<1x16xf32>, vector<1x16xf32>, vector<1x16xf32> -> vector<16x16xf32>
    %212 = arith.addf %193, %211 : vector<16x16xf32>
    %cst_50 = arith.constant 2.500000e-01 : f32
    %213 = vector.broadcast %cst_50 : f32 to vector<16x16xf32>
    %214 = arith.mulf %212, %213 : vector<16x16xf32>
    %215 = vector.broadcast %28 : vector<1x16xf32> to vector<16x16xf32>
    %216 = arith.addf %214, %215 : vector<16x16xf32>
    %cst_51 = arith.constant dense<0xFF800000> : vector<16xf32>
    %217 = vector.multi_reduction <maximumf>, %216, %cst_51 [1] : vector<16x16xf32> to vector<16xf32>
    %218 = vector.shape_cast %217 : vector<16xf32> to vector<16x1xf32>
    %219 = vector.broadcast %218 : vector<16x1xf32> to vector<16x16xf32>
    %220 = arith.subf %216, %219 : vector<16x16xf32>
    %221 = math.exp %220 : vector<16x16xf32>
    %cst_52 = arith.constant dense<0.000000e+00> : vector<16xf32>
    %222 = vector.multi_reduction <add>, %221, %cst_52 [1] : vector<16x16xf32> to vector<16xf32>
    %223 = vector.shape_cast %222 : vector<16xf32> to vector<16x1xf32>
    %224 = tpu.reciprocal %223 {approx = true} : vector<16x1xf32> -> vector<16x1xf32>
    %225 = vector.broadcast %224 : vector<16x1xf32> to vector<16x16xf32>
    %226 = arith.mulf %221, %225 : vector<16x16xf32>
    %227 = arith.truncf %226 : vector<16x16xf32> to vector<16x16xbf16>
    %cst_53 = arith.constant dense<0.000000e+00> : vector<16x16xf32>
    %228 = tpu.matmul %227, %192, %cst_53 {dimension_numbers = #tpu.dot_dimension_numbers<[1], [0], [0], [1], [0, 0, 1, 1], [], []>} : vector<16x16xbf16>, vector<16x16xbf16>, vector<16x16xf32> -> vector<16x16xf32>
    %229 = vector.extract_strided_slice %18 {offsets = [0, 80], sizes = [16, 16], strides = [1, 1]} : vector<16x128xbf16> to vector<16x16xbf16>
    %230 = vector.extract_strided_slice %23 {offsets = [0, 80], sizes = [16, 16], strides = [1, 1]} : vector<16x128xbf16> to vector<16x16xbf16>
    %231 = vector.extract_strided_slice %24 {offsets = [0, 80], sizes = [16, 16], strides = [1, 1]} : vector<16x128xbf16> to vector<16x16xbf16>
    %232 = vector.extract_strided_slice %25 {offsets = [0, 80], sizes = [16, 16], strides = [1, 1]} : vector<16x128xbf16> to vector<16x16xbf16>
    %cst_54 = arith.constant dense<0.000000e+00> : vector<16x16xf32>
    %233 = tpu.matmul %229, %231, %cst_54 {dimension_numbers = #tpu.dot_dimension_numbers<[1], [1], [0], [0], [0, 0, 1, 0], [], []>} : vector<16x16xbf16>, vector<16x16xbf16>, vector<16x16xf32> -> vector<16x16xf32>
    %cst_55 = arith.constant dense<0.000000e+00> : vector<16x31xf32>
    %234 = tpu.matmul %230, %26, %cst_55 {dimension_numbers = #tpu.dot_dimension_numbers<[1], [0], [0], [1], [0, 0, 1, 1], [], []>} : vector<16x16xbf16>, vector<16x31xbf16>, vector<16x31xf32> -> vector<16x31xf32>
    %235 = vector.extract_strided_slice %234 {offsets = [0, 15], sizes = [1, 16], strides = [1, 1]} : vector<16x31xf32> to vector<1x16xf32>
    %236 = vector.extract_strided_slice %234 {offsets = [1, 14], sizes = [1, 16], strides = [1, 1]} : vector<16x31xf32> to vector<1x16xf32>
    %237 = vector.extract_strided_slice %234 {offsets = [2, 13], sizes = [1, 16], strides = [1, 1]} : vector<16x31xf32> to vector<1x16xf32>
    %238 = vector.extract_strided_slice %234 {offsets = [3, 12], sizes = [1, 16], strides = [1, 1]} : vector<16x31xf32> to vector<1x16xf32>
    %239 = vector.extract_strided_slice %234 {offsets = [4, 11], sizes = [1, 16], strides = [1, 1]} : vector<16x31xf32> to vector<1x16xf32>
    %240 = vector.extract_strided_slice %234 {offsets = [5, 10], sizes = [1, 16], strides = [1, 1]} : vector<16x31xf32> to vector<1x16xf32>
    %241 = vector.extract_strided_slice %234 {offsets = [6, 9], sizes = [1, 16], strides = [1, 1]} : vector<16x31xf32> to vector<1x16xf32>
    %242 = vector.extract_strided_slice %234 {offsets = [7, 8], sizes = [1, 16], strides = [1, 1]} : vector<16x31xf32> to vector<1x16xf32>
    %243 = vector.extract_strided_slice %234 {offsets = [8, 7], sizes = [1, 16], strides = [1, 1]} : vector<16x31xf32> to vector<1x16xf32>
    %244 = vector.extract_strided_slice %234 {offsets = [9, 6], sizes = [1, 16], strides = [1, 1]} : vector<16x31xf32> to vector<1x16xf32>
    %245 = vector.extract_strided_slice %234 {offsets = [10, 5], sizes = [1, 16], strides = [1, 1]} : vector<16x31xf32> to vector<1x16xf32>
    %246 = vector.extract_strided_slice %234 {offsets = [11, 4], sizes = [1, 16], strides = [1, 1]} : vector<16x31xf32> to vector<1x16xf32>
    %247 = vector.extract_strided_slice %234 {offsets = [12, 3], sizes = [1, 16], strides = [1, 1]} : vector<16x31xf32> to vector<1x16xf32>
    %248 = vector.extract_strided_slice %234 {offsets = [13, 2], sizes = [1, 16], strides = [1, 1]} : vector<16x31xf32> to vector<1x16xf32>
    %249 = vector.extract_strided_slice %234 {offsets = [14, 1], sizes = [1, 16], strides = [1, 1]} : vector<16x31xf32> to vector<1x16xf32>
    %250 = vector.extract_strided_slice %234 {offsets = [15, 0], sizes = [1, 16], strides = [1, 1]} : vector<16x31xf32> to vector<1x16xf32>
    %251 = tpu.concatenate %235, %236, %237, %238, %239, %240, %241, %242, %243, %244, %245, %246, %247, %248, %249, %250 in 0 : vector<1x16xf32>, vector<1x16xf32>, vector<1x16xf32>, vector<1x16xf32>, vector<1x16xf32>, vector<1x16xf32>, vector<1x16xf32>, vector<1x16xf32>, vector<1x16xf32>, vector<1x16xf32>, vector<1x16xf32>, vector<1x16xf32>, vector<1x16xf32>, vector<1x16xf32>, vector<1x16xf32>, vector<1x16xf32> -> vector<16x16xf32>
    %252 = arith.addf %233, %251 : vector<16x16xf32>
    %cst_56 = arith.constant 2.500000e-01 : f32
    %253 = vector.broadcast %cst_56 : f32 to vector<16x16xf32>
    %254 = arith.mulf %252, %253 : vector<16x16xf32>
    %255 = vector.broadcast %28 : vector<1x16xf32> to vector<16x16xf32>
    %256 = arith.addf %254, %255 : vector<16x16xf32>
    %cst_57 = arith.constant dense<0xFF800000> : vector<16xf32>
    %257 = vector.multi_reduction <maximumf>, %256, %cst_57 [1] : vector<16x16xf32> to vector<16xf32>
    %258 = vector.shape_cast %257 : vector<16xf32> to vector<16x1xf32>
    %259 = vector.broadcast %258 : vector<16x1xf32> to vector<16x16xf32>
    %260 = arith.subf %256, %259 : vector<16x16xf32>
    %261 = math.exp %260 : vector<16x16xf32>
    %cst_58 = arith.constant dense<0.000000e+00> : vector<16xf32>
    %262 = vector.multi_reduction <add>, %261, %cst_58 [1] : vector<16x16xf32> to vector<16xf32>
    %263 = vector.shape_cast %262 : vector<16xf32> to vector<16x1xf32>
    %264 = tpu.reciprocal %263 {approx = true} : vector<16x1xf32> -> vector<16x1xf32>
    %265 = vector.broadcast %264 : vector<16x1xf32> to vector<16x16xf32>
    %266 = arith.mulf %261, %265 : vector<16x16xf32>
    %267 = arith.truncf %266 : vector<16x16xf32> to vector<16x16xbf16>
    %cst_59 = arith.constant dense<0.000000e+00> : vector<16x16xf32>
    %268 = tpu.matmul %267, %232, %cst_59 {dimension_numbers = #tpu.dot_dimension_numbers<[1], [0], [0], [1], [0, 0, 1, 1], [], []>} : vector<16x16xbf16>, vector<16x16xbf16>, vector<16x16xf32> -> vector<16x16xf32>
    %269 = vector.extract_strided_slice %18 {offsets = [0, 96], sizes = [16, 16], strides = [1, 1]} : vector<16x128xbf16> to vector<16x16xbf16>
    %270 = vector.extract_strided_slice %23 {offsets = [0, 96], sizes = [16, 16], strides = [1, 1]} : vector<16x128xbf16> to vector<16x16xbf16>
    %271 = vector.extract_strided_slice %24 {offsets = [0, 96], sizes = [16, 16], strides = [1, 1]} : vector<16x128xbf16> to vector<16x16xbf16>
    %272 = vector.extract_strided_slice %25 {offsets = [0, 96], sizes = [16, 16], strides = [1, 1]} : vector<16x128xbf16> to vector<16x16xbf16>
    %cst_60 = arith.constant dense<0.000000e+00> : vector<16x16xf32>
    %273 = tpu.matmul %269, %271, %cst_60 {dimension_numbers = #tpu.dot_dimension_numbers<[1], [1], [0], [0], [0, 0, 1, 0], [], []>} : vector<16x16xbf16>, vector<16x16xbf16>, vector<16x16xf32> -> vector<16x16xf32>
    %cst_61 = arith.constant dense<0.000000e+00> : vector<16x31xf32>
    %274 = tpu.matmul %270, %26, %cst_61 {dimension_numbers = #tpu.dot_dimension_numbers<[1], [0], [0], [1], [0, 0, 1, 1], [], []>} : vector<16x16xbf16>, vector<16x31xbf16>, vector<16x31xf32> -> vector<16x31xf32>
    %275 = vector.extract_strided_slice %274 {offsets = [0, 15], sizes = [1, 16], strides = [1, 1]} : vector<16x31xf32> to vector<1x16xf32>
    %276 = vector.extract_strided_slice %274 {offsets = [1, 14], sizes = [1, 16], strides = [1, 1]} : vector<16x31xf32> to vector<1x16xf32>
    %277 = vector.extract_strided_slice %274 {offsets = [2, 13], sizes = [1, 16], strides = [1, 1]} : vector<16x31xf32> to vector<1x16xf32>
    %278 = vector.extract_strided_slice %274 {offsets = [3, 12], sizes = [1, 16], strides = [1, 1]} : vector<16x31xf32> to vector<1x16xf32>
    %279 = vector.extract_strided_slice %274 {offsets = [4, 11], sizes = [1, 16], strides = [1, 1]} : vector<16x31xf32> to vector<1x16xf32>
    %280 = vector.extract_strided_slice %274 {offsets = [5, 10], sizes = [1, 16], strides = [1, 1]} : vector<16x31xf32> to vector<1x16xf32>
    %281 = vector.extract_strided_slice %274 {offsets = [6, 9], sizes = [1, 16], strides = [1, 1]} : vector<16x31xf32> to vector<1x16xf32>
    %282 = vector.extract_strided_slice %274 {offsets = [7, 8], sizes = [1, 16], strides = [1, 1]} : vector<16x31xf32> to vector<1x16xf32>
    %283 = vector.extract_strided_slice %274 {offsets = [8, 7], sizes = [1, 16], strides = [1, 1]} : vector<16x31xf32> to vector<1x16xf32>
    %284 = vector.extract_strided_slice %274 {offsets = [9, 6], sizes = [1, 16], strides = [1, 1]} : vector<16x31xf32> to vector<1x16xf32>
    %285 = vector.extract_strided_slice %274 {offsets = [10, 5], sizes = [1, 16], strides = [1, 1]} : vector<16x31xf32> to vector<1x16xf32>
    %286 = vector.extract_strided_slice %274 {offsets = [11, 4], sizes = [1, 16], strides = [1, 1]} : vector<16x31xf32> to vector<1x16xf32>
    %287 = vector.extract_strided_slice %274 {offsets = [12, 3], sizes = [1, 16], strides = [1, 1]} : vector<16x31xf32> to vector<1x16xf32>
    %288 = vector.extract_strided_slice %274 {offsets = [13, 2], sizes = [1, 16], strides = [1, 1]} : vector<16x31xf32> to vector<1x16xf32>
    %289 = vector.extract_strided_slice %274 {offsets = [14, 1], sizes = [1, 16], strides = [1, 1]} : vector<16x31xf32> to vector<1x16xf32>
    %290 = vector.extract_strided_slice %274 {offsets = [15, 0], sizes = [1, 16], strides = [1, 1]} : vector<16x31xf32> to vector<1x16xf32>
    %291 = tpu.concatenate %275, %276, %277, %278, %279, %280, %281, %282, %283, %284, %285, %286, %287, %288, %289, %290 in 0 : vector<1x16xf32>, vector<1x16xf32>, vector<1x16xf32>, vector<1x16xf32>, vector<1x16xf32>, vector<1x16xf32>, vector<1x16xf32>, vector<1x16xf32>, vector<1x16xf32>, vector<1x16xf32>, vector<1x16xf32>, vector<1x16xf32>, vector<1x16xf32>, vector<1x16xf32>, vector<1x16xf32>, vector<1x16xf32> -> vector<16x16xf32>
    %292 = arith.addf %273, %291 : vector<16x16xf32>
    %cst_62 = arith.constant 2.500000e-01 : f32
    %293 = vector.broadcast %cst_62 : f32 to vector<16x16xf32>
    %294 = arith.mulf %292, %293 : vector<16x16xf32>
    %295 = vector.broadcast %28 : vector<1x16xf32> to vector<16x16xf32>
    %296 = arith.addf %294, %295 : vector<16x16xf32>
    %cst_63 = arith.constant dense<0xFF800000> : vector<16xf32>
    %297 = vector.multi_reduction <maximumf>, %296, %cst_63 [1] : vector<16x16xf32> to vector<16xf32>
    %298 = vector.shape_cast %297 : vector<16xf32> to vector<16x1xf32>
    %299 = vector.broadcast %298 : vector<16x1xf32> to vector<16x16xf32>
    %300 = arith.subf %296, %299 : vector<16x16xf32>
    %301 = math.exp %300 : vector<16x16xf32>
    %cst_64 = arith.constant dense<0.000000e+00> : vector<16xf32>
    %302 = vector.multi_reduction <add>, %301, %cst_64 [1] : vector<16x16xf32> to vector<16xf32>
    %303 = vector.shape_cast %302 : vector<16xf32> to vector<16x1xf32>
    %304 = tpu.reciprocal %303 {approx = true} : vector<16x1xf32> -> vector<16x1xf32>
    %305 = vector.broadcast %304 : vector<16x1xf32> to vector<16x16xf32>
    %306 = arith.mulf %301, %305 : vector<16x16xf32>
    %307 = arith.truncf %306 : vector<16x16xf32> to vector<16x16xbf16>
    %cst_65 = arith.constant dense<0.000000e+00> : vector<16x16xf32>
    %308 = tpu.matmul %307, %272, %cst_65 {dimension_numbers = #tpu.dot_dimension_numbers<[1], [0], [0], [1], [0, 0, 1, 1], [], []>} : vector<16x16xbf16>, vector<16x16xbf16>, vector<16x16xf32> -> vector<16x16xf32>
    %309 = vector.extract_strided_slice %18 {offsets = [0, 112], sizes = [16, 16], strides = [1, 1]} : vector<16x128xbf16> to vector<16x16xbf16>
    %310 = vector.extract_strided_slice %23 {offsets = [0, 112], sizes = [16, 16], strides = [1, 1]} : vector<16x128xbf16> to vector<16x16xbf16>
    %311 = vector.extract_strided_slice %24 {offsets = [0, 112], sizes = [16, 16], strides = [1, 1]} : vector<16x128xbf16> to vector<16x16xbf16>
    %312 = vector.extract_strided_slice %25 {offsets = [0, 112], sizes = [16, 16], strides = [1, 1]} : vector<16x128xbf16> to vector<16x16xbf16>
    %cst_66 = arith.constant dense<0.000000e+00> : vector<16x16xf32>
    %313 = tpu.matmul %309, %311, %cst_66 {dimension_numbers = #tpu.dot_dimension_numbers<[1], [1], [0], [0], [0, 0, 1, 0], [], []>} : vector<16x16xbf16>, vector<16x16xbf16>, vector<16x16xf32> -> vector<16x16xf32>
    %cst_67 = arith.constant dense<0.000000e+00> : vector<16x31xf32>
    %314 = tpu.matmul %310, %26, %cst_67 {dimension_numbers = #tpu.dot_dimension_numbers<[1], [0], [0], [1], [0, 0, 1, 1], [], []>} : vector<16x16xbf16>, vector<16x31xbf16>, vector<16x31xf32> -> vector<16x31xf32>
    %315 = vector.extract_strided_slice %314 {offsets = [0, 15], sizes = [1, 16], strides = [1, 1]} : vector<16x31xf32> to vector<1x16xf32>
    %316 = vector.extract_strided_slice %314 {offsets = [1, 14], sizes = [1, 16], strides = [1, 1]} : vector<16x31xf32> to vector<1x16xf32>
    %317 = vector.extract_strided_slice %314 {offsets = [2, 13], sizes = [1, 16], strides = [1, 1]} : vector<16x31xf32> to vector<1x16xf32>
    %318 = vector.extract_strided_slice %314 {offsets = [3, 12], sizes = [1, 16], strides = [1, 1]} : vector<16x31xf32> to vector<1x16xf32>
    %319 = vector.extract_strided_slice %314 {offsets = [4, 11], sizes = [1, 16], strides = [1, 1]} : vector<16x31xf32> to vector<1x16xf32>
    %320 = vector.extract_strided_slice %314 {offsets = [5, 10], sizes = [1, 16], strides = [1, 1]} : vector<16x31xf32> to vector<1x16xf32>
    %321 = vector.extract_strided_slice %314 {offsets = [6, 9], sizes = [1, 16], strides = [1, 1]} : vector<16x31xf32> to vector<1x16xf32>
    %322 = vector.extract_strided_slice %314 {offsets = [7, 8], sizes = [1, 16], strides = [1, 1]} : vector<16x31xf32> to vector<1x16xf32>
    %323 = vector.extract_strided_slice %314 {offsets = [8, 7], sizes = [1, 16], strides = [1, 1]} : vector<16x31xf32> to vector<1x16xf32>
    %324 = vector.extract_strided_slice %314 {offsets = [9, 6], sizes = [1, 16], strides = [1, 1]} : vector<16x31xf32> to vector<1x16xf32>
    %325 = vector.extract_strided_slice %314 {offsets = [10, 5], sizes = [1, 16], strides = [1, 1]} : vector<16x31xf32> to vector<1x16xf32>
    %326 = vector.extract_strided_slice %314 {offsets = [11, 4], sizes = [1, 16], strides = [1, 1]} : vector<16x31xf32> to vector<1x16xf32>
    %327 = vector.extract_strided_slice %314 {offsets = [12, 3], sizes = [1, 16], strides = [1, 1]} : vector<16x31xf32> to vector<1x16xf32>
    %328 = vector.extract_strided_slice %314 {offsets = [13, 2], sizes = [1, 16], strides = [1, 1]} : vector<16x31xf32> to vector<1x16xf32>
    %329 = vector.extract_strided_slice %314 {offsets = [14, 1], sizes = [1, 16], strides = [1, 1]} : vector<16x31xf32> to vector<1x16xf32>
    %330 = vector.extract_strided_slice %314 {offsets = [15, 0], sizes = [1, 16], strides = [1, 1]} : vector<16x31xf32> to vector<1x16xf32>
    %331 = tpu.concatenate %315, %316, %317, %318, %319, %320, %321, %322, %323, %324, %325, %326, %327, %328, %329, %330 in 0 : vector<1x16xf32>, vector<1x16xf32>, vector<1x16xf32>, vector<1x16xf32>, vector<1x16xf32>, vector<1x16xf32>, vector<1x16xf32>, vector<1x16xf32>, vector<1x16xf32>, vector<1x16xf32>, vector<1x16xf32>, vector<1x16xf32>, vector<1x16xf32>, vector<1x16xf32>, vector<1x16xf32>, vector<1x16xf32> -> vector<16x16xf32>
    %332 = arith.addf %313, %331 : vector<16x16xf32>
    %cst_68 = arith.constant 2.500000e-01 : f32
    %333 = vector.broadcast %cst_68 : f32 to vector<16x16xf32>
    %334 = arith.mulf %332, %333 : vector<16x16xf32>
    %335 = vector.broadcast %28 : vector<1x16xf32> to vector<16x16xf32>
    %336 = arith.addf %334, %335 : vector<16x16xf32>
    %cst_69 = arith.constant dense<0xFF800000> : vector<16xf32>
    %337 = vector.multi_reduction <maximumf>, %336, %cst_69 [1] : vector<16x16xf32> to vector<16xf32>
    %338 = vector.shape_cast %337 : vector<16xf32> to vector<16x1xf32>
    %339 = vector.broadcast %338 : vector<16x1xf32> to vector<16x16xf32>
    %340 = arith.subf %336, %339 : vector<16x16xf32>
    %341 = math.exp %340 : vector<16x16xf32>
    %cst_70 = arith.constant dense<0.000000e+00> : vector<16xf32>
    %342 = vector.multi_reduction <add>, %341, %cst_70 [1] : vector<16x16xf32> to vector<16xf32>
    %343 = vector.shape_cast %342 : vector<16xf32> to vector<16x1xf32>
    %344 = tpu.reciprocal %343 {approx = true} : vector<16x1xf32> -> vector<16x1xf32>
    %345 = vector.broadcast %344 : vector<16x1xf32> to vector<16x16xf32>
    %346 = arith.mulf %341, %345 : vector<16x16xf32>
    %347 = arith.truncf %346 : vector<16x16xf32> to vector<16x16xbf16>
    %cst_71 = arith.constant dense<0.000000e+00> : vector<16x16xf32>
    %348 = tpu.matmul %347, %312, %cst_71 {dimension_numbers = #tpu.dot_dimension_numbers<[1], [0], [0], [1], [0, 0, 1, 1], [], []>} : vector<16x16xbf16>, vector<16x16xbf16>, vector<16x16xf32> -> vector<16x16xf32>
    %349 = tpu.concatenate %68, %108, %148, %188, %228, %268, %308, %348 in 1 : vector<16x16xf32>, vector<16x16xf32>, vector<16x16xf32>, vector<16x16xf32>, vector<16x16xf32>, vector<16x16xf32>, vector<16x16xf32>, vector<16x16xf32> -> vector<16x128xf32>
    %350 = arith.truncf %349 : vector<16x128xf32> to vector<16x128xbf16>
    %c0_72 = arith.constant 0 : index
    %c0_73 = arith.constant 0 : index
    %c0_74 = arith.constant 0 : index
    %351 = vector.load %arg10[%c0_72, %c0_73, %c0_74] : memref<1x128x128xbf16, #tpu.memory_space<vmem>>, vector<1x128x128xbf16>
    %352 = vector.shape_cast %351 : vector<1x128x128xbf16> to vector<128x128xbf16>
    %cst_75 = arith.constant dense<0.000000e+00> : vector<16x128xf32>
    %353 = tpu.matmul %350, %352, %cst_75 {dimension_numbers = #tpu.dot_dimension_numbers<[1], [0], [0], [1], [0, 0, 1, 1], [], []>} : vector<16x128xbf16>, vector<128x128xbf16>, vector<16x128xf32> -> vector<16x128xf32>
    %354 = arith.addf %3, %353 : vector<16x128xf32>
    %c0_76 = arith.constant 0 : index
    %c0_77 = arith.constant 0 : index
    %c0_78 = arith.constant 0 : index
    %355 = vector.load %arg11[%c0_76, %c0_77, %c0_78] : memref<1x1x128xf32, #tpu.memory_space<vmem>>, vector<1x1x128xf32>
    %356 = vector.shape_cast %355 : vector<1x1x128xf32> to vector<1x128xf32>
    %c0_79 = arith.constant 0 : index
    %c0_80 = arith.constant 0 : index
    %c0_81 = arith.constant 0 : index
    %357 = vector.load %arg12[%c0_79, %c0_80, %c0_81] : memref<1x1x128xf32, #tpu.memory_space<vmem>>, vector<1x1x128xf32>
    %358 = vector.shape_cast %357 : vector<1x1x128xf32> to vector<1x128xf32>
    %cst_82 = arith.constant dense<0.000000e+00> : vector<16xf32>
    %359 = vector.multi_reduction <add>, %354, %cst_82 [1] : vector<16x128xf32> to vector<16xf32>
    %360 = vector.shape_cast %359 : vector<16xf32> to vector<16x1xf32>
    %cst_83 = arith.constant 1.280000e+02 : f32
    %361 = vector.broadcast %cst_83 : f32 to vector<16x1xf32>
    %362 = arith.divf %360, %361 : vector<16x1xf32>
    %363 = vector.broadcast %362 : vector<16x1xf32> to vector<16x128xf32>
    %364 = arith.subf %354, %363 : vector<16x128xf32>
    %365 = arith.mulf %364, %364 : vector<16x128xf32>
    %cst_84 = arith.constant dense<0.000000e+00> : vector<16xf32>
    %366 = vector.multi_reduction <add>, %365, %cst_84 [1] : vector<16x128xf32> to vector<16xf32>
    %367 = vector.shape_cast %366 : vector<16xf32> to vector<16x1xf32>
    %cst_85 = arith.constant 1.280000e+02 : f32
    %368 = vector.broadcast %cst_85 : f32 to vector<16x1xf32>
    %369 = arith.divf %367, %368 : vector<16x1xf32>
    %370 = vector.broadcast %362 : vector<16x1xf32> to vector<16x128xf32>
    %371 = arith.subf %354, %370 : vector<16x128xf32>
    %cst_86 = arith.constant 9.99999974E-6 : f32
    %372 = vector.broadcast %cst_86 : f32 to vector<16x1xf32>
    %373 = arith.addf %369, %372 : vector<16x1xf32>
    %374 = math.rsqrt %373 : vector<16x1xf32>
    %375 = vector.broadcast %374 : vector<16x1xf32> to vector<16x128xf32>
    %376 = arith.mulf %371, %375 : vector<16x128xf32>
    %377 = vector.broadcast %356 : vector<1x128xf32> to vector<16x128xf32>
    %378 = arith.mulf %376, %377 : vector<16x128xf32>
    %379 = vector.broadcast %358 : vector<1x128xf32> to vector<16x128xf32>
    %380 = arith.addf %378, %379 : vector<16x128xf32>
    %381 = arith.truncf %380 : vector<16x128xf32> to vector<16x128xbf16>
    %c0_87 = arith.constant 0 : index
    %c0_88 = arith.constant 0 : index
    %c0_89 = arith.constant 0 : index
    %382 = vector.load %arg13[%c0_87, %c0_88, %c0_89] : memref<1x128x256xbf16, #tpu.memory_space<vmem>>, vector<1x128x256xbf16>
    %383 = vector.shape_cast %382 : vector<1x128x256xbf16> to vector<128x256xbf16>
    %cst_90 = arith.constant dense<0.000000e+00> : vector<16x256xf32>
    %384 = tpu.matmul %381, %383, %cst_90 {dimension_numbers = #tpu.dot_dimension_numbers<[1], [0], [0], [1], [0, 0, 1, 1], [], []>} : vector<16x128xbf16>, vector<128x256xbf16>, vector<16x256xf32> -> vector<16x256xf32>
    %c0_91 = arith.constant 0 : index
    %c0_92 = arith.constant 0 : index
    %c0_93 = arith.constant 0 : index
    %385 = vector.load %arg14[%c0_91, %c0_92, %c0_93] : memref<1x1x256xf32, #tpu.memory_space<vmem>>, vector<1x1x256xf32>
    %386 = vector.shape_cast %385 : vector<1x1x256xf32> to vector<1x256xf32>
    %387 = vector.broadcast %386 : vector<1x256xf32> to vector<16x256xf32>
    %388 = arith.addf %384, %387 : vector<16x256xf32>
    %cst_94 = arith.constant 0.000000e+00 : f32
    %389 = vector.broadcast %cst_94 : f32 to vector<16x256xf32>
    %390 = arith.maximumf %388, %389 : vector<16x256xf32>
    %391 = arith.truncf %390 : vector<16x256xf32> to vector<16x256xbf16>
    %c0_95 = arith.constant 0 : index
    %c0_96 = arith.constant 0 : index
    %c0_97 = arith.constant 0 : index
    %392 = vector.load %arg15[%c0_95, %c0_96, %c0_97] : memref<1x256x128xbf16, #tpu.memory_space<vmem>>, vector<1x256x128xbf16>
    %393 = vector.shape_cast %392 : vector<1x256x128xbf16> to vector<256x128xbf16>
    %cst_98 = arith.constant dense<0.000000e+00> : vector<16x128xf32>
    %394 = tpu.matmul %391, %393, %cst_98 {dimension_numbers = #tpu.dot_dimension_numbers<[1], [0], [0], [1], [0, 0, 1, 1], [], []>} : vector<16x256xbf16>, vector<256x128xbf16>, vector<16x128xf32> -> vector<16x128xf32>
    %c0_99 = arith.constant 0 : index
    %c0_100 = arith.constant 0 : index
    %c0_101 = arith.constant 0 : index
    %395 = vector.load %arg16[%c0_99, %c0_100, %c0_101] : memref<1x1x128xf32, #tpu.memory_space<vmem>>, vector<1x1x128xf32>
    %396 = vector.shape_cast %395 : vector<1x1x128xf32> to vector<1x128xf32>
    %397 = vector.broadcast %396 : vector<1x128xf32> to vector<16x128xf32>
    %398 = arith.addf %394, %397 : vector<16x128xf32>
    %399 = arith.addf %380, %398 : vector<16x128xf32>
    %c0_102 = arith.constant 0 : index
    %c0_103 = arith.constant 0 : index
    %c0_104 = arith.constant 0 : index
    %400 = vector.load %arg17[%c0_102, %c0_103, %c0_104] : memref<1x1x128xf32, #tpu.memory_space<vmem>>, vector<1x1x128xf32>
    %401 = vector.shape_cast %400 : vector<1x1x128xf32> to vector<1x128xf32>
    %c0_105 = arith.constant 0 : index
    %c0_106 = arith.constant 0 : index
    %c0_107 = arith.constant 0 : index
    %402 = vector.load %arg18[%c0_105, %c0_106, %c0_107] : memref<1x1x128xf32, #tpu.memory_space<vmem>>, vector<1x1x128xf32>
    %403 = vector.shape_cast %402 : vector<1x1x128xf32> to vector<1x128xf32>
    %cst_108 = arith.constant dense<0.000000e+00> : vector<16xf32>
    %404 = vector.multi_reduction <add>, %399, %cst_108 [1] : vector<16x128xf32> to vector<16xf32>
    %405 = vector.shape_cast %404 : vector<16xf32> to vector<16x1xf32>
    %cst_109 = arith.constant 1.280000e+02 : f32
    %406 = vector.broadcast %cst_109 : f32 to vector<16x1xf32>
    %407 = arith.divf %405, %406 : vector<16x1xf32>
    %408 = vector.broadcast %407 : vector<16x1xf32> to vector<16x128xf32>
    %409 = arith.subf %399, %408 : vector<16x128xf32>
    %410 = arith.mulf %409, %409 : vector<16x128xf32>
    %cst_110 = arith.constant dense<0.000000e+00> : vector<16xf32>
    %411 = vector.multi_reduction <add>, %410, %cst_110 [1] : vector<16x128xf32> to vector<16xf32>
    %412 = vector.shape_cast %411 : vector<16xf32> to vector<16x1xf32>
    %cst_111 = arith.constant 1.280000e+02 : f32
    %413 = vector.broadcast %cst_111 : f32 to vector<16x1xf32>
    %414 = arith.divf %412, %413 : vector<16x1xf32>
    %415 = vector.broadcast %407 : vector<16x1xf32> to vector<16x128xf32>
    %416 = arith.subf %399, %415 : vector<16x128xf32>
    %cst_112 = arith.constant 9.99999974E-6 : f32
    %417 = vector.broadcast %cst_112 : f32 to vector<16x1xf32>
    %418 = arith.addf %414, %417 : vector<16x1xf32>
    %419 = math.rsqrt %418 : vector<16x1xf32>
    %420 = vector.broadcast %419 : vector<16x1xf32> to vector<16x128xf32>
    %421 = arith.mulf %416, %420 : vector<16x128xf32>
    %422 = vector.broadcast %401 : vector<1x128xf32> to vector<16x128xf32>
    %423 = arith.mulf %421, %422 : vector<16x128xf32>
    %424 = vector.broadcast %403 : vector<1x128xf32> to vector<16x128xf32>
    %425 = arith.addf %423, %424 : vector<16x128xf32>
    %c0_113 = arith.constant 0 : index
    %c0_114 = arith.constant 0 : index
    %426 = vector.load %arg20[%c0_113, %c0_114] : memref<16x128xf32, #tpu.memory_space<vmem>>, vector<16x128xf32>
    tpu.vector_store %arg20[%c0_113, %c0_114], %425 {strides = array<i32>} : memref<16x128xf32, #tpu.memory_space<vmem>>, vector<16x128xf32>,
    %c1_i32 = arith.constant 1 : i32
    %427 = arith.cmpi eq, %arg1, %c1_i32 : i32
    %428 = arith.extui %427 : i1 to i32
    %c0_i32_115 = arith.constant 0 : i32
    %429 = arith.cmpi ne, %428, %c0_i32_115 : i32
    scf.if %429 {
      %c0_116 = arith.constant 0 : index
      %c0_117 = arith.constant 0 : index
      %c0_118 = arith.constant 0 : index
      %430 = vector.load %arg19[%c0_116, %c0_117, %c0_118] : memref<1x16x128xf32, #tpu.memory_space<vmem>>, vector<1x16x128xf32>
      %431 = vector.shape_cast %430 : vector<1x16x128xf32> to vector<16x128xf32>
      %432 = vector.shape_cast %425 : vector<16x128xf32> to vector<1x16x128xf32>
      tpu.vector_store %arg19[%c0_116, %c0_117, %c0_118], %432 {strides = array<i32>} : memref<1x16x128xf32, #tpu.memory_space<vmem>>, vector<1x16x128xf32>,
    } else {
    }
    return
  }
  func.func @transform_0(%arg0: i32, %arg1: i32) -> (i32, i32, i32) {
    %c0_i32 = arith.constant 0 : i32
    %c0_i32_0 = arith.constant 0 : i32
    %c0_i32_1 = arith.constant 0 : i32
    return %arg0, %c0_i32, %c0_i32_0 : i32, i32, i32
  }
  func.func @transform_1(%arg0: i32, %arg1: i32) -> (i32, i32, i32) {
    %c0_i32 = arith.constant 0 : i32
    %c0_i32_0 = arith.constant 0 : i32
    %c0_i32_1 = arith.constant 0 : i32
    return %arg0, %c0_i32, %c0_i32_0 : i32, i32, i32
  }
  func.func @transform_2(%arg0: i32, %arg1: i32) -> (i32, i32) {
    %c0_i32 = arith.constant 0 : i32
    %c0_i32_0 = arith.constant 0 : i32
    %c0_i32_1 = arith.constant 0 : i32
    return %c0_i32, %c0_i32_0 : i32, i32
  }
  func.func @transform_3(%arg0: i32, %arg1: i32) -> (i32, i32, i32) {
    %c0_i32 = arith.constant 0 : i32
    %c0_i32_0 = arith.constant 0 : i32
    %c0_i32_1 = arith.constant 0 : i32
    return %arg1, %c0_i32, %c0_i32_0 : i32, i32, i32
  }
  func.func @transform_4(%arg0: i32, %arg1: i32) -> (i32, i32, i32) {
    %c0_i32 = arith.constant 0 : i32
    %c0_i32_0 = arith.constant 0 : i32
    %c0_i32_1 = arith.constant 0 : i32
    return %arg1, %c0_i32, %c0_i32_0 : i32, i32, i32
  }
  func.func @transform_5(%arg0: i32, %arg1: i32) -> (i32, i32, i32) {
    %c0_i32 = arith.constant 0 : i32
    %c0_i32_0 = arith.constant 0 : i32
    %c0_i32_1 = arith.constant 0 : i32
    return %arg1, %c0_i32, %c0_i32_0 : i32, i32, i32
  }
  func.func @transform_6(%arg0: i32, %arg1: i32) -> (i32, i32, i32) {
    %c0_i32 = arith.constant 0 : i32
    %c0_i32_0 = arith.constant 0 : i32
    %c0_i32_1 = arith.constant 0 : i32
    return %arg1, %c0_i32, %c0_i32_0 : i32, i32, i32
  }
  func.func @transform_7(%arg0: i32, %arg1: i32) -> (i32, i32, i32) {
    %c0_i32 = arith.constant 0 : i32
    %c0_i32_0 = arith.constant 0 : i32
    %c0_i32_1 = arith.constant 0 : i32
    return %arg1, %c0_i32, %c0_i32_0 : i32, i32, i32
  }
  func.func @transform_8(%arg0: i32, %arg1: i32) -> (i32, i32, i32) {
    %c0_i32 = arith.constant 0 : i32
    %c0_i32_0 = arith.constant 0 : i32
    %c0_i32_1 = arith.constant 0 : i32
    return %arg1, %c0_i32, %c0_i32_0 : i32, i32, i32
  }
  func.func @transform_9(%arg0: i32, %arg1: i32) -> (i32, i32, i32) {
    %c0_i32 = arith.constant 0 : i32
    %c0_i32_0 = arith.constant 0 : i32
    %c0_i32_1 = arith.constant 0 : i32
    return %arg1, %c0_i32, %c0_i32_0 : i32, i32, i32
  }
  func.func @transform_10(%arg0: i32, %arg1: i32) -> (i32, i32, i32) {
    %c0_i32 = arith.constant 0 : i32
    %c0_i32_0 = arith.constant 0 : i32
    %c0_i32_1 = arith.constant 0 : i32
    return %arg1, %c0_i32, %c0_i32_0 : i32, i32, i32
  }
  func.func @transform_11(%arg0: i32, %arg1: i32) -> (i32, i32, i32) {
    %c0_i32 = arith.constant 0 : i32
    %c0_i32_0 = arith.constant 0 : i32
    %c0_i32_1 = arith.constant 0 : i32
    return %arg1, %c0_i32, %c0_i32_0 : i32, i32, i32
  }
  func.func @transform_12(%arg0: i32, %arg1: i32) -> (i32, i32, i32) {
    %c0_i32 = arith.constant 0 : i32
    %c0_i32_0 = arith.constant 0 : i32
    %c0_i32_1 = arith.constant 0 : i32
    return %arg1, %c0_i32, %c0_i32_0 : i32, i32, i32
  }
  func.func @transform_13(%arg0: i32, %arg1: i32) -> (i32, i32, i32) {
    %c0_i32 = arith.constant 0 : i32
    %c0_i32_0 = arith.constant 0 : i32
    %c0_i32_1 = arith.constant 0 : i32
    return %arg1, %c0_i32, %c0_i32_0 : i32, i32, i32
  }
  func.func @transform_14(%arg0: i32, %arg1: i32) -> (i32, i32, i32) {
    %c0_i32 = arith.constant 0 : i32
    %c0_i32_0 = arith.constant 0 : i32
    %c0_i32_1 = arith.constant 0 : i32
    return %arg1, %c0_i32, %c0_i32_0 : i32, i32, i32
  }
  func.func @transform_15(%arg0: i32, %arg1: i32) -> (i32, i32, i32) {
    %c0_i32 = arith.constant 0 : i32
    %c0_i32_0 = arith.constant 0 : i32
    %c0_i32_1 = arith.constant 0 : i32
    return %arg1, %c0_i32, %c0_i32_0 : i32, i32, i32
  }
  func.func @transform_16(%arg0: i32, %arg1: i32) -> (i32, i32, i32) {
    %c0_i32 = arith.constant 0 : i32
    %c0_i32_0 = arith.constant 0 : i32
    %c0_i32_1 = arith.constant 0 : i32
    return %arg1, %c0_i32, %c0_i32_0 : i32, i32, i32
  }
  func.func @transform_17(%arg0: i32, %arg1: i32) -> (i32, i32, i32) {
    %c0_i32 = arith.constant 0 : i32
    %c0_i32_0 = arith.constant 0 : i32
    %c0_i32_1 = arith.constant 0 : i32
    return %arg0, %c0_i32, %c0_i32_0 : i32, i32, i32
  }
}

</mosaic_0001>

<llo_original>
// kernel: tpu_custom_call.1
$region0: #{tpu_custom_call.1}
  #allocation0 [shape = 'u32[]', space=smem, size = 0x4, offset = 0x4, fixed_abs, tag = 'smem constant byte address 0x4 - core index']
  #allocation1 [shape = 'u32[144,128]{1,0:T(1,128)}', space=vmem, size = 0x12000, scoped, tag = 'internal scratch']
  #allocation2 [shape = 'f32[16,128]{1,0:T(8,128)}', space=vmem, size = 0x2000, scoped, tag = 'scratch operand']
  %s0 = inlined_call_operand.hbm [shape: f32[2,16,128], index: 0, kind: input, shape index: {}]
  %s1 = inlined_call_operand.vmem [shape: f32[2,1,16], index: 1, kind: input, shape index: {}]
  %s2 = inlined_call_operand.hbm [shape: bf16[16,31], index: 2, kind: input, shape index: {}]
  %s3 = inlined_call_operand.hbm [shape: bf16[2,128,128], index: 3, kind: input, shape index: {}]
  %s4 = inlined_call_operand.hbm [shape: bf16[2,128,128], index: 4, kind: input, shape index: {}]
  %s5 = inlined_call_operand.hbm [shape: bf16[2,128,128], index: 5, kind: input, shape index: {}]
  %s6 = inlined_call_operand.vmem [shape: f32[2,1,128], index: 6, kind: input, shape index: {}]
  %s7 = inlined_call_operand.vmem [shape: f32[2,1,128], index: 7, kind: input, shape index: {}]
  %s8 = inlined_call_operand.hbm [shape: bf16[2,128,128], index: 8, kind: input, shape index: {}]
  %s9 = inlined_call_operand.vmem [shape: f32[2,1,128], index: 9, kind: input, shape index: {}]
  %s10 = inlined_call_operand.vmem [shape: f32[2,1,128], index: 10, kind: input, shape index: {}]
  %s11 = inlined_call_operand.hbm [shape: bf16[2,128,256], index: 11, kind: input, shape index: {}]
  %s12 = inlined_call_operand.vmem [shape: f32[2,1,256], index: 12, kind: input, shape index: {}]
  %s13 = inlined_call_operand.hbm [shape: bf16[2,256,128], index: 13, kind: input, shape index: {}]
  %s14 = inlined_call_operand.vmem [shape: f32[2,1,128], index: 14, kind: input, shape index: {}]
  %s15 = inlined_call_operand.vmem [shape: f32[2,1,128], index: 15, kind: input, shape index: {}]
  %s16 = inlined_call_operand.vmem [shape: f32[2,1,128], index: 16, kind: input, shape index: {}]
  %s17 = inlined_call_operand.hbm [shape: f32[2,16,128], index: 17, kind: output, shape index: {}]
  %s18 = sld [smem:[#allocation0]]
  $region141: #{tpu_custom_call.1} parent=0
    _
  %s20 = ssub.s32 1, %s18
  %s21 = scalar_select 0, %s20, %s18
  $region1: #{tpu_custom_call.1} parent=0
    #allocation3 [shape = 'u8[16384]{0}', space=vmem, size = 0x4000, scoped, tag = 'input window, operand 0']
    #allocation4 [shape = 's32[2]{0}', space=sflag, size = 0x8, scoped, tag = 'scoped memory for tpu_custom_call.1']
    #allocation5 [shape = 's32[2]{0}', space=sflag, size = 0x8, scoped, tag = 'scoped memory for tpu_custom_call.1']
    #allocation6 [shape = 'u8[4096]{0}', space=vmem, size = 0x1000, scoped, tag = 'input window, operand 2, single buffered']
    #allocation7 [shape = 's32[1]{0}', space=sflag, size = 0x4, scoped, tag = 'scoped memory for tpu_custom_call.1']
    #allocation8 [shape = 'u8[65536]{0}', space=vmem, size = 0x10000, scoped, tag = 'input window, operand 3']
    #allocation9 [shape = 'u8[65536]{0}', space=vmem, size = 0x10000, scoped, tag = 'input window, operand 4']
    #allocation10 [shape = 'u8[65536]{0}', space=vmem, size = 0x10000, scoped, tag = 'input window, operand 5']
    #allocation11 [shape = 'u8[65536]{0}', space=vmem, size = 0x10000, scoped, tag = 'input window, operand 8']
    #allocation12 [shape = 'u8[131072]{0}', space=vmem, size = 0x20000, scoped, tag = 'input window, operand 11']
    #allocation13 [shape = 'u8[131072]{0}', space=vmem, size = 0x20000, scoped, tag = 'input window, operand 13']
    #allocation14 [shape = 'u8[16384]{0}', space=vmem, size = 0x4000, scoped, tag = 'output window, operand 0']
    %22 = vsyncpa [#allocation4], 0
    %s23 = scalar_lea.sflag [#allocation4], 1
    %24 = vsyncpa %s23, 0
    %25 = vsyncpa [#allocation7], 0
    %26 = vsyncpa [#allocation5], 0
    %s27 = scalar_lea.sflag [#allocation5], 1
    %28 = vsyncpa %s27, 0
    loop: start=0, step=1, limit=6
    $region2: #{tpu_custom_call.1} parent=1 // loop_pre_header
      _
    $region3: #{tpu_custom_call.1} parent=1 // loop_header
      %s30 = sphi 0, %s34
      %p31 = scmp.ge.s32.totalorder %s30, 6
      %s37 = sphi 0, %s49
      %s38 = sphi 0, %s45
      %s39 = sphi 0, %s37
      %s40 = sphi 0, %s38
      %s41 = sphi 0, %s39
      %s42 = sphi 0, %s40
      %s52 = sphi 0, %s54
      %s55 = sphi 0, %s52
      %s56 = sphi 0, %s55
      %s72 = sphi 0, %s56
      %s78 = sphi 0, %s80
      %s81 = sphi 0, %s78
      %s82 = sphi 0, %s81
      %s98 = sphi 0, %s82
      %s102 = sphi 0, %s102
      %s104 = sphi 0, %s102
      %s105 = sphi 0, %s104
      %s119 = sphi 0, %s105
      %s125 = sphi 0, %s127
      %s128 = sphi 0, %s125
      %s129 = sphi 0, %s128
      %s145 = sphi 0, %s129
      %s151 = sphi 0, %s153
      %s154 = sphi 0, %s151
      %s155 = sphi 0, %s154
      %s171 = sphi 0, %s155
      %s177 = sphi 0, %s179
      %s180 = sphi 0, %s177
      %s181 = sphi 0, %s180
      %s197 = sphi 0, %s181
      %s203 = sphi 0, %s205
      %s206 = sphi 0, %s203
      %s207 = sphi 0, %s206
      %s223 = sphi 0, %s207
      %s229 = sphi 0, %s231
      %s232 = sphi 0, %s229
      %s233 = sphi 0, %s232
      %s249 = sphi 0, %s233
      %s255 = sphi 0, %s257
      %s258 = sphi 0, %s255
      %s259 = sphi 0, %s258
      %s275 = sphi 0, %s259
      %s281 = sphi 0, %s283
      %s284 = sphi 0, %s281
      %s285 = sphi 0, %s284
      %s301 = sphi 0, %s285
      %s307 = sphi 0, %s309
      %s310 = sphi 0, %s307
      %s311 = sphi 0, %s310
      %s327 = sphi 0, %s311
      %s333 = sphi 0, %s335
      %s336 = sphi 0, %s333
      %s337 = sphi 0, %s336
      %s353 = sphi 0, %s337
      %s359 = sphi 0, %s361
      %s362 = sphi 0, %s359
      %s363 = sphi 0, %s362
      %s379 = sphi 0, %s363
      %s385 = sphi 0, %s387
      %s388 = sphi 0, %s385
      %s389 = sphi 0, %s388
      %s405 = sphi 0, %s389
      %s411 = sphi 0, %s413
      %s414 = sphi 0, %s411
      %s415 = sphi 0, %s414
      %s431 = sphi 0, %s415
      %s437 = sphi 0, %s439
      %s440 = sphi 0, %s437
      %s441 = sphi 0, %s440
      %s457 = sphi 0, %s441
      %s463 = sphi 0, %s465
      %s466 = sphi 0, %s463
      %s467 = sphi 0, %s466
      %s483 = sphi 0, %s467
      %s489 = sphi 0, %s491
      %s492 = sphi 0, %s489
      %s493 = sphi 0, %s492
      %s509 = sphi 0, %s493
    $region4: #{tpu_custom_call.1} parent=1 // loop_header_branch
      %33 = sbr.rel (%p31) target = $region8
    $region5: #{tpu_custom_call.1} parent=1 // loop_body
      %s35 = ssub.s32 %s30, 1
      %s36 = ssub.s32 %s30, 2
      %s43 = sadd.s32 1, %s38
      %p44 = scmp.ge.s32.totalorder %s43, 2
      %s45 = scalar_select %p44, 0, %s43
      %s46 = sadd.s32 1, %s37
      %s47 = scalar_select %p44, %s46, %s37
      %p48 = scmp.ge.s32.totalorder %s47, 2
      %s49 = scalar_select %p48, 0, %s47
      %s50 = ssub.s32 %s37, %s49
      %p51 = scmp.eq.s32.totalorder %s50, 0
      %s53 = sadd.s32 %s52, 1
      %s54 = scalar_select %p51, %s52, %s53
      %p57 = pneg %p51
      %p58 = scmp.eq.s32.totalorder %s30, 3
      %p59 = por %p57, %p58
      %p60 = scmp.ne.s32.totalorder %s52, %s55
      %p61 = scmp.eq.s32.totalorder %s30, 0
      %p62 = por %p60, %p61
      %p63 = scmp.ne.s32.totalorder %s52, %s55
      %p64 = scmp.eq.s32.totalorder %s35, 3
      %p65 = por %p63, %p64
      %p66 = scmp.ne.s32.totalorder %s55, %s56
      %p67 = scmp.eq.s32.totalorder %s35, 0
      %p68 = por %p66, %p67
      %p69 = scmp.ne.s32.totalorder %s55, %s56
      %p70 = scmp.eq.s32.totalorder %s36, 3
      %p71 = por %p69, %p70
      %p73 = scmp.ne.s32.totalorder %s56, %s72
      %p74 = scmp.eq.s32.totalorder %s36, 0
      %p75 = por %p73, %p74
      %s76 = ssub.s32 %s37, %s49
      %p77 = scmp.eq.s32.totalorder %s76, 0
      %s79 = sadd.s32 %s78, 1
      %s80 = scalar_select %p77, %s78, %s79
      %p83 = pneg %p77
      %p84 = scmp.eq.s32.totalorder %s30, 3
      %p85 = por %p83, %p84
      %p86 = scmp.ne.s32.totalorder %s78, %s81
      %p87 = scmp.eq.s32.totalorder %s30, 0
      %p88 = por %p86, %p87
      %p89 = scmp.ne.s32.totalorder %s78, %s81
      %p90 = scmp.eq.s32.totalorder %s35, 3
      %p91 = por %p89, %p90
      %p92 = scmp.ne.s32.totalorder %s81, %s82
      %p93 = scmp.eq.s32.totalorder %s35, 0
      %p94 = por %p92, %p93
      %p95 = scmp.ne.s32.totalorder %s81, %s82
      %p96 = scmp.eq.s32.totalorder %s36, 3
      %p97 = por %p95, %p96
      %p99 = scmp.ne.s32.totalorder %s82, %s98
      %p100 = scmp.eq.s32.totalorder %s36, 0
      %p101 = por %p99, %p100
      %s103 = sadd.s32 %s102, 1
      %p106 = scmp.eq.s32.totalorder %s30, 3
      %p107 = scmp.ne.s32.totalorder %s102, %s104
      %p108 = scmp.eq.s32.totalorder %s30, 0
      %p109 = por %p107, %p108
      %p110 = scmp.ne.s32.totalorder %s102, %s104
      %p111 = scmp.eq.s32.totalorder %s35, 3
      %p112 = por %p110, %p111
      %p113 = scmp.ne.s32.totalorder %s104, %s105
      %p114 = scmp.eq.s32.totalorder %s35, 0
      %p115 = por %p113, %p114
      %p116 = scmp.ne.s32.totalorder %s104, %s105
      %p117 = scmp.eq.s32.totalorder %s36, 3
      %p118 = por %p116, %p117
      %p120 = scmp.ne.s32.totalorder %s105, %s119
      %p121 = scmp.eq.s32.totalorder %s36, 0
      %p122 = por %p120, %p121
      %s123 = ssub.s32 %s38, %s45
      %p124 = scmp.eq.s32.totalorder %s123, 0
      %s126 = sadd.s32 %s125, 1
      %s127 = scalar_select %p124, %s125, %s126
      %p130 = pneg %p124
      %p131 = scmp.eq.s32.totalorder %s30, 3
      %p132 = por %p130, %p131
      %p133 = scmp.ne.s32.totalorder %s125, %s128
      %p134 = scmp.eq.s32.totalorder %s30, 0
      %p135 = por %p133, %p134
      %p136 = scmp.ne.s32.totalorder %s125, %s128
      %p137 = scmp.eq.s32.totalorder %s35, 3
      %p138 = por %p136, %p137
      %p139 = scmp.ne.s32.totalorder %s128, %s129
      %p140 = scmp.eq.s32.totalorder %s35, 0
      %p141 = por %p139, %p140
      %p142 = scmp.ne.s32.totalorder %s128, %s129
      %p143 = scmp.eq.s32.totalorder %s36, 3
      %p144 = por %p142, %p143
      %p146 = scmp.ne.s32.totalorder %s129, %s145
      %p147 = scmp.eq.s32.totalorder %s36, 0
      %p148 = por %p146, %p147
      %s149 = ssub.s32 %s38, %s45
      %p150 = scmp.eq.s32.totalorder %s149, 0
      %s152 = sadd.s32 %s151, 1
      %s153 = scalar_select %p150, %s151, %s152
      %p156 = pneg %p150
      %p157 = scmp.eq.s32.totalorder %s30, 3
      %p158 = por %p156, %p157
      %p159 = scmp.ne.s32.totalorder %s151, %s154
      %p160 = scmp.eq.s32.totalorder %s30, 0
      %p161 = por %p159, %p160
      %p162 = scmp.ne.s32.totalorder %s151, %s154
      %p163 = scmp.eq.s32.totalorder %s35, 3
      %p164 = por %p162, %p163
      %p165 = scmp.ne.s32.totalorder %s154, %s155
      %p166 = scmp.eq.s32.totalorder %s35, 0
      %p167 = por %p165, %p166
      %p168 = scmp.ne.s32.totalorder %s154, %s155
      %p169 = scmp.eq.s32.totalorder %s36, 3
      %p170 = por %p168, %p169
      %p172 = scmp.ne.s32.totalorder %s155, %s171
      %p173 = scmp.eq.s32.totalorder %s36, 0
      %p174 = por %p172, %p173
      %s175 = ssub.s32 %s38, %s45
      %p176 = scmp.eq.s32.totalorder %s175, 0
      %s178 = sadd.s32 %s177, 1
      %s179 = scalar_select %p176, %s177, %s178
      %p182 = pneg %p176
      %p183 = scmp.eq.s32.totalorder %s30, 3
      %p184 = por %p182, %p183
      %p185 = scmp.ne.s32.totalorder %s177, %s180
      %p186 = scmp.eq.s32.totalorder %s30, 0
      %p187 = por %p185, %p186
      %p188 = scmp.ne.s32.totalorder %s177, %s180
      %p189 = scmp.eq.s32.totalorder %s35, 3
      %p190 = por %p188, %p189
      %p191 = scmp.ne.s32.totalorder %s180, %s181
      %p192 = scmp.eq.s32.totalorder %s35, 0
      %p193 = por %p191, %p192
      %p194 = scmp.ne.s32.totalorder %s180, %s181
      %p195 = scmp.eq.s32.totalorder %s36, 3
      %p196 = por %p194, %p195
      %p198 = scmp.ne.s32.totalorder %s181, %s197
      %p199 = scmp.eq.s32.totalorder %s36, 0
      %p200 = por %p198, %p199
      %s201 = ssub.s32 %s38, %s45
      %p202 = scmp.eq.s32.totalorder %s201, 0
      %s204 = sadd.s32 %s203, 1
      %s205 = scalar_select %p202, %s203, %s204
      %p208 = pneg %p202
      %p209 = scmp.eq.s32.totalorder %s30, 3
      %p210 = por %p208, %p209
      %p211 = scmp.ne.s32.totalorder %s203, %s206
      %p212 = scmp.eq.s32.totalorder %s30, 0
      %p213 = por %p211, %p212
      %p214 = scmp.ne.s32.totalorder %s203, %s206
      %p215 = scmp.eq.s32.totalorder %s35, 3
      %p216 = por %p214, %p215
      %p217 = scmp.ne.s32.totalorder %s206, %s207
      %p218 = scmp.eq.s32.totalorder %s35, 0
      %p219 = por %p217, %p218
      %p220 = scmp.ne.s32.totalorder %s206, %s207
      %p221 = scmp.eq.s32.totalorder %s36, 3
      %p222 = por %p220, %p221
      %p224 = scmp.ne.s32.totalorder %s207, %s223
      %p225 = scmp.eq.s32.totalorder %s36, 0
      %p226 = por %p224, %p225
      %s227 = ssub.s32 %s38, %s45
      %p228 = scmp.eq.s32.totalorder %s227, 0
      %s230 = sadd.s32 %s229, 1
      %s231 = scalar_select %p228, %s229, %s230
      %p234 = pneg %p228
      %p235 = scmp.eq.s32.totalorder %s30, 3
      %p236 = por %p234, %p235
      %p237 = scmp.ne.s32.totalorder %s229, %s232
      %p238 = scmp.eq.s32.totalorder %s30, 0
      %p239 = por %p237, %p238
      %p240 = scmp.ne.s32.totalorder %s229, %s232
      %p241 = scmp.eq.s32.totalorder %s35, 3
      %p242 = por %p240, %p241
      %p243 = scmp.ne.s32.totalorder %s232, %s233
      %p244 = scmp.eq.s32.totalorder %s35, 0
      %p245 = por %p243, %p244
      %p246 = scmp.ne.s32.totalorder %s232, %s233
      %p247 = scmp.eq.s32.totalorder %s36, 3
      %p248 = por %p246, %p247
      %p250 = scmp.ne.s32.totalorder %s233, %s249
      %p251 = scmp.eq.s32.totalorder %s36, 0
      %p252 = por %p250, %p251
      %s253 = ssub.s32 %s38, %s45
      %p254 = scmp.eq.s32.totalorder %s253, 0
      %s256 = sadd.s32 %s255, 1
      %s257 = scalar_select %p254, %s255, %s256
      %p260 = pneg %p254
      %p261 = scmp.eq.s32.totalorder %s30, 3
      %p262 = por %p260, %p261
      %p263 = scmp.ne.s32.totalorder %s255, %s258
      %p264 = scmp.eq.s32.totalorder %s30, 0
      %p265 = por %p263, %p264
      %p266 = scmp.ne.s32.totalorder %s255, %s258
      %p267 = scmp.eq.s32.totalorder %s35, 3
      %p268 = por %p266, %p267
      %p269 = scmp.ne.s32.totalorder %s258, %s259
      %p270 = scmp.eq.s32.totalorder %s35, 0
      %p271 = por %p269, %p270
      %p272 = scmp.ne.s32.totalorder %s258, %s259
      %p273 = scmp.eq.s32.totalorder %s36, 3
      %p274 = por %p272, %p273
      %p276 = scmp.ne.s32.totalorder %s259, %s275
      %p277 = scmp.eq.s32.totalorder %s36, 0
      %p278 = por %p276, %p277
      %s279 = ssub.s32 %s38, %s45
      %p280 = scmp.eq.s32.totalorder %s279, 0
      %s282 = sadd.s32 %s281, 1
      %s283 = scalar_select %p280, %s281, %s282
      %p286 = pneg %p280
      %p287 = scmp.eq.s32.totalorder %s30, 3
      %p288 = por %p286, %p287
      %p289 = scmp.ne.s32.totalorder %s281, %s284
      %p290 = scmp.eq.s32.totalorder %s30, 0
      %p291 = por %p289, %p290
      %p292 = scmp.ne.s32.totalorder %s281, %s284
      %p293 = scmp.eq.s32.totalorder %s35, 3
      %p294 = por %p292, %p293
      %p295 = scmp.ne.s32.totalorder %s284, %s285
      %p296 = scmp.eq.s32.totalorder %s35, 0
      %p297 = por %p295, %p296
      %p298 = scmp.ne.s32.totalorder %s284, %s285
      %p299 = scmp.eq.s32.totalorder %s36, 3
      %p300 = por %p298, %p299
      %p302 = scmp.ne.s32.totalorder %s285, %s301
      %p303 = scmp.eq.s32.totalorder %s36, 0
      %p304 = por %p302, %p303
      %s305 = ssub.s32 %s38, %s45
      %p306 = scmp.eq.s32.totalorder %s305, 0
      %s308 = sadd.s32 %s307, 1
      %s309 = scalar_select %p306, %s307, %s308
      %p312 = pneg %p306
      %p313 = scmp.eq.s32.totalorder %s30, 3
      %p314 = por %p312, %p313
      %p315 = scmp.ne.s32.totalorder %s307, %s310
      %p316 = scmp.eq.s32.totalorder %s30, 0
      %p317 = por %p315, %p316
      %p318 = scmp.ne.s32.totalorder %s307, %s310
      %p319 = scmp.eq.s32.totalorder %s35, 3
      %p320 = por %p318, %p319
      %p321 = scmp.ne.s32.totalorder %s310, %s311
      %p322 = scmp.eq.s32.totalorder %s35, 0
      %p323 = por %p321, %p322
      %p324 = scmp.ne.s32.totalorder %s310, %s311
      %p325 = scmp.eq.s32.totalorder %s36, 3
      %p326 = por %p324, %p325
      %p328 = scmp.ne.s32.totalorder %s311, %s327
      %p329 = scmp.eq.s32.totalorder %s36, 0
      %p330 = por %p328, %p329
      %s331 = ssub.s32 %s38, %s45
      %p332 = scmp.eq.s32.totalorder %s331, 0
      %s334 = sadd.s32 %s333, 1
      %s335 = scalar_select %p332, %s333, %s334
      %p338 = pneg %p332
      %p339 = scmp.eq.s32.totalorder %s30, 3
      %p340 = por %p338, %p339
      %p341 = scmp.ne.s32.totalorder %s333, %s336
      %p342 = scmp.eq.s32.totalorder %s30, 0
      %p343 = por %p341, %p342
      %p344 = scmp.ne.s32.totalorder %s333, %s336
      %p345 = scmp.eq.s32.totalorder %s35, 3
      %p346 = por %p344, %p345
      %p347 = scmp.ne.s32.totalorder %s336, %s337
      %p348 = scmp.eq.s32.totalorder %s35, 0
      %p349 = por %p347, %p348
      %p350 = scmp.ne.s32.totalorder %s336, %s337
      %p351 = scmp.eq.s32.totalorder %s36, 3
      %p352 = por %p350, %p351
      %p354 = scmp.ne.s32.totalorder %s337, %s353
      %p355 = scmp.eq.s32.totalorder %s36, 0
      %p356 = por %p354, %p355
      %s357 = ssub.s32 %s38, %s45
      %p358 = scmp.eq.s32.totalorder %s357, 0
      %s360 = sadd.s32 %s359, 1
      %s361 = scalar_select %p358, %s359, %s360
      %p364 = pneg %p358
      %p365 = scmp.eq.s32.totalorder %s30, 3
      %p366 = por %p364, %p365
      %p367 = scmp.ne.s32.totalorder %s359, %s362
      %p368 = scmp.eq.s32.totalorder %s30, 0
      %p369 = por %p367, %p368
      %p370 = scmp.ne.s32.totalorder %s359, %s362
      %p371 = scmp.eq.s32.totalorder %s35, 3
      %p372 = por %p370, %p371
      %p373 = scmp.ne.s32.totalorder %s362, %s363
      %p374 = scmp.eq.s32.totalorder %s35, 0
      %p375 = por %p373, %p374
      %p376 = scmp.ne.s32.totalorder %s362, %s363
      %p377 = scmp.eq.s32.totalorder %s36, 3
      %p378 = por %p376, %p377
      %p380 = scmp.ne.s32.totalorder %s363, %s379
      %p381 = scmp.eq.s32.totalorder %s36, 0
      %p382 = por %p380, %p381
      %s383 = ssub.s32 %s38, %s45
      %p384 = scmp.eq.s32.totalorder %s383, 0
      %s386 = sadd.s32 %s385, 1
      %s387 = scalar_select %p384, %s385, %s386
      %p390 = pneg %p384
      %p391 = scmp.eq.s32.totalorder %s30, 3
      %p392 = por %p390, %p391
      %p393 = scmp.ne.s32.totalorder %s385, %s388
      %p394 = scmp.eq.s32.totalorder %s30, 0
      %p395 = por %p393, %p394
      %p396 = scmp.ne.s32.totalorder %s385, %s388
      %p397 = scmp.eq.s32.totalorder %s35, 3
      %p398 = por %p396, %p397
      %p399 = scmp.ne.s32.totalorder %s388, %s389
      %p400 = scmp.eq.s32.totalorder %s35, 0
      %p401 = por %p399, %p400
      %p402 = scmp.ne.s32.totalorder %s388, %s389
      %p403 = scmp.eq.s32.totalorder %s36, 3
      %p404 = por %p402, %p403
      %p406 = scmp.ne.s32.totalorder %s389, %s405
      %p407 = scmp.eq.s32.totalorder %s36, 0
      %p408 = por %p406, %p407
      %s409 = ssub.s32 %s38, %s45
      %p410 = scmp.eq.s32.totalorder %s409, 0
      %s412 = sadd.s32 %s411, 1
      %s413 = scalar_select %p410, %s411, %s412
      %p416 = pneg %p410
      %p417 = scmp.eq.s32.totalorder %s30, 3
      %p418 = por %p416, %p417
      %p419 = scmp.ne.s32.totalorder %s411, %s414
      %p420 = scmp.eq.s32.totalorder %s30, 0
      %p421 = por %p419, %p420
      %p422 = scmp.ne.s32.totalorder %s411, %s414
      %p423 = scmp.eq.s32.totalorder %s35, 3
      %p424 = por %p422, %p423
      %p425 = scmp.ne.s32.totalorder %s414, %s415
      %p426 = scmp.eq.s32.totalorder %s35, 0
      %p427 = por %p425, %p426
      %p428 = scmp.ne.s32.totalorder %s414, %s415
      %p429 = scmp.eq.s32.totalorder %s36, 3
      %p430 = por %p428, %p429
      %p432 = scmp.ne.s32.totalorder %s415, %s431
      %p433 = scmp.eq.s32.totalorder %s36, 0
      %p434 = por %p432, %p433
      %s435 = ssub.s32 %s38, %s45
      %p436 = scmp.eq.s32.totalorder %s435, 0
      %s438 = sadd.s32 %s437, 1
      %s439 = scalar_select %p436, %s437, %s438
      %p442 = pneg %p436
      %p443 = scmp.eq.s32.totalorder %s30, 3
      %p444 = por %p442, %p443
      %p445 = scmp.ne.s32.totalorder %s437, %s440
      %p446 = scmp.eq.s32.totalorder %s30, 0
      %p447 = por %p445, %p446
      %p448 = scmp.ne.s32.totalorder %s437, %s440
      %p449 = scmp.eq.s32.totalorder %s35, 3
      %p450 = por %p448, %p449
      %p451 = scmp.ne.s32.totalorder %s440, %s441
      %p452 = scmp.eq.s32.totalorder %s35, 0
      %p453 = por %p451, %p452
      %p454 = scmp.ne.s32.totalorder %s440, %s441
      %p455 = scmp.eq.s32.totalorder %s36, 3
      %p456 = por %p454, %p455
      %p458 = scmp.ne.s32.totalorder %s441, %s457
      %p459 = scmp.eq.s32.totalorder %s36, 0
      %p460 = por %p458, %p459
      %s461 = ssub.s32 %s38, %s45
      %p462 = scmp.eq.s32.totalorder %s461, 0
      %s464 = sadd.s32 %s463, 1
      %s465 = scalar_select %p462, %s463, %s464
      %p468 = pneg %p462
      %p469 = scmp.eq.s32.totalorder %s30, 3
      %p470 = por %p468, %p469
      %p471 = scmp.ne.s32.totalorder %s463, %s466
      %p472 = scmp.eq.s32.totalorder %s30, 0
      %p473 = por %p471, %p472
      %p474 = scmp.ne.s32.totalorder %s463, %s466
      %p475 = scmp.eq.s32.totalorder %s35, 3
      %p476 = por %p474, %p475
      %p477 = scmp.ne.s32.totalorder %s466, %s467
      %p478 = scmp.eq.s32.totalorder %s35, 0
      %p479 = por %p477, %p478
      %p480 = scmp.ne.s32.totalorder %s466, %s467
      %p481 = scmp.eq.s32.totalorder %s36, 3
      %p482 = por %p480, %p481
      %p484 = scmp.ne.s32.totalorder %s467, %s483
      %p485 = scmp.eq.s32.totalorder %s36, 0
      %p486 = por %p484, %p485
      %s487 = ssub.s32 %s37, %s49
      %p488 = scmp.eq.s32.totalorder %s487, 0
      %s490 = sadd.s32 %s489, 1
      %s491 = scalar_select %p488, %s489, %s490
      %p494 = pneg %p488
      %p495 = scmp.eq.s32.totalorder %s30, 3
      %p496 = por %p494, %p495
      %p497 = scmp.ne.s32.totalorder %s489, %s492
      %p498 = scmp.eq.s32.totalorder %s30, 0
      %p499 = por %p497, %p498
      %p500 = scmp.ne.s32.totalorder %s489, %s492
      %p501 = scmp.eq.s32.totalorder %s35, 3
      %p502 = por %p500, %p501
      %p503 = scmp.ne.s32.totalorder %s492, %s493
      %p504 = scmp.eq.s32.totalorder %s35, 0
      %p505 = por %p503, %p504
      %p506 = scmp.ne.s32.totalorder %s492, %s493
      %p507 = scmp.eq.s32.totalorder %s36, 3
      %p508 = por %p506, %p507
      %p510 = scmp.ne.s32.totalorder %s493, %s509
      %p511 = scmp.eq.s32.totalorder %s36, 0
      %p512 = por %p510, %p511
      %p513 = scmp.le.s32.totalorder 1, %s30
      %p514 = scmp.lt.s32.totalorder %s30, 5
      %p515 = pnand %p513, %p514
      %p516 = pneg %p515
      // Predicated region
      $region9: #{tpu_custom_call.1} parent=5 // pred_check
        _
      $region10: #{tpu_custom_call.1} parent=5 // pred_check_branch
        %518 = sbr.rel (%p515) target = $region12
      $region11: #{tpu_custom_call.1} parent=5 // pred_region
        %s519 = ssub.s32 %s30, 1
        // Predicated region
        $region13: #{tpu_custom_call.1} parent=11 // pred_check
          %p520 = pneg %p115
        $region14: #{tpu_custom_call.1} parent=11 // pred_check_branch
          %522 = sbr.rel (%p520) target = $region16
        $region15: #{tpu_custom_call.1} parent=11 // pred_region
          %s524 = ssub.s32 128, 128
          %525 = vsyncadd [#allocation7], %s524
          %s526 = sshll.u32 [#allocation6], 4
          %s527 = int_to_ptr.vmem [resolvable:$true] %s526
          %532 = dma.hbm_to_vmem [thread:$0]  %s2, 128, %s527, [#allocation7], 64, 64, 4
        $region16: #{tpu_custom_call.1} parent=11 // pred_fallthru
          _
      $region12: #{tpu_custom_call.1} parent=5 // pred_fallthru
        _
      %p533 = scmp.lt.s32.totalorder %s30, 4
      // Predicated region
      $region17: #{tpu_custom_call.1} parent=5 // pred_check
        %p534 = pneg %p533
      $region18: #{tpu_custom_call.1} parent=5 // pred_check_branch
        %536 = sbr.rel (%p534) target = $region20
      $region19: #{tpu_custom_call.1} parent=5 // pred_region
        // Predicated region
        $region21: #{tpu_custom_call.1} parent=19 // pred_check
          %p537 = pneg %p62
        $region22: #{tpu_custom_call.1} parent=19 // pred_check_branch
          %539 = sbr.rel (%p537) target = $region24
        $region23: #{tpu_custom_call.1} parent=19 // pred_region
          %s540 = sand.u32 %s30, 1
          %s541 = scalar_lea.sflag [#allocation4], %s540
          %s542 = sand.u32 %s52, 1
          %s543 = smul.addr %s542, 16
          %s544 = scalar_lea.vmem [#allocation3], %s543
          %s546 = ssub.s32 256, 256
          %547 = vsyncadd %s541, %s546
          %s548 = smul.addr %s37, 2
          %s549 = smul.addr %s548, 128
          %s550 = scalar_lea.hbm %s0, %s549
          %s551 = sshll.u32 %s544, 4
          %s552 = int_to_ptr.vmem [resolvable:$true] %s551
          %557 = dma.hbm_to_vmem [thread:$0]  %s550, 256, %s552, %s541, 128, 128, 8
        $region24: #{tpu_custom_call.1} parent=19 // pred_fallthru
          _
        // Predicated region
        $region25: #{tpu_custom_call.1} parent=19 // pred_check
          %p558 = pneg %p88
        $region26: #{tpu_custom_call.1} parent=19 // pred_check_branch
          %560 = sbr.rel (%p558) target = $region28
        $region27: #{tpu_custom_call.1} parent=19 // pred_region
          %p561 = scmp.lt.s32.totalorder %s37, 1
          %s562 = scalar_select %p561, %s37, 1
          %s563 = scalar_lea.vmem %s1, %s562
        $region28: #{tpu_custom_call.1} parent=19 // pred_fallthru
          _
        // Predicated region
        $region29: #{tpu_custom_call.1} parent=19 // pred_check
          %p564 = pneg %p135
        $region30: #{tpu_custom_call.1} parent=19 // pred_check_branch
          %566 = sbr.rel (%p564) target = $region32
        $region31: #{tpu_custom_call.1} parent=19 // pred_region
          %s567 = sand.u32 %s30, 1
          %s568 = scalar_lea.sflag [#allocation4], %s567
          %s569 = sand.u32 %s125, 1
          %s570 = smul.addr %s569, 64
          %s571 = scalar_lea.vmem [#allocation8], %s570
          %s573 = ssub.s32 1024, 1024
          %574 = vsyncadd %s568, %s573
          %s575 = smul.addr %s38, 16
          %s576 = smul.addr %s575, 64
          %s577 = scalar_lea.hbm %s3, %s576
          %s578 = sshll.u32 %s571, 4
          %s579 = int_to_ptr.vmem [resolvable:$true] %s578
          %584 = dma.hbm_to_vmem [thread:$0]  %s577, 1024, %s579, %s568, 64, 64, 4
        $region32: #{tpu_custom_call.1} parent=19 // pred_fallthru
          _
        // Predicated region
        $region33: #{tpu_custom_call.1} parent=19 // pred_check
          %p585 = pneg %p161
        $region34: #{tpu_custom_call.1} parent=19 // pred_check_branch
          %587 = sbr.rel (%p585) target = $region36
        $region35: #{tpu_custom_call.1} parent=19 // pred_region
          %s588 = sand.u32 %s30, 1
          %s589 = scalar_lea.sflag [#allocation4], %s588
          %s590 = sand.u32 %s151, 1
          %s591 = smul.addr %s590, 64
          %s592 = scalar_lea.vmem [#allocation9], %s591
          %s594 = ssub.s32 1024, 1024
          %595 = vsyncadd %s589, %s594
          %s596 = smul.addr %s38, 16
          %s597 = smul.addr %s596, 64
          %s598 = scalar_lea.hbm %s4, %s597
          %s599 = sshll.u32 %s592, 4
          %s600 = int_to_ptr.vmem [resolvable:$true] %s599
          %605 = dma.hbm_to_vmem [thread:$0]  %s598, 1024, %s600, %s589, 64, 64, 4
        $region36: #{tpu_custom_call.1} parent=19 // pred_fallthru
          _
        // Predicated region
        $region37: #{tpu_custom_call.1} parent=19 // pred_check
          %p606 = pneg %p187
        $region38: #{tpu_custom_call.1} parent=19 // pred_check_branch
          %608 = sbr.rel (%p606) target = $region40
        $region39: #{tpu_custom_call.1} parent=19 // pred_region
          %s609 = sand.u32 %s30, 1
          %s610 = scalar_lea.sflag [#allocation4], %s609
          %s611 = sand.u32 %s177, 1
          %s612 = smul.addr %s611, 64
          %s613 = scalar_lea.vmem [#allocation10], %s612
          %s615 = ssub.s32 1024, 1024
          %616 = vsyncadd %s610, %s615
          %s617 = smul.addr %s38, 16
          %s618 = smul.addr %s617, 64
          %s619 = scalar_lea.hbm %s5, %s618
          %s620 = sshll.u32 %s613, 4
          %s621 = int_to_ptr.vmem [resolvable:$true] %s620
          %626 = dma.hbm_to_vmem [thread:$0]  %s619, 1024, %s621, %s610, 64, 64, 4
        $region40: #{tpu_custom_call.1} parent=19 // pred_fallthru
          _
        // Predicated region
        $region41: #{tpu_custom_call.1} parent=19 // pred_check
          %p627 = pneg %p213
        $region42: #{tpu_custom_call.1} parent=19 // pred_check_branch
          %629 = sbr.rel (%p627) target = $region44
        $region43: #{tpu_custom_call.1} parent=19 // pred_region
          %p630 = scmp.lt.s32.totalorder %s38, 1
          %s631 = scalar_select %p630, %s38, 1
          %s632 = scalar_lea.vmem %s6, %s631
        $region44: #{tpu_custom_call.1} parent=19 // pred_fallthru
          _
        // Predicated region
        $region45: #{tpu_custom_call.1} parent=19 // pred_check
          %p633 = pneg %p239
        $region46: #{tpu_custom_call.1} parent=19 // pred_check_branch
          %635 = sbr.rel (%p633) target = $region48
        $region47: #{tpu_custom_call.1} parent=19 // pred_region
          %p636 = scmp.lt.s32.totalorder %s38, 1
          %s637 = scalar_select %p636, %s38, 1
          %s638 = scalar_lea.vmem %s7, %s637
        $region48: #{tpu_custom_call.1} parent=19 // pred_fallthru
          _
        // Predicated region
        $region49: #{tpu_custom_call.1} parent=19 // pred_check
          %p639 = pneg %p265
        $region50: #{tpu_custom_call.1} parent=19 // pred_check_branch
          %641 = sbr.rel (%p639) target = $region52
        $region51: #{tpu_custom_call.1} parent=19 // pred_region
          %s642 = sand.u32 %s30, 1
          %s643 = scalar_lea.sflag [#allocation4], %s642
          %s644 = sand.u32 %s255, 1
          %s645 = smul.addr %s644, 64
          %s646 = scalar_lea.vmem [#allocation11], %s645
          %s648 = ssub.s32 1024, 1024
          %649 = vsyncadd %s643, %s648
          %s650 = smul.addr %s38, 16
          %s651 = smul.addr %s650, 64
          %s652 = scalar_lea.hbm %s8, %s651
          %s653 = sshll.u32 %s646, 4
          %s654 = int_to_ptr.vmem [resolvable:$true] %s653
          %659 = dma.hbm_to_vmem [thread:$0]  %s652, 1024, %s654, %s643, 64, 64, 4
        $region52: #{tpu_custom_call.1} parent=19 // pred_fallthru
          _
        // Predicated region
        $region53: #{tpu_custom_call.1} parent=19 // pred_check
          %p660 = pneg %p291
        $region54: #{tpu_custom_call.1} parent=19 // pred_check_branch
          %662 = sbr.rel (%p660) target = $region56
        $region55: #{tpu_custom_call.1} parent=19 // pred_region
          %p663 = scmp.lt.s32.totalorder %s38, 1
          %s664 = scalar_select %p663, %s38, 1
          %s665 = scalar_lea.vmem %s9, %s664
        $region56: #{tpu_custom_call.1} parent=19 // pred_fallthru
          _
        // Predicated region
        $region57: #{tpu_custom_call.1} parent=19 // pred_check
          %p666 = pneg %p317
        $region58: #{tpu_custom_call.1} parent=19 // pred_check_branch
          %668 = sbr.rel (%p666) target = $region60
        $region59: #{tpu_custom_call.1} parent=19 // pred_region
          %p669 = scmp.lt.s32.totalorder %s38, 1
          %s670 = scalar_select %p669, %s38, 1
          %s671 = scalar_lea.vmem %s10, %s670
        $region60: #{tpu_custom_call.1} parent=19 // pred_fallthru
          _
        // Predicated region
        $region61: #{tpu_custom_call.1} parent=19 // pred_check
          %p672 = pneg %p343
        $region62: #{tpu_custom_call.1} parent=19 // pred_check_branch
          %674 = sbr.rel (%p672) target = $region64
        $region63: #{tpu_custom_call.1} parent=19 // pred_region
          %s675 = sand.u32 %s30, 1
          %s676 = scalar_lea.sflag [#allocation4], %s675
          %s677 = sand.u32 %s333, 1
          %s678 = smul.addr %s677, 128
          %s679 = scalar_lea.vmem [#allocation12], %s678
          %s681 = ssub.s32 2048, 2048
          %682 = vsyncadd %s676, %s681
          %s683 = smul.addr %s38, 32
          %s684 = smul.addr %s683, 64
          %s685 = scalar_lea.hbm %s11, %s684
          %s686 = sshll.u32 %s679, 4
          %s687 = int_to_ptr.vmem [resolvable:$true] %s686
          %692 = dma.hbm_to_vmem [thread:$0]  %s685, 2048, %s687, %s676, 128, 128, 8
        $region64: #{tpu_custom_call.1} parent=19 // pred_fallthru
          _
        // Predicated region
        $region65: #{tpu_custom_call.1} parent=19 // pred_check
          %p693 = pneg %p369
        $region66: #{tpu_custom_call.1} parent=19 // pred_check_branch
          %695 = sbr.rel (%p693) target = $region68
        $region67: #{tpu_custom_call.1} parent=19 // pred_region
          %p696 = scmp.lt.s32.totalorder %s38, 1
          %s697 = scalar_select %p696, %s38, 1
          %s698 = smul.addr %s697, 2
          %s699 = scalar_lea.vmem %s12, %s698
        $region68: #{tpu_custom_call.1} parent=19 // pred_fallthru
          _
        // Predicated region
        $region69: #{tpu_custom_call.1} parent=19 // pred_check
          %p700 = pneg %p395
        $region70: #{tpu_custom_call.1} parent=19 // pred_check_branch
          %702 = sbr.rel (%p700) target = $region72
        $region71: #{tpu_custom_call.1} parent=19 // pred_region
          %s703 = sand.u32 %s30, 1
          %s704 = scalar_lea.sflag [#allocation4], %s703
          %s705 = sand.u32 %s385, 1
          %s706 = smul.addr %s705, 128
          %s707 = scalar_lea.vmem [#allocation13], %s706
          %s709 = ssub.s32 2048, 2048
          %710 = vsyncadd %s704, %s709
          %s711 = smul.addr %s38, 32
          %s712 = smul.addr %s711, 64
          %s713 = scalar_lea.hbm %s13, %s712
          %s714 = sshll.u32 %s707, 4
          %s715 = int_to_ptr.vmem [resolvable:$true] %s714
          %720 = dma.hbm_to_vmem [thread:$0]  %s713, 2048, %s715, %s704, 64, 64, 4
        $region72: #{tpu_custom_call.1} parent=19 // pred_fallthru
          _
        // Predicated region
        $region73: #{tpu_custom_call.1} parent=19 // pred_check
          %p721 = pneg %p421
        $region74: #{tpu_custom_call.1} parent=19 // pred_check_branch
          %723 = sbr.rel (%p721) target = $region76
        $region75: #{tpu_custom_call.1} parent=19 // pred_region
          %p724 = scmp.lt.s32.totalorder %s38, 1
          %s725 = scalar_select %p724, %s38, 1
          %s726 = scalar_lea.vmem %s14, %s725
        $region76: #{tpu_custom_call.1} parent=19 // pred_fallthru
          _
        // Predicated region
        $region77: #{tpu_custom_call.1} parent=19 // pred_check
          %p727 = pneg %p447
        $region78: #{tpu_custom_call.1} parent=19 // pred_check_branch
          %729 = sbr.rel (%p727) target = $region80
        $region79: #{tpu_custom_call.1} parent=19 // pred_region
          %p730 = scmp.lt.s32.totalorder %s38, 1
          %s731 = scalar_select %p730, %s38, 1
          %s732 = scalar_lea.vmem %s15, %s731
        $region80: #{tpu_custom_call.1} parent=19 // pred_fallthru
          _
        // Predicated region
        $region81: #{tpu_custom_call.1} parent=19 // pred_check
          %p733 = pneg %p473
        $region82: #{tpu_custom_call.1} parent=19 // pred_check_branch
          %735 = sbr.rel (%p733) target = $region84
        $region83: #{tpu_custom_call.1} parent=19 // pred_region
          %p736 = scmp.lt.s32.totalorder %s38, 1
          %s737 = scalar_select %p736, %s38, 1
          %s738 = scalar_lea.vmem %s16, %s737
        $region84: #{tpu_custom_call.1} parent=19 // pred_fallthru
          _
      $region20: #{tpu_custom_call.1} parent=5 // pred_fallthru
        _
      %p739 = scmp.le.s32.totalorder 1, %s30
      %p740 = scmp.lt.s32.totalorder %s30, 5
      %p741 = pnand %p739, %p740
      %p742 = pneg %p741
      // Predicated region
      $region85: #{tpu_custom_call.1} parent=5 // pred_check
        _
      $region86: #{tpu_custom_call.1} parent=5 // pred_check_branch
        %744 = sbr.rel (%p741) target = $region88
      $region87: #{tpu_custom_call.1} parent=5 // pred_region
        %s745 = ssub.s32 %s30, 1
        %s746 = sand.u32 %s35, 1
        %s747 = scalar_lea.sflag [#allocation4], %s746
        %s748 = sand.u32 %s55, 1
        %s749 = smul.addr %s748, 16
        %s750 = scalar_lea.vmem [#allocation3], %s749
        // Predicated region
        $region89: #{tpu_custom_call.1} parent=87 // pred_check
          %p751 = pneg %p68
        $region90: #{tpu_custom_call.1} parent=87 // pred_check_branch
          %753 = sbr.rel (%p751) target = $region92
        $region91: #{tpu_custom_call.1} parent=87 // pred_region
          %754 = dma.done %s747, 256
        $region92: #{tpu_custom_call.1} parent=87 // pred_fallthru
          _
        // Predicated region
        $region93: #{tpu_custom_call.1} parent=87 // pred_check
          %p755 = pneg %p115
        $region94: #{tpu_custom_call.1} parent=87 // pred_check_branch
          %757 = sbr.rel (%p755) target = $region96
        $region95: #{tpu_custom_call.1} parent=87 // pred_region
          %758 = dma.done [#allocation7], 128
        $region96: #{tpu_custom_call.1} parent=87 // pred_fallthru
          _
        %s759 = sand.u32 %s35, 1
        %s760 = scalar_lea.sflag [#allocation4], %s759
        %s761 = sand.u32 %s128, 1
        %s762 = smul.addr %s761, 64
        %s763 = scalar_lea.vmem [#allocation8], %s762
        // Predicated region
        $region97: #{tpu_custom_call.1} parent=87 // pred_check
          %p764 = pneg %p141
        $region98: #{tpu_custom_call.1} parent=87 // pred_check_branch
          %766 = sbr.rel (%p764) target = $region100
        $region99: #{tpu_custom_call.1} parent=87 // pred_region
          %767 = dma.done %s760, 1024
        $region100: #{tpu_custom_call.1} parent=87 // pred_fallthru
          _
        %s768 = sand.u32 %s35, 1
        %s769 = scalar_lea.sflag [#allocation4], %s768
        %s770 = sand.u32 %s154, 1
        %s771 = smul.addr %s770, 64
        %s772 = scalar_lea.vmem [#allocation9], %s771
        // Predicated region
        $region101: #{tpu_custom_call.1} parent=87 // pred_check
          %p773 = pneg %p167
        $region102: #{tpu_custom_call.1} parent=87 // pred_check_branch
          %775 = sbr.rel (%p773) target = $region104
        $region103: #{tpu_custom_call.1} parent=87 // pred_region
          %776 = dma.done %s769, 1024
        $region104: #{tpu_custom_call.1} parent=87 // pred_fallthru
          _
        %s777 = sand.u32 %s35, 1
        %s778 = scalar_lea.sflag [#allocation4], %s777
        %s779 = sand.u32 %s180, 1
        %s780 = smul.addr %s779, 64
        %s781 = scalar_lea.vmem [#allocation10], %s780
        // Predicated region
        $region105: #{tpu_custom_call.1} parent=87 // pred_check
          %p782 = pneg %p193
        $region106: #{tpu_custom_call.1} parent=87 // pred_check_branch
          %784 = sbr.rel (%p782) target = $region108
        $region107: #{tpu_custom_call.1} parent=87 // pred_region
          %785 = dma.done %s778, 1024
        $region108: #{tpu_custom_call.1} parent=87 // pred_fallthru
          _
        %s786 = sand.u32 %s35, 1
        %s787 = scalar_lea.sflag [#allocation4], %s786
        %s788 = sand.u32 %s258, 1
        %s789 = smul.addr %s788, 64
        %s790 = scalar_lea.vmem [#allocation11], %s789
        // Predicated region
        $region109: #{tpu_custom_call.1} parent=87 // pred_check
          %p791 = pneg %p271
        $region110: #{tpu_custom_call.1} parent=87 // pred_check_branch
          %793 = sbr.rel (%p791) target = $region112
        $region111: #{tpu_custom_call.1} parent=87 // pred_region
          %794 = dma.done %s787, 1024
        $region112: #{tpu_custom_call.1} parent=87 // pred_fallthru
          _
        %s795 = sand.u32 %s35, 1
        %s796 = scalar_lea.sflag [#allocation4], %s795
        %s797 = sand.u32 %s336, 1
        %s798 = smul.addr %s797, 128
        %s799 = scalar_lea.vmem [#allocation12], %s798
        // Predicated region
        $region113: #{tpu_custom_call.1} parent=87 // pred_check
          %p800 = pneg %p349
        $region114: #{tpu_custom_call.1} parent=87 // pred_check_branch
          %802 = sbr.rel (%p800) target = $region116
        $region115: #{tpu_custom_call.1} parent=87 // pred_region
          %803 = dma.done %s796, 2048
        $region116: #{tpu_custom_call.1} parent=87 // pred_fallthru
          _
        %s804 = sand.u32 %s35, 1
        %s805 = scalar_lea.sflag [#allocation4], %s804
        %s806 = sand.u32 %s388, 1
        %s807 = smul.addr %s806, 128
        %s808 = scalar_lea.vmem [#allocation13], %s807
        // Predicated region
        $region117: #{tpu_custom_call.1} parent=87 // pred_check
          %p809 = pneg %p401
        $region118: #{tpu_custom_call.1} parent=87 // pred_check_branch
          %811 = sbr.rel (%p809) target = $region120
        $region119: #{tpu_custom_call.1} parent=87 // pred_region
          %812 = dma.done %s805, 2048
        $region120: #{tpu_custom_call.1} parent=87 // pred_fallthru
          _
        %s813 = sand.u32 %s35, 1
        %s814 = scalar_lea.sflag [#allocation4], %s813
        %s815 = sand.u32 %s55, 1
        %s816 = smul.addr %s815, 16
        %s817 = scalar_lea.vmem [#allocation3], %s816
        %p818 = pneg %p68
        %p819 = pneg %p65
        %p820 = scmp.lt.s32.totalorder %s39, 1
        %s821 = scalar_select %p820, %s39, 1
        %s822 = scalar_lea.vmem %s1, %s821
        %p823 = pneg %p94
        %p824 = pneg %p91
        %p825 = pneg %p115
        %p826 = pneg %p112
        %s827 = sand.u32 %s35, 1
        %s828 = scalar_lea.sflag [#allocation4], %s827
        %s829 = sand.u32 %s128, 1
        %s830 = smul.addr %s829, 64
        %s831 = scalar_lea.vmem [#allocation8], %s830
        %p832 = pneg %p141
        %p833 = pneg %p138
        %s834 = sand.u32 %s35, 1
        %s835 = scalar_lea.sflag [#allocation4], %s834
        %s836 = sand.u32 %s154, 1
        %s837 = smul.addr %s836, 64
        %s838 = scalar_lea.vmem [#allocation9], %s837
        %p839 = pneg %p167
        %p840 = pneg %p164
        %s841 = sand.u32 %s35, 1
        %s842 = scalar_lea.sflag [#allocation4], %s841
        %s843 = sand.u32 %s180, 1
        %s844 = smul.addr %s843, 64
        %s845 = scalar_lea.vmem [#allocation10], %s844
        %p846 = pneg %p193
        %p847 = pneg %p190
        %p848 = scmp.lt.s32.totalorder %s40, 1
        %s849 = scalar_select %p848, %s40, 1
        %s850 = scalar_lea.vmem %s6, %s849
        %p851 = pneg %p219
        %p852 = pneg %p216
        %p853 = scmp.lt.s32.totalorder %s40, 1
        %s854 = scalar_select %p853, %s40, 1
        %s855 = scalar_lea.vmem %s7, %s854
        %p856 = pneg %p245
        %p857 = pneg %p242
        %s858 = sand.u32 %s35, 1
        %s859 = scalar_lea.sflag [#allocation4], %s858
        %s860 = sand.u32 %s258, 1
        %s861 = smul.addr %s860, 64
        %s862 = scalar_lea.vmem [#allocation11], %s861
        %p863 = pneg %p271
        %p864 = pneg %p268
        %p865 = scmp.lt.s32.totalorder %s40, 1
        %s866 = scalar_select %p865, %s40, 1
        %s867 = scalar_lea.vmem %s9, %s866
        %p868 = pneg %p297
        %p869 = pneg %p294
        %p870 = scmp.lt.s32.totalorder %s40, 1
        %s871 = scalar_select %p870, %s40, 1
        %s872 = scalar_lea.vmem %s10, %s871
        %p873 = pneg %p323
        %p874 = pneg %p320
        %s875 = sand.u32 %s35, 1
        %s876 = scalar_lea.sflag [#allocation4], %s875
        %s877 = sand.u32 %s336, 1
        %s878 = smul.addr %s877, 128
        %s879 = scalar_lea.vmem [#allocation12], %s878
        %p880 = pneg %p349
        %p881 = pneg %p346
        %p882 = scmp.lt.s32.totalorder %s40, 1
        %s883 = scalar_select %p882, %s40, 1
        %s884 = smul.addr %s883, 2
        %s885 = scalar_lea.vmem %s12, %s884
        %p886 = pneg %p375
        %p887 = pneg %p372
        %s888 = sand.u32 %s35, 1
        %s889 = scalar_lea.sflag [#allocation4], %s888
        %s890 = sand.u32 %s388, 1
        %s891 = smul.addr %s890, 128
        %s892 = scalar_lea.vmem [#allocation13], %s891
        %p893 = pneg %p401
        %p894 = pneg %p398
        %p895 = scmp.lt.s32.totalorder %s40, 1
        %s896 = scalar_select %p895, %s40, 1
        %s897 = scalar_lea.vmem %s14, %s896
        %p898 = pneg %p427
        %p899 = pneg %p424
        %p900 = scmp.lt.s32.totalorder %s40, 1
        %s901 = scalar_select %p900, %s40, 1
        %s902 = scalar_lea.vmem %s15, %s901
        %p903 = pneg %p453
        %p904 = pneg %p450
        %p905 = scmp.lt.s32.totalorder %s40, 1
        %s906 = scalar_select %p905, %s40, 1
        %s907 = scalar_lea.vmem %s16, %s906
        %p908 = pneg %p479
        %p909 = pneg %p476
        %p910 = pneg %p505
        %p911 = pneg %p502
        %s912 = sand.u32 %s492, 1
        %s913 = scalar_lea.sflag [#allocation5], %s912
        %s914 = sand.u32 %s492, 1
        %s915 = smul.addr %s914, 16
        %s916 = scalar_lea.vmem [#allocation14], %s915
        %p917 = scmp.lt.s32.totalorder %s39, 1
        %s918 = scalar_select %p917, %s39, 1
        %s919 = scalar_lea.vmem %s1, %s918
        %p920 = scmp.lt.s32.totalorder %s40, 1
        %s921 = scalar_select %p920, %s40, 1
        %s922 = scalar_lea.vmem %s6, %s921
        %p923 = scmp.lt.s32.totalorder %s40, 1
        %s924 = scalar_select %p923, %s40, 1
        %s925 = scalar_lea.vmem %s7, %s924
        %p926 = scmp.lt.s32.totalorder %s40, 1
        %s927 = scalar_select %p926, %s40, 1
        %s928 = scalar_lea.vmem %s9, %s927
        %p929 = scmp.lt.s32.totalorder %s40, 1
        %s930 = scalar_select %p929, %s40, 1
        %s931 = scalar_lea.vmem %s10, %s930
        %p932 = scmp.lt.s32.totalorder %s40, 1
        %s933 = scalar_select %p932, %s40, 1
        %s934 = smul.addr %s933, 2
        %s935 = scalar_lea.vmem %s12, %s934
        %p936 = scmp.lt.s32.totalorder %s40, 1
        %s937 = scalar_select %p936, %s40, 1
        %s938 = scalar_lea.vmem %s14, %s937
        %p939 = scmp.lt.s32.totalorder %s40, 1
        %s940 = scalar_select %p939, %s40, 1
        %s941 = scalar_lea.vmem %s15, %s940
        %p942 = scmp.lt.s32.totalorder %s40, 1
        %s943 = scalar_select %p942, %s40, 1
        %s944 = scalar_lea.vmem %s16, %s943
        %p946 = scmp.eq.s32.totalorder %s40, 0
        // Predicated region
        $region121: #{tpu_custom_call.1} parent=87 // pred_check
          %p947 = pneg %p946
        $region122: #{tpu_custom_call.1} parent=87 // pred_check_branch
          %949 = sbr.rel (%p947) target = $region124
        $region123: #{tpu_custom_call.1} parent=87 // pred_region
          %v950 = vld [vmem:[%s750] sm:$0xff]
          %v951 = vld [vmem:[%s750 + $0x8] sm:$0xff]
          %952 = vst [vmem:[#allocation2] sm:$0xff] %v950
          %953 = vst [vmem:[#allocation2 + $0x8] sm:$0xff] %v951
        $region124: #{tpu_custom_call.1} parent=87 // pred_fallthru
          _
        %v954 = vld [vmem:[#allocation2] sm:$0xff]
        %v955 = vld [vmem:[#allocation2 + $0x8] sm:$0xff]
        %v956 = vpack.c.bf16 %v955, %v954
        %v957 = vld [vmem:[%s763] sm:$0xf]
        %v958 = vld [vmem:[%s763 + $0x4] sm:$0xf]
        %v959 = vld [vmem:[%s763 + $0x8] sm:$0xf]
        %v960 = vld [vmem:[%s763 + $0xc] sm:$0xf]
        %v961 = vld [vmem:[%s763 + $0x10] sm:$0xf]
        %v962 = vld [vmem:[%s763 + $0x14] sm:$0xf]
        %v963 = vld [vmem:[%s763 + $0x18] sm:$0xf]
        %v964 = vld [vmem:[%s763 + $0x1c] sm:$0xf]
        %v965 = vld [vmem:[%s763 + $0x20] sm:$0xf]
        %v966 = vld [vmem:[%s763 + $0x24] sm:$0xf]
        %v967 = vld [vmem:[%s763 + $0x28] sm:$0xf]
        %v968 = vld [vmem:[%s763 + $0x2c] sm:$0xf]
        %v969 = vld [vmem:[%s763 + $0x30] sm:$0xf]
        %v970 = vld [vmem:[%s763 + $0x34] sm:$0xf]
        %v971 = vld [vmem:[%s763 + $0x38] sm:$0xf]
        %v972 = vld [vmem:[%s763 + $0x3c] sm:$0xf]
        %v989 = vunpack.c.l.b16 %v957
        %v990 = vunpack.c.l.b16 %v958
        %v991 = vunpack.c.l.b16 %v959
        %v992 = vunpack.c.l.b16 %v960
        %v993 = vunpack.c.l.b16 %v961
        %v994 = vunpack.c.l.b16 %v962
        %v995 = vunpack.c.l.b16 %v963
        %v996 = vunpack.c.l.b16 %v964
        %v997 = vunpack.c.l.b16 %v965
        %v998 = vunpack.c.l.b16 %v966
        %v999 = vunpack.c.l.b16 %v967
        %v1000 = vunpack.c.l.b16 %v968
        %v1001 = vunpack.c.l.b16 %v969
        %v1002 = vunpack.c.l.b16 %v970
        %v1003 = vunpack.c.l.b16 %v971
        %v1004 = vunpack.c.l.b16 %v972
        %v1005 = vpack.c.b16 %v990, %v989
        %v1006 = vpack.c.b16 %v992, %v991
        %v1007 = vpack.c.b16 %v994, %v993
        %v1008 = vpack.c.b16 %v996, %v995
        %v1009 = vpack.c.b16 %v998, %v997
        %v1010 = vpack.c.b16 %v1000, %v999
        %v1011 = vpack.c.b16 %v1002, %v1001
        %v1012 = vpack.c.b16 %v1004, %v1003
        %1021 = vmatprep.subr.bf16.mxu0 0
        %1022 = vmatpush1.bf16.msra.mxu0 %v1005
        %1023 = vmatprep.subr.bf16.mxu0 0
        %1024 = vmatpush1.bf16.msra.mxu0 %v1006
        %1025 = vmatprep.subr.bf16.mxu0 0
        %1026 = vmatpush1.bf16.msra.mxu0 %v1007
        %1027 = vmatprep.subr.bf16.mxu0 0
        %1028 = vmatpush1.bf16.msra.mxu0 %v1008
        %1029 = vmatprep.subr.bf16.mxu0 0
        %1030 = vmatpush1.bf16.msra.mxu0 %v1009
        %1031 = vmatprep.subr.bf16.mxu0 0
        %1032 = vmatpush1.bf16.msra.mxu0 %v1010
        %1033 = vmatprep.subr.bf16.mxu0 0
        %1034 = vmatpush1.bf16.msra.mxu0 %v1011
        %1035 = vmatprep.subr.bf16.mxu0 0
        %1036 = vmatpush1.bf16.msra.mxu0 %v1012
        %1037 = vmatprep.subr.bf16.mxu0 0
        %1038 = vmatpush1.bf16.msra.mxu0 0
        %1039 = vmatprep.subr.bf16.mxu0 0
        %1040 = vmatpush1.bf16.msra.mxu0 0
        %1041 = vmatprep.subr.bf16.mxu0 0
        %1042 = vmatpush1.bf16.msra.mxu0 0
        %1043 = vmatprep.subr.bf16.mxu0 0
        %1044 = vmatpush1.bf16.msra.mxu0 0
        %1045 = vmatprep.subr.bf16.mxu0 0
        %1046 = vmatpush1.bf16.msra.mxu0 0
        %1047 = vmatprep.subr.bf16.mxu0 0
        %1048 = vmatpush1.bf16.msra.mxu0 0
        %1049 = vmatprep.subr.bf16.mxu0 0
        %1050 = vmatpush1.bf16.msra.mxu0 0
        %1051 = vmatprep.subr.bf16.mxu0 0
        %1052 = vmatpush1.bf16.msra.mxu0 0
        %1053 = vmatprep.mubr.bf16.mxu0 0
        %1054 = vmatmul.mubr.bf16.gmra.mrb[0].mxu0 %v956
        %v1055 = vpop.f32.mrb[0].mxu0
        %v1056 = vadd.f32 0.0, %v1055
        %v1057 = vpop.f32.mrb[0].mxu0
        %v1058 = vpop.f32.mrb[0].mxu0
        %v1059 = vadd.f32 0.0, %v1058
        %v1060 = vpop.f32.mrb[0].mxu0
        %1061 = vdwg.mxu0
        %v1062 = vld [vmem:[%s772] sm:$0xf]
        %v1063 = vld [vmem:[%s772 + $0x4] sm:$0xf]
        %v1064 = vld [vmem:[%s772 + $0x8] sm:$0xf]
        %v1065 = vld [vmem:[%s772 + $0xc] sm:$0xf]
        %v1066 = vld [vmem:[%s772 + $0x10] sm:$0xf]
        %v1067 = vld [vmem:[%s772 + $0x14] sm:$0xf]
        %v1068 = vld [vmem:[%s772 + $0x18] sm:$0xf]
        %v1069 = vld [vmem:[%s772 + $0x1c] sm:$0xf]
        %v1070 = vld [vmem:[%s772 + $0x20] sm:$0xf]
        %v1071 = vld [vmem:[%s772 + $0x24] sm:$0xf]
        %v1072 = vld [vmem:[%s772 + $0x28] sm:$0xf]
        %v1073 = vld [vmem:[%s772 + $0x2c] sm:$0xf]
        %v1074 = vld [vmem:[%s772 + $0x30] sm:$0xf]
        %v1075 = vld [vmem:[%s772 + $0x34] sm:$0xf]
        %v1076 = vld [vmem:[%s772 + $0x38] sm:$0xf]
        %v1077 = vld [vmem:[%s772 + $0x3c] sm:$0xf]
        %v1094 = vunpack.c.l.b16 %v1062
        %v1095 = vunpack.c.l.b16 %v1063
        %v1096 = vunpack.c.l.b16 %v1064
        %v1097 = vunpack.c.l.b16 %v1065
        %v1098 = vunpack.c.l.b16 %v1066
        %v1099 = vunpack.c.l.b16 %v1067
        %v1100 = vunpack.c.l.b16 %v1068
        %v1101 = vunpack.c.l.b16 %v1069
        %v1102 = vunpack.c.l.b16 %v1070
        %v1103 = vunpack.c.l.b16 %v1071
        %v1104 = vunpack.c.l.b16 %v1072
        %v1105 = vunpack.c.l.b16 %v1073
        %v1106 = vunpack.c.l.b16 %v1074
        %v1107 = vunpack.c.l.b16 %v1075
        %v1108 = vunpack.c.l.b16 %v1076
        %v1109 = vunpack.c.l.b16 %v1077
        %v1110 = vpack.c.b16 %v1095, %v1094
        %v1111 = vpack.c.b16 %v1097, %v1096
        %v1112 = vpack.c.b16 %v1099, %v1098
        %v1113 = vpack.c.b16 %v1101, %v1100
        %v1114 = vpack.c.b16 %v1103, %v1102
        %v1115 = vpack.c.b16 %v1105, %v1104
        %v1116 = vpack.c.b16 %v1107, %v1106
        %v1117 = vpack.c.b16 %v1109, %v1108
        %1126 = vmatprep.subr.bf16.mxu0 0
        %1127 = vmatpush1.bf16.msra.mxu0 %v1110
        %1128 = vmatprep.subr.bf16.mxu0 0
        %1129 = vmatpush1.bf16.msra.mxu0 %v1111
        %1130 = vmatprep.subr.bf16.mxu0 0
        %1131 = vmatpush1.bf16.msra.mxu0 %v1112
        %1132 = vmatprep.subr.bf16.mxu0 0
        %1133 = vmatpush1.bf16.msra.mxu0 %v1113
        %1134 = vmatprep.subr.bf16.mxu0 0
        %1135 = vmatpush1.bf16.msra.mxu0 %v1114
        %1136 = vmatprep.subr.bf16.mxu0 0
        %1137 = vmatpush1.bf16.msra.mxu0 %v1115
        %1138 = vmatprep.subr.bf16.mxu0 0
        %1139 = vmatpush1.bf16.msra.mxu0 %v1116
        %1140 = vmatprep.subr.bf16.mxu0 0
        %1141 = vmatpush1.bf16.msra.mxu0 %v1117
        %1142 = vmatprep.subr.bf16.mxu0 0
        %1143 = vmatpush1.bf16.msra.mxu0 0
        %1144 = vmatprep.subr.bf16.mxu0 0
        %1145 = vmatpush1.bf16.msra.mxu0 0
        %1146 = vmatprep.subr.bf16.mxu0 0
        %1147 = vmatpush1.bf16.msra.mxu0 0
        %1148 = vmatprep.subr.bf16.mxu0 0
        %1149 = vmatpush1.bf16.msra.mxu0 0
        %1150 = vmatprep.subr.bf16.mxu0 0
        %1151 = vmatpush1.bf16.msra.mxu0 0
        %1152 = vmatprep.subr.bf16.mxu0 0
        %1153 = vmatpush1.bf16.msra.mxu0 0
        %1154 = vmatprep.subr.bf16.mxu0 0
        %1155 = vmatpush1.bf16.msra.mxu0 0
        %1156 = vmatprep.subr.bf16.mxu0 0
        %1157 = vmatpush1.bf16.msra.mxu0 0
        %1158 = vmatprep.mubr.bf16.mxu0 0
        %1159 = vmatmul.mubr.bf16.gmra.mrb[0].mxu0 %v956
        %v1160 = vpop.f32.mrb[0].mxu0
        %v1161 = vadd.f32 0.0, %v1160
        %v1162 = vpop.f32.mrb[0].mxu0
        %v1163 = vpop.f32.mrb[0].mxu0
        %v1164 = vadd.f32 0.0, %v1163
        %v1165 = vpop.f32.mrb[0].mxu0
        %1166 = vdwg.mxu0
        %v1167 = vld [vmem:[%s781] sm:$0xf]
        %v1168 = vld [vmem:[%s781 + $0x4] sm:$0xf]
        %v1169 = vld [vmem:[%s781 + $0x8] sm:$0xf]
        %v1170 = vld [vmem:[%s781 + $0xc] sm:$0xf]
        %v1171 = vld [vmem:[%s781 + $0x10] sm:$0xf]
        %v1172 = vld [vmem:[%s781 + $0x14] sm:$0xf]
        %v1173 = vld [vmem:[%s781 + $0x18] sm:$0xf]
        %v1174 = vld [vmem:[%s781 + $0x1c] sm:$0xf]
        %v1175 = vld [vmem:[%s781 + $0x20] sm:$0xf]
        %v1176 = vld [vmem:[%s781 + $0x24] sm:$0xf]
        %v1177 = vld [vmem:[%s781 + $0x28] sm:$0xf]
        %v1178 = vld [vmem:[%s781 + $0x2c] sm:$0xf]
        %v1179 = vld [vmem:[%s781 + $0x30] sm:$0xf]
        %v1180 = vld [vmem:[%s781 + $0x34] sm:$0xf]
        %v1181 = vld [vmem:[%s781 + $0x38] sm:$0xf]
        %v1182 = vld [vmem:[%s781 + $0x3c] sm:$0xf]
        %v1199 = vunpack.c.l.b16 %v1167
        %v1200 = vunpack.c.l.b16 %v1168
        %v1201 = vunpack.c.l.b16 %v1169
        %v1202 = vunpack.c.l.b16 %v1170
        %v1203 = vunpack.c.l.b16 %v1171
        %v1204 = vunpack.c.l.b16 %v1172
        %v1205 = vunpack.c.l.b16 %v1173
        %v1206 = vunpack.c.l.b16 %v1174
        %v1207 = vunpack.c.l.b16 %v1175
        %v1208 = vunpack.c.l.b16 %v1176
        %v1209 = vunpack.c.l.b16 %v1177
        %v1210 = vunpack.c.l.b16 %v1178
        %v1211 = vunpack.c.l.b16 %v1179
        %v1212 = vunpack.c.l.b16 %v1180
        %v1213 = vunpack.c.l.b16 %v1181
        %v1214 = vunpack.c.l.b16 %v1182
        %v1215 = vpack.c.b16 %v1200, %v1199
        %v1216 = vpack.c.b16 %v1202, %v1201
        %v1217 = vpack.c.b16 %v1204, %v1203
        %v1218 = vpack.c.b16 %v1206, %v1205
        %v1219 = vpack.c.b16 %v1208, %v1207
        %v1220 = vpack.c.b16 %v1210, %v1209
        %v1221 = vpack.c.b16 %v1212, %v1211
        %v1222 = vpack.c.b16 %v1214, %v1213
        %1231 = vmatprep.subr.bf16.mxu0 0
        %1232 = vmatpush1.bf16.msra.mxu0 %v1215
        %1233 = vmatprep.subr.bf16.mxu0 0
        %1234 = vmatpush1.bf16.msra.mxu0 %v1216
        %1235 = vmatprep.subr.bf16.mxu0 0
        %1236 = vmatpush1.bf16.msra.mxu0 %v1217
        %1237 = vmatprep.subr.bf16.mxu0 0
        %1238 = vmatpush1.bf16.msra.mxu0 %v1218
        %1239 = vmatprep.subr.bf16.mxu0 0
        %1240 = vmatpush1.bf16.msra.mxu0 %v1219
        %1241 = vmatprep.subr.bf16.mxu0 0
        %1242 = vmatpush1.bf16.msra.mxu0 %v1220
        %1243 = vmatprep.subr.bf16.mxu0 0
        %1244 = vmatpush1.bf16.msra.mxu0 %v1221
        %1245 = vmatprep.subr.bf16.mxu0 0
        %1246 = vmatpush1.bf16.msra.mxu0 %v1222
        %1247 = vmatprep.subr.bf16.mxu0 0
        %1248 = vmatpush1.bf16.msra.mxu0 0
        %1249 = vmatprep.subr.bf16.mxu0 0
        %1250 = vmatpush1.bf16.msra.mxu0 0
        %1251 = vmatprep.subr.bf16.mxu0 0
        %1252 = vmatpush1.bf16.msra.mxu0 0
        %1253 = vmatprep.subr.bf16.mxu0 0
        %1254 = vmatpush1.bf16.msra.mxu0 0
        %1255 = vmatprep.subr.bf16.mxu0 0
        %1256 = vmatpush1.bf16.msra.mxu0 0
        %1257 = vmatprep.subr.bf16.mxu0 0
        %1258 = vmatpush1.bf16.msra.mxu0 0
        %1259 = vmatprep.subr.bf16.mxu0 0
        %1260 = vmatpush1.bf16.msra.mxu0 0
        %1261 = vmatprep.subr.bf16.mxu0 0
        %1262 = vmatpush1.bf16.msra.mxu0 0
        %1263 = vmatprep.mubr.bf16.mxu0 0
        %1264 = vmatmul.mubr.bf16.gmra.mrb[0].mxu0 %v956
        %v1265 = vpop.f32.mrb[0].mxu0
        %v1266 = vadd.f32 0.0, %v1265
        %v1267 = vpop.f32.mrb[0].mxu0
        %v1268 = vpop.f32.mrb[0].mxu0
        %v1269 = vadd.f32 0.0, %v1268
        %v1270 = vpop.f32.mrb[0].mxu0
        %1271 = vdwg.mxu0
        %v1272 = vld [vmem:[%s922] sm:$0x1]
        %v1274 = vlaneseq
        %v1275 = vshrl.u32 %v1274, 7
        %v1276 = vsub.s32 0, %v1275
        %v1277 = vrot.slane %v1272, %v1276
        %v1279 = vadd.f32 %v1056, %v1277
        %v1280 = vadd.f32 %v1059, %v1277
        %v1281 = vpack.c.bf16 %v1280, %v1279
        %v1282 = vld [vmem:[%s925] sm:$0x1]
        %v1284 = vlaneseq
        %v1285 = vshrl.u32 %v1284, 7
        %v1286 = vsub.s32 0, %v1285
        %v1287 = vrot.slane %v1282, %v1286
        %v1289 = vadd.f32 %v1056, %v1287
        %v1290 = vadd.f32 %v1059, %v1287
        %v1291 = vpack.c.bf16 %v1290, %v1289
        %v1292 = vpack.c.bf16 %v1164, %v1161
        %v1293 = vpack.c.bf16 %v1269, %v1266
        %v1294 = vld [vmem:[#allocation6] sm:$0xf]
        %v1295 = vld [vmem:[#allocation6 + $0x4] sm:$0xf]
        %v1296 = vld [vmem:[%s919] sm:$0x1]
        %v1299 = vunpack.c.l.b16 %v1294
        %v1300 = vunpack.c.l.b16 %v1295
        %v1301 = vpack.c.b16 %v1300, %v1299
        %vm1303 = vcmask 130048
        %v1305 = vsel %vm1303, %v1291, 0
        %1307 = vmatprep.subr.bf16.mxu0 0
        %1308 = vmatpush1.bf16.msra.mxu0 %v1301
        %1309 = vmatprep.subr.bf16.mxu0 0
        %1310 = vmatpush1.bf16.msra.mxu0 0
        %1311 = vmatprep.subr.bf16.mxu0 0
        %1312 = vmatpush1.bf16.msra.mxu0 0
        %1313 = vmatprep.subr.bf16.mxu0 0
        %1314 = vmatpush1.bf16.msra.mxu0 0
        %1315 = vmatprep.subr.bf16.mxu0 0
        %1316 = vmatpush1.bf16.msra.mxu0 0
        %1317 = vmatprep.subr.bf16.mxu0 0
        %1318 = vmatpush1.bf16.msra.mxu0 0
        %1319 = vmatprep.subr.bf16.mxu0 0
        %1320 = vmatpush1.bf16.msra.mxu0 0
        %1321 = vmatprep.subr.bf16.mxu0 0
        %1322 = vmatpush1.bf16.msra.mxu0 0
        %1323 = vmatprep.subr.bf16.mxu0 0
        %1324 = vmatpush1.bf16.msra.mxu0 0
        %1325 = vmatprep.subr.bf16.mxu0 0
        %1326 = vmatpush1.bf16.msra.mxu0 0
        %1327 = vmatprep.subr.bf16.mxu0 0
        %1328 = vmatpush1.bf16.msra.mxu0 0
        %1329 = vmatprep.subr.bf16.mxu0 0
        %1330 = vmatpush1.bf16.msra.mxu0 0
        %1331 = vmatprep.subr.bf16.mxu0 0
        %1332 = vmatpush1.bf16.msra.mxu0 0
        %1333 = vmatprep.subr.bf16.mxu0 0
        %1334 = vmatpush1.bf16.msra.mxu0 0
        %1335 = vmatprep.subr.bf16.mxu0 0
        %1336 = vmatpush1.bf16.msra.mxu0 0
        %1337 = vmatprep.subr.bf16.mxu0 0
        %1338 = vmatpush1.bf16.msra.mxu0 0
        %1339 = vmatprep.mubr.bf16.mxu0 0
        %1340 = vmatmul.mubr.bf16.gmra.mrb[0].mxu0 %v1305
        %v1341 = vpop.f32.mrb[0].mxu0
        %v1342 = vadd.f32 0.0, %v1341
        %v1343 = vpop.f32.mrb[0].mxu0
        %v1344 = vpop.f32.mrb[0].mxu0
        %v1345 = vadd.f32 0.0, %v1344
        %v1346 = vpop.f32.mrb[0].mxu0
        %1347 = vdwg.mxu0
        %1349 = vrot.lane.b32.xlu0 %v1342, 1
        %v1350 = vpop.permute.xlu0 %1349
        %1352 = vrot.lane.b32.xlu0 %v1342, 2
        %v1353 = vpop.permute.xlu0 %1352
        %1355 = vrot.lane.b32.xlu0 %v1342, 3
        %v1356 = vpop.permute.xlu0 %1355
        %1358 = vrot.lane.b32.xlu0 %v1342, 4
        %v1359 = vpop.permute.xlu0 %1358
        %1361 = vrot.lane.b32.xlu0 %v1342, 5
        %v1362 = vpop.permute.xlu0 %1361
        %1364 = vrot.lane.b32.xlu0 %v1342, 6
        %v1365 = vpop.permute.xlu0 %1364
        %1367 = vrot.lane.b32.xlu0 %v1342, 7
        %v1368 = vpop.permute.xlu0 %1367
        %1371 = vrot.lane.b32.xlu0 %v1345, 8
        %v1372 = vpop.permute.xlu0 %1371
        %1374 = vrot.lane.b32.xlu0 %v1345, 9
        %v1375 = vpop.permute.xlu0 %1374
        %1377 = vrot.lane.b32.xlu0 %v1345, 10
        %v1378 = vpop.permute.xlu0 %1377
        %1380 = vrot.lane.b32.xlu0 %v1345, 11
        %v1381 = vpop.permute.xlu0 %1380
        %1383 = vrot.lane.b32.xlu0 %v1345, 12
        %v1384 = vpop.permute.xlu0 %1383
        %1386 = vrot.lane.b32.xlu0 %v1345, 13
        %v1387 = vpop.permute.xlu0 %1386
        %1389 = vrot.lane.b32.xlu0 %v1345, 14
        %v1390 = vpop.permute.xlu0 %1389
        %1392 = vrot.lane.b32.xlu0 %v1345, 15
        %v1393 = vpop.permute.xlu0 %1392
        %vm1395 = vcmask 1040384
        %v1396 = vsel %vm1395, %v1342, %v1350
        %vm1397 = vcmask 1041408
        %v1398 = vsel %vm1397, %v1396, %v1353
        %vm1399 = vcmask 1042432
        %v1400 = vsel %vm1399, %v1398, %v1356
        %vm1401 = vcmask 1043456
        %v1402 = vsel %vm1401, %v1400, %v1359
        %vm1403 = vcmask 1044480
        %v1404 = vsel %vm1403, %v1402, %v1362
        %vm1405 = vcmask 1045504
        %v1406 = vsel %vm1405, %v1404, %v1365
        %vm1407 = vcmask 1046528
        %v1408 = vsel %vm1407, %v1406, %v1368
        %v1409 = vsel %vm1395, %v1372, %v1375
        %v1410 = vsel %vm1397, %v1409, %v1378
        %v1411 = vsel %vm1399, %v1410, %v1381
        %v1412 = vsel %vm1401, %v1411, %v1384
        %v1413 = vsel %vm1403, %v1412, %v1387
        %v1414 = vsel %vm1405, %v1413, %v1390
        %v1415 = vsel %vm1407, %v1414, %v1393
        %1418 = vrot.lane.b32.xlu0 %v1408, 113
        %v1419 = vpop.permute.xlu0 %1418
        %1420 = vrot.lane.b32.xlu0 %v1415, 113
        %v1421 = vpop.permute.xlu0 %1420
        %v1425 = vsel %vm1303, %v1281, 0
        %v1428 = vsel %vm1303, %v1292, 0
        %1430 = vmatprep.subr.bf16.mxu0 0
        %1431 = vmatpush1.bf16.xpose.msra.mxu0 %v1428
        %1432 = vmatprep.subr.bf16.mxu0 0
        %1433 = vmatpush1.bf16.xpose.msra.mxu0 0
        %1434 = vmatprep.subr.bf16.mxu0 0
        %1435 = vmatpush1.bf16.xpose.msra.mxu0 0
        %1436 = vmatprep.subr.bf16.mxu0 0
        %1437 = vmatpush1.bf16.xpose.msra.mxu0 0
        %1438 = vmatprep.subr.bf16.mxu0 0
        %1439 = vmatpush1.bf16.xpose.msra.mxu0 0
        %1440 = vmatprep.subr.bf16.mxu0 0
        %1441 = vmatpush1.bf16.xpose.msra.mxu0 0
        %1442 = vmatprep.subr.bf16.mxu0 0
        %1443 = vmatpush1.bf16.xpose.msra.mxu0 0
        %1444 = vmatprep.subr.bf16.mxu0 0
        %1445 = vmatpush1.bf16.xpose.msra.mxu0 0
        %1446 = vmatprep.subr.bf16.mxu0 0
        %1447 = vmatpush1.bf16.xpose.msra.mxu0 0
        %1448 = vmatprep.subr.bf16.mxu0 0
        %1449 = vmatpush1.bf16.xpose.msra.mxu0 0
        %1450 = vmatprep.subr.bf16.mxu0 0
        %1451 = vmatpush1.bf16.xpose.msra.mxu0 0
        %1452 = vmatprep.subr.bf16.mxu0 0
        %1453 = vmatpush1.bf16.xpose.msra.mxu0 0
        %1454 = vmatprep.subr.bf16.mxu0 0
        %1455 = vmatpush1.bf16.xpose.msra.mxu0 0
        %1456 = vmatprep.subr.bf16.mxu0 0
        %1457 = vmatpush1.bf16.xpose.msra.mxu0 0
        %1458 = vmatprep.subr.bf16.mxu0 0
        %1459 = vmatpush1.bf16.xpose.msra.mxu0 0
        %1460 = vmatprep.subr.bf16.mxu0 0
        %1461 = vmatpush1.bf16.xpose.msra.mxu0 0
        %1462 = vmatprep.mubr.bf16.mxu0 0
        %1463 = vmatmul.mubr.bf16.gmra.mrb[0].mxu0 %v1425
        %v1464 = vpop.f32.mrb[0].mxu0
        %v1465 = vadd.f32 %v1419, %v1464
        %v1466 = vpop.f32.mrb[0].mxu0
        %v1467 = vpop.f32.mrb[0].mxu0
        %v1468 = vadd.f32 %v1421, %v1467
        %v1469 = vpop.f32.mrb[0].mxu0
        %1470 = vdwg.mxu0
        %v1471 = vmul.f32 %v1465, 0.25
        %v1472 = vmul.f32 %v1468, 0.25
        %v1474 = vlaneseq
        %v1475 = vshrl.u32 %v1474, 7
        %v1476 = vsub.s32 0, %v1475
        %v1477 = vrot.slane %v1296, %v1476
        %v1479 = vadd.f32 %v1471, %v1477
        %v1480 = vadd.f32 %v1472, %v1477
        %v1481 = vsel %vm1303, %v1479, -inf
        %1482 = vmax.xlane.f32.xlu0 %v1481
        %v1483 = vpop.xlane.xlu0 %1482
        %v1484 = vsel %vm1303, %v1480, -inf
        %1485 = vmax.xlane.f32.xlu0 %v1484
        %v1486 = vpop.xlane.xlu0 %1485
        %v1487 = vsub.f32 %v1479, %v1483
        %v1488 = vsub.f32 %v1480, %v1486
        %v1489 = vmul.f32 %v1487, 1.442695
        %v1490 = vpow.pop %v1489
        %v1491 = vmul.f32 %v1488, 1.442695
        %v1492 = vpow.pop %v1491
        %v1493 = vsel %vm1303, %v1490, 0.0
        %1494 = vadd.xlane.f32.xlu0 %v1493
        %v1495 = vpop.xlane.xlu0 %1494
        %v1496 = vsel %vm1303, %v1492, 0.0
        %1497 = vadd.xlane.f32.xlu0 %v1496
        %v1498 = vpop.xlane.xlu0 %1497
        %v1499 = vrcp.pop %v1495
        %v1500 = vrcp.pop %v1498
        %v1501 = vmul.f32 %v1490, %v1499
        %v1502 = vmul.f32 %v1492, %v1500
        %v1503 = vpack.c.bf16 %v1502, %v1501
        %v1505 = vsel %vm1303, %v1503, 0
        %1507 = vmatprep.subr.bf16.mxu0 0
        %1508 = vmatpush1.bf16.msra.mxu0 %v1293
        %1509 = vmatprep.subr.bf16.mxu0 0
        %1510 = vmatpush1.bf16.msra.mxu0 0
        %1511 = vmatprep.subr.bf16.mxu0 0
        %1512 = vmatpush1.bf16.msra.mxu0 0
        %1513 = vmatprep.subr.bf16.mxu0 0
        %1514 = vmatpush1.bf16.msra.mxu0 0
        %1515 = vmatprep.subr.bf16.mxu0 0
        %1516 = vmatpush1.bf16.msra.mxu0 0
        %1517 = vmatprep.subr.bf16.mxu0 0
        %1518 = vmatpush1.bf16.msra.mxu0 0
        %1519 = vmatprep.subr.bf16.mxu0 0
        %1520 = vmatpush1.bf16.msra.mxu0 0
        %1521 = vmatprep.subr.bf16.mxu0 0
        %1522 = vmatpush1.bf16.msra.mxu0 0
        %1523 = vmatprep.subr.bf16.mxu0 0
        %1524 = vmatpush1.bf16.msra.mxu0 0
        %1525 = vmatprep.subr.bf16.mxu0 0
        %1526 = vmatpush1.bf16.msra.mxu0 0
        %1527 = vmatprep.subr.bf16.mxu0 0
        %1528 = vmatpush1.bf16.msra.mxu0 0
        %1529 = vmatprep.subr.bf16.mxu0 0
        %1530 = vmatpush1.bf16.msra.mxu0 0
        %1531 = vmatprep.subr.bf16.mxu0 0
        %1532 = vmatpush1.bf16.msra.mxu0 0
        %1533 = vmatprep.subr.bf16.mxu0 0
        %1534 = vmatpush1.bf16.msra.mxu0 0
        %1535 = vmatprep.subr.bf16.mxu0 0
        %1536 = vmatpush1.bf16.msra.mxu0 0
        %1537 = vmatprep.subr.bf16.mxu0 0
        %1538 = vmatpush1.bf16.msra.mxu0 0
        %1539 = vmatprep.mubr.bf16.mxu0 0
        %1540 = vmatmul.mubr.bf16.gmra.mrb[0].mxu0 %v1505
        %v1541 = vpop.f32.mrb[0].mxu0
        %v1542 = vadd.f32 0.0, %v1541
        %v1543 = vpop.f32.mrb[0].mxu0
        %v1544 = vpop.f32.mrb[0].mxu0
        %v1545 = vadd.f32 0.0, %v1544
        %v1546 = vpop.f32.mrb[0].mxu0
        %1547 = vdwg.mxu0
        %1549 = vrot.lane.b32.xlu0 %v1291, 112
        %v1550 = vpop.permute.xlu0 %1549
        %v1552 = vsel %vm1303, %v1550, 0
        %1554 = vmatprep.subr.bf16.mxu0 0
        %1555 = vmatpush1.bf16.msra.mxu0 %v1301
        %1556 = vmatprep.subr.bf16.mxu0 0
        %1557 = vmatpush1.bf16.msra.mxu0 0
        %1558 = vmatprep.subr.bf16.mxu0 0
        %1559 = vmatpush1.bf16.msra.mxu0 0
        %1560 = vmatprep.subr.bf16.mxu0 0
        %1561 = vmatpush1.bf16.msra.mxu0 0
        %1562 = vmatprep.subr.bf16.mxu0 0
        %1563 = vmatpush1.bf16.msra.mxu0 0
        %1564 = vmatprep.subr.bf16.mxu0 0
        %1565 = vmatpush1.bf16.msra.mxu0 0
        %1566 = vmatprep.subr.bf16.mxu0 0
        %1567 = vmatpush1.bf16.msra.mxu0 0
        %1568 = vmatprep.subr.bf16.mxu0 0
        %1569 = vmatpush1.bf16.msra.mxu0 0
        %1570 = vmatprep.subr.bf16.mxu0 0
        %1571 = vmatpush1.bf16.msra.mxu0 0
        %1572 = vmatprep.subr.bf16.mxu0 0
        %1573 = vmatpush1.bf16.msra.mxu0 0
        %1574 = vmatprep.subr.bf16.mxu0 0
        %1575 = vmatpush1.bf16.msra.mxu0 0
        %1576 = vmatprep.subr.bf16.mxu0 0
        %1577 = vmatpush1.bf16.msra.mxu0 0
        %1578 = vmatprep.subr.bf16.mxu0 0
        %1579 = vmatpush1.bf16.msra.mxu0 0
        %1580 = vmatprep.subr.bf16.mxu0 0
        %1581 = vmatpush1.bf16.msra.mxu0 0
        %1582 = vmatprep.subr.bf16.mxu0 0
        %1583 = vmatpush1.bf16.msra.mxu0 0
        %1584 = vmatprep.subr.bf16.mxu0 0
        %1585 = vmatpush1.bf16.msra.mxu0 0
        %1586 = vmatprep.mubr.bf16.mxu0 0
        %1587 = vmatmul.mubr.bf16.gmra.mrb[0].mxu0 %v1552
        %v1588 = vpop.f32.mrb[0].mxu0
        %v1589 = vadd.f32 0.0, %v1588
        %v1590 = vpop.f32.mrb[0].mxu0
        %v1591 = vpop.f32.mrb[0].mxu0
        %v1592 = vadd.f32 0.0, %v1591
        %v1593 = vpop.f32.mrb[0].mxu0
        %1594 = vdwg.mxu0
        %1596 = vrot.lane.b32.xlu0 %v1589, 1
        %v1597 = vpop.permute.xlu0 %1596
        %1599 = vrot.lane.b32.xlu0 %v1589, 2
        %v1600 = vpop.permute.xlu0 %1599
        %1602 = vrot.lane.b32.xlu0 %v1589, 3
        %v1603 = vpop.permute.xlu0 %1602
        %1605 = vrot.lane.b32.xlu0 %v1589, 4
        %v1606 = vpop.permute.xlu0 %1605
        %1608 = vrot.lane.b32.xlu0 %v1589, 5
        %v1609 = vpop.permute.xlu0 %1608
        %1611 = vrot.lane.b32.xlu0 %v1589, 6
        %v1612 = vpop.permute.xlu0 %1611
        %1614 = vrot.lane.b32.xlu0 %v1589, 7
        %v1615 = vpop.permute.xlu0 %1614
        %1618 = vrot.lane.b32.xlu0 %v1592, 8
        %v1619 = vpop.permute.xlu0 %1618
        %1621 = vrot.lane.b32.xlu0 %v1592, 9
        %v1622 = vpop.permute.xlu0 %1621
        %1624 = vrot.lane.b32.xlu0 %v1592, 10
        %v1625 = vpop.permute.xlu0 %1624
        %1627 = vrot.lane.b32.xlu0 %v1592, 11
        %v1628 = vpop.permute.xlu0 %1627
        %1630 = vrot.lane.b32.xlu0 %v1592, 12
        %v1631 = vpop.permute.xlu0 %1630
        %1633 = vrot.lane.b32.xlu0 %v1592, 13
        %v1634 = vpop.permute.xlu0 %1633
        %1636 = vrot.lane.b32.xlu0 %v1592, 14
        %v1637 = vpop.permute.xlu0 %1636
        %1639 = vrot.lane.b32.xlu0 %v1592, 15
        %v1640 = vpop.permute.xlu0 %1639
        %v1642 = vsel %vm1395, %v1589, %v1597
        %v1643 = vsel %vm1397, %v1642, %v1600
        %v1644 = vsel %vm1399, %v1643, %v1603
        %v1645 = vsel %vm1401, %v1644, %v1606
        %v1646 = vsel %vm1403, %v1645, %v1609
        %v1647 = vsel %vm1405, %v1646, %v1612
        %v1648 = vsel %vm1407, %v1647, %v1615
        %v1649 = vsel %vm1395, %v1619, %v1622
        %v1650 = vsel %vm1397, %v1649, %v1625
        %v1651 = vsel %vm1399, %v1650, %v1628
        %v1652 = vsel %vm1401, %v1651, %v1631
        %v1653 = vsel %vm1403, %v1652, %v1634
        %v1654 = vsel %vm1405, %v1653, %v1637
        %v1655 = vsel %vm1407, %v1654, %v1640
        %1657 = vrot.lane.b32.xlu0 %v1281, 112
        %v1658 = vpop.permute.xlu0 %1657
        %1660 = vrot.lane.b32.xlu0 %v1292, 112
        %v1661 = vpop.permute.xlu0 %1660
        %1664 = vrot.lane.b32.xlu0 %v1648, 113
        %v1665 = vpop.permute.xlu0 %1664
        %1666 = vrot.lane.b32.xlu0 %v1655, 113
        %v1667 = vpop.permute.xlu0 %1666
        %v1671 = vsel %vm1303, %v1658, 0
        %v1674 = vsel %vm1303, %v1661, 0
        %1676 = vmatprep.subr.bf16.mxu0 0
        %1677 = vmatpush1.bf16.xpose.msra.mxu0 %v1674
        %1678 = vmatprep.subr.bf16.mxu0 0
        %1679 = vmatpush1.bf16.xpose.msra.mxu0 0
        %1680 = vmatprep.subr.bf16.mxu0 0
        %1681 = vmatpush1.bf16.xpose.msra.mxu0 0
        %1682 = vmatprep.subr.bf16.mxu0 0
        %1683 = vmatpush1.bf16.xpose.msra.mxu0 0
        %1684 = vmatprep.subr.bf16.mxu0 0
        %1685 = vmatpush1.bf16.xpose.msra.mxu0 0
        %1686 = vmatprep.subr.bf16.mxu0 0
        %1687 = vmatpush1.bf16.xpose.msra.mxu0 0
        %1688 = vmatprep.subr.bf16.mxu0 0
        %1689 = vmatpush1.bf16.xpose.msra.mxu0 0
        %1690 = vmatprep.subr.bf16.mxu0 0
        %1691 = vmatpush1.bf16.xpose.msra.mxu0 0
        %1692 = vmatprep.subr.bf16.mxu0 0
        %1693 = vmatpush1.bf16.xpose.msra.mxu0 0
        %1694 = vmatprep.subr.bf16.mxu0 0
        %1695 = vmatpush1.bf16.xpose.msra.mxu0 0
        %1696 = vmatprep.subr.bf16.mxu0 0
        %1697 = vmatpush1.bf16.xpose.msra.mxu0 0
        %1698 = vmatprep.subr.bf16.mxu0 0
        %1699 = vmatpush1.bf16.xpose.msra.mxu0 0
        %1700 = vmatprep.subr.bf16.mxu0 0
        %1701 = vmatpush1.bf16.xpose.msra.mxu0 0
        %1702 = vmatprep.subr.bf16.mxu0 0
        %1703 = vmatpush1.bf16.xpose.msra.mxu0 0
        %1704 = vmatprep.subr.bf16.mxu0 0
        %1705 = vmatpush1.bf16.xpose.msra.mxu0 0
        %1706 = vmatprep.subr.bf16.mxu0 0
        %1707 = vmatpush1.bf16.xpose.msra.mxu0 0
        %1708 = vmatprep.mubr.bf16.mxu0 0
        %1709 = vmatmul.mubr.bf16.gmra.mrb[0].mxu0 %v1671
        %v1710 = vpop.f32.mrb[0].mxu0
        %v1711 = vadd.f32 %v1665, %v1710
        %v1712 = vpop.f32.mrb[0].mxu0
        %v1713 = vpop.f32.mrb[0].mxu0
        %v1714 = vadd.f32 %v1667, %v1713
        %v1715 = vpop.f32.mrb[0].mxu0
        %1716 = vdwg.mxu0
        %v1717 = vmul.f32 %v1711, 0.25
        %v1718 = vmul.f32 %v1714, 0.25
        %v1719 = vadd.f32 %v1717, %v1477
        %v1720 = vadd.f32 %v1718, %v1477
        %v1721 = vsel %vm1303, %v1719, -inf
        %1722 = vmax.xlane.f32.xlu0 %v1721
        %v1723 = vpop.xlane.xlu0 %1722
        %v1724 = vsel %vm1303, %v1720, -inf
        %1725 = vmax.xlane.f32.xlu0 %v1724
        %v1726 = vpop.xlane.xlu0 %1725
        %v1727 = vsub.f32 %v1719, %v1723
        %v1728 = vsub.f32 %v1720, %v1726
        %v1729 = vmul.f32 %v1727, 1.442695
        %v1730 = vpow.pop %v1729
        %v1731 = vmul.f32 %v1728, 1.442695
        %v1732 = vpow.pop %v1731
        %v1733 = vsel %vm1303, %v1730, 0.0
        %1734 = vadd.xlane.f32.xlu0 %v1733
        %v1735 = vpop.xlane.xlu0 %1734
        %v1736 = vsel %vm1303, %v1732, 0.0
        %1737 = vadd.xlane.f32.xlu0 %v1736
        %v1738 = vpop.xlane.xlu0 %1737
        %v1739 = vrcp.pop %v1735
        %v1740 = vrcp.pop %v1738
        %v1741 = vmul.f32 %v1730, %v1739
        %v1742 = vmul.f32 %v1732, %v1740
        %v1743 = vpack.c.bf16 %v1742, %v1741
        %1745 = vrot.lane.b32.xlu0 %v1293, 112
        %v1746 = vpop.permute.xlu0 %1745
        %v1749 = vsel %vm1303, %v1743, 0
        %1751 = vmatprep.subr.bf16.mxu0 0
        %1752 = vmatpush1.bf16.msra.mxu0 %v1746
        %1753 = vmatprep.subr.bf16.mxu0 0
        %1754 = vmatpush1.bf16.msra.mxu0 0
        %1755 = vmatprep.subr.bf16.mxu0 0
        %1756 = vmatpush1.bf16.msra.mxu0 0
        %1757 = vmatprep.subr.bf16.mxu0 0
        %1758 = vmatpush1.bf16.msra.mxu0 0
        %1759 = vmatprep.subr.bf16.mxu0 0
        %1760 = vmatpush1.bf16.msra.mxu0 0
        %1761 = vmatprep.subr.bf16.mxu0 0
        %1762 = vmatpush1.bf16.msra.mxu0 0
        %1763 = vmatprep.subr.bf16.mxu0 0
        %1764 = vmatpush1.bf16.msra.mxu0 0
        %1765 = vmatprep.subr.bf16.mxu0 0
        %1766 = vmatpush1.bf16.msra.mxu0 0
        %1767 = vmatprep.subr.bf16.mxu0 0
        %1768 = vmatpush1.bf16.msra.mxu0 0
        %1769 = vmatprep.subr.bf16.mxu0 0
        %1770 = vmatpush1.bf16.msra.mxu0 0
        %1771 = vmatprep.subr.bf16.mxu0 0
        %1772 = vmatpush1.bf16.msra.mxu0 0
        %1773 = vmatprep.subr.bf16.mxu0 0
        %1774 = vmatpush1.bf16.msra.mxu0 0
        %1775 = vmatprep.subr.bf16.mxu0 0
        %1776 = vmatpush1.bf16.msra.mxu0 0
        %1777 = vmatprep.subr.bf16.mxu0 0
        %1778 = vmatpush1.bf16.msra.mxu0 0
        %1779 = vmatprep.subr.bf16.mxu0 0
        %1780 = vmatpush1.bf16.msra.mxu0 0
        %1781 = vmatprep.subr.bf16.mxu0 0
        %1782 = vmatpush1.bf16.msra.mxu0 0
        %1783 = vmatprep.mubr.bf16.mxu0 0
        %1784 = vmatmul.mubr.bf16.gmra.mrb[0].mxu0 %v1749
        %v1785 = vpop.f32.mrb[0].mxu0
        %v1786 = vadd.f32 0.0, %v1785
        %v1787 = vpop.f32.mrb[0].mxu0
        %v1788 = vpop.f32.mrb[0].mxu0
        %v1789 = vadd.f32 0.0, %v1788
        %v1790 = vpop.f32.mrb[0].mxu0
        %1791 = vdwg.mxu0
        %1792 = vrot.lane.b32.xlu0 %v1291, 96
        %v1793 = vpop.permute.xlu0 %1792
        %v1795 = vsel %vm1303, %v1793, 0
        %1797 = vmatprep.subr.bf16.mxu0 0
        %1798 = vmatpush1.bf16.msra.mxu0 %v1301
        %1799 = vmatprep.subr.bf16.mxu0 0
        %1800 = vmatpush1.bf16.msra.mxu0 0
        %1801 = vmatprep.subr.bf16.mxu0 0
        %1802 = vmatpush1.bf16.msra.mxu0 0
        %1803 = vmatprep.subr.bf16.mxu0 0
        %1804 = vmatpush1.bf16.msra.mxu0 0
        %1805 = vmatprep.subr.bf16.mxu0 0
        %1806 = vmatpush1.bf16.msra.mxu0 0
        %1807 = vmatprep.subr.bf16.mxu0 0
        %1808 = vmatpush1.bf16.msra.mxu0 0
        %1809 = vmatprep.subr.bf16.mxu0 0
        %1810 = vmatpush1.bf16.msra.mxu0 0
        %1811 = vmatprep.subr.bf16.mxu0 0
        %1812 = vmatpush1.bf16.msra.mxu0 0
        %1813 = vmatprep.subr.bf16.mxu0 0
        %1814 = vmatpush1.bf16.msra.mxu0 0
        %1815 = vmatprep.subr.bf16.mxu0 0
        %1816 = vmatpush1.bf16.msra.mxu0 0
        %1817 = vmatprep.subr.bf16.mxu0 0
        %1818 = vmatpush1.bf16.msra.mxu0 0
        %1819 = vmatprep.subr.bf16.mxu0 0
        %1820 = vmatpush1.bf16.msra.mxu0 0
        %1821 = vmatprep.subr.bf16.mxu0 0
        %1822 = vmatpush1.bf16.msra.mxu0 0
        %1823 = vmatprep.subr.bf16.mxu0 0
        %1824 = vmatpush1.bf16.msra.mxu0 0
        %1825 = vmatprep.subr.bf16.mxu0 0
        %1826 = vmatpush1.bf16.msra.mxu0 0
        %1827 = vmatprep.subr.bf16.mxu0 0
        %1828 = vmatpush1.bf16.msra.mxu0 0
        %1829 = vmatprep.mubr.bf16.mxu0 0
        %1830 = vmatmul.mubr.bf16.gmra.mrb[0].mxu0 %v1795
        %v1831 = vpop.f32.mrb[0].mxu0
        %v1832 = vadd.f32 0.0, %v1831
        %v1833 = vpop.f32.mrb[0].mxu0
        %v1834 = vpop.f32.mrb[0].mxu0
        %v1835 = vadd.f32 0.0, %v1834
        %v1836 = vpop.f32.mrb[0].mxu0
        %1837 = vdwg.mxu0
        %1839 = vrot.lane.b32.xlu0 %v1832, 1
        %v1840 = vpop.permute.xlu0 %1839
        %1842 = vrot.lane.b32.xlu0 %v1832, 2
        %v1843 = vpop.permute.xlu0 %1842
        %1845 = vrot.lane.b32.xlu0 %v1832, 3
        %v1846 = vpop.permute.xlu0 %1845
        %1848 = vrot.lane.b32.xlu0 %v1832, 4
        %v1849 = vpop.permute.xlu0 %1848
        %1851 = vrot.lane.b32.xlu0 %v1832, 5
        %v1852 = vpop.permute.xlu0 %1851
        %1854 = vrot.lane.b32.xlu0 %v1832, 6
        %v1855 = vpop.permute.xlu0 %1854
        %1857 = vrot.lane.b32.xlu0 %v1832, 7
        %v1858 = vpop.permute.xlu0 %1857
        %1861 = vrot.lane.b32.xlu0 %v1835, 8
        %v1862 = vpop.permute.xlu0 %1861
        %1864 = vrot.lane.b32.xlu0 %v1835, 9
        %v1865 = vpop.permute.xlu0 %1864
        %1867 = vrot.lane.b32.xlu0 %v1835, 10
        %v1868 = vpop.permute.xlu0 %1867
        %1870 = vrot.lane.b32.xlu0 %v1835, 11
        %v1871 = vpop.permute.xlu0 %1870
        %1873 = vrot.lane.b32.xlu0 %v1835, 12
        %v1874 = vpop.permute.xlu0 %1873
        %1876 = vrot.lane.b32.xlu0 %v1835, 13
        %v1877 = vpop.permute.xlu0 %1876
        %1879 = vrot.lane.b32.xlu0 %v1835, 14
        %v1880 = vpop.permute.xlu0 %1879
        %1882 = vrot.lane.b32.xlu0 %v1835, 15
        %v1883 = vpop.permute.xlu0 %1882
        %v1885 = vsel %vm1395, %v1832, %v1840
        %v1886 = vsel %vm1397, %v1885, %v1843
        %v1887 = vsel %vm1399, %v1886, %v1846
        %v1888 = vsel %vm1401, %v1887, %v1849
        %v1889 = vsel %vm1403, %v1888, %v1852
        %v1890 = vsel %vm1405, %v1889, %v1855
        %v1891 = vsel %vm1407, %v1890, %v1858
        %v1892 = vsel %vm1395, %v1862, %v1865
        %v1893 = vsel %vm1397, %v1892, %v1868
        %v1894 = vsel %vm1399, %v1893, %v1871
        %v1895 = vsel %vm1401, %v1894, %v1874
        %v1896 = vsel %vm1403, %v1895, %v1877
        %v1897 = vsel %vm1405, %v1896, %v1880
        %v1898 = vsel %vm1407, %v1897, %v1883
        %1899 = vrot.lane.b32.xlu0 %v1281, 96
        %v1900 = vpop.permute.xlu0 %1899
        %1901 = vrot.lane.b32.xlu0 %v1292, 96
        %v1902 = vpop.permute.xlu0 %1901
        %1905 = vrot.lane.b32.xlu0 %v1891, 113
        %v1906 = vpop.permute.xlu0 %1905
        %1907 = vrot.lane.b32.xlu0 %v1898, 113
        %v1908 = vpop.permute.xlu0 %1907
        %v1912 = vsel %vm1303, %v1900, 0
        %v1915 = vsel %vm1303, %v1902, 0
        %1917 = vmatprep.subr.bf16.mxu0 0
        %1918 = vmatpush1.bf16.xpose.msra.mxu0 %v1915
        %1919 = vmatprep.subr.bf16.mxu0 0
        %1920 = vmatpush1.bf16.xpose.msra.mxu0 0
        %1921 = vmatprep.subr.bf16.mxu0 0
        %1922 = vmatpush1.bf16.xpose.msra.mxu0 0
        %1923 = vmatprep.subr.bf16.mxu0 0
        %1924 = vmatpush1.bf16.xpose.msra.mxu0 0
        %1925 = vmatprep.subr.bf16.mxu0 0
        %1926 = vmatpush1.bf16.xpose.msra.mxu0 0
        %1927 = vmatprep.subr.bf16.mxu0 0
        %1928 = vmatpush1.bf16.xpose.msra.mxu0 0
        %1929 = vmatprep.subr.bf16.mxu0 0
        %1930 = vmatpush1.bf16.xpose.msra.mxu0 0
        %1931 = vmatprep.subr.bf16.mxu0 0
        %1932 = vmatpush1.bf16.xpose.msra.mxu0 0
        %1933 = vmatprep.subr.bf16.mxu0 0
        %1934 = vmatpush1.bf16.xpose.msra.mxu0 0
        %1935 = vmatprep.subr.bf16.mxu0 0
        %1936 = vmatpush1.bf16.xpose.msra.mxu0 0
        %1937 = vmatprep.subr.bf16.mxu0 0
        %1938 = vmatpush1.bf16.xpose.msra.mxu0 0
        %1939 = vmatprep.subr.bf16.mxu0 0
        %1940 = vmatpush1.bf16.xpose.msra.mxu0 0
        %1941 = vmatprep.subr.bf16.mxu0 0
        %1942 = vmatpush1.bf16.xpose.msra.mxu0 0
        %1943 = vmatprep.subr.bf16.mxu0 0
        %1944 = vmatpush1.bf16.xpose.msra.mxu0 0
        %1945 = vmatprep.subr.bf16.mxu0 0
        %1946 = vmatpush1.bf16.xpose.msra.mxu0 0
        %1947 = vmatprep.subr.bf16.mxu0 0
        %1948 = vmatpush1.bf16.xpose.msra.mxu0 0
        %1949 = vmatprep.mubr.bf16.mxu0 0
        %1950 = vmatmul.mubr.bf16.gmra.mrb[0].mxu0 %v1912
        %v1951 = vpop.f32.mrb[0].mxu0
        %v1952 = vadd.f32 %v1906, %v1951
        %v1953 = vpop.f32.mrb[0].mxu0
        %v1954 = vpop.f32.mrb[0].mxu0
        %v1955 = vadd.f32 %v1908, %v1954
        %v1956 = vpop.f32.mrb[0].mxu0
        %1957 = vdwg.mxu0
        %v1958 = vmul.f32 %v1952, 0.25
        %v1959 = vmul.f32 %v1955, 0.25
        %v1960 = vadd.f32 %v1958, %v1477
        %v1961 = vadd.f32 %v1959, %v1477
        %v1962 = vsel %vm1303, %v1960, -inf
        %1963 = vmax.xlane.f32.xlu0 %v1962
        %v1964 = vpop.xlane.xlu0 %1963
        %v1965 = vsel %vm1303, %v1961, -inf
        %1966 = vmax.xlane.f32.xlu0 %v1965
        %v1967 = vpop.xlane.xlu0 %1966
        %v1968 = vsub.f32 %v1960, %v1964
        %v1969 = vsub.f32 %v1961, %v1967
        %v1970 = vmul.f32 %v1968, 1.442695
        %v1971 = vpow.pop %v1970
        %v1972 = vmul.f32 %v1969, 1.442695
        %v1973 = vpow.pop %v1972
        %v1974 = vsel %vm1303, %v1971, 0.0
        %1975 = vadd.xlane.f32.xlu0 %v1974
        %v1976 = vpop.xlane.xlu0 %1975
        %v1977 = vsel %vm1303, %v1973, 0.0
        %1978 = vadd.xlane.f32.xlu0 %v1977
        %v1979 = vpop.xlane.xlu0 %1978
        %v1980 = vrcp.pop %v1976
        %v1981 = vrcp.pop %v1979
        %v1982 = vmul.f32 %v1971, %v1980
        %v1983 = vmul.f32 %v1973, %v1981
        %v1984 = vpack.c.bf16 %v1983, %v1982
        %1985 = vrot.lane.b32.xlu0 %v1293, 96
        %v1986 = vpop.permute.xlu0 %1985
        %v1989 = vsel %vm1303, %v1984, 0
        %1991 = vmatprep.subr.bf16.mxu0 0
        %1992 = vmatpush1.bf16.msra.mxu0 %v1986
        %1993 = vmatprep.subr.bf16.mxu0 0
        %1994 = vmatpush1.bf16.msra.mxu0 0
        %1995 = vmatprep.subr.bf16.mxu0 0
        %1996 = vmatpush1.bf16.msra.mxu0 0
        %1997 = vmatprep.subr.bf16.mxu0 0
        %1998 = vmatpush1.bf16.msra.mxu0 0
        %1999 = vmatprep.subr.bf16.mxu0 0
        %2000 = vmatpush1.bf16.msra.mxu0 0
        %2001 = vmatprep.subr.bf16.mxu0 0
        %2002 = vmatpush1.bf16.msra.mxu0 0
        %2003 = vmatprep.subr.bf16.mxu0 0
        %2004 = vmatpush1.bf16.msra.mxu0 0
        %2005 = vmatprep.subr.bf16.mxu0 0
        %2006 = vmatpush1.bf16.msra.mxu0 0
        %2007 = vmatprep.subr.bf16.mxu0 0
        %2008 = vmatpush1.bf16.msra.mxu0 0
        %2009 = vmatprep.subr.bf16.mxu0 0
        %2010 = vmatpush1.bf16.msra.mxu0 0
        %2011 = vmatprep.subr.bf16.mxu0 0
        %2012 = vmatpush1.bf16.msra.mxu0 0
        %2013 = vmatprep.subr.bf16.mxu0 0
        %2014 = vmatpush1.bf16.msra.mxu0 0
        %2015 = vmatprep.subr.bf16.mxu0 0
        %2016 = vmatpush1.bf16.msra.mxu0 0
        %2017 = vmatprep.subr.bf16.mxu0 0
        %2018 = vmatpush1.bf16.msra.mxu0 0
        %2019 = vmatprep.subr.bf16.mxu0 0
        %2020 = vmatpush1.bf16.msra.mxu0 0
        %2021 = vmatprep.subr.bf16.mxu0 0
        %2022 = vmatpush1.bf16.msra.mxu0 0
        %2023 = vmatprep.mubr.bf16.mxu0 0
        %2024 = vmatmul.mubr.bf16.gmra.mrb[0].mxu0 %v1989
        %v2025 = vpop.f32.mrb[0].mxu0
        %v2026 = vadd.f32 0.0, %v2025
        %v2027 = vpop.f32.mrb[0].mxu0
        %v2028 = vpop.f32.mrb[0].mxu0
        %v2029 = vadd.f32 0.0, %v2028
        %v2030 = vpop.f32.mrb[0].mxu0
        %2031 = vdwg.mxu0
        %2032 = vrot.lane.b32.xlu0 %v1291, 80
        %v2033 = vpop.permute.xlu0 %2032
        %v2035 = vsel %vm1303, %v2033, 0
        %2037 = vmatprep.subr.bf16.mxu0 0
        %2038 = vmatpush1.bf16.msra.mxu0 %v1301
        %2039 = vmatprep.subr.bf16.mxu0 0
        %2040 = vmatpush1.bf16.msra.mxu0 0
        %2041 = vmatprep.subr.bf16.mxu0 0
        %2042 = vmatpush1.bf16.msra.mxu0 0
        %2043 = vmatprep.subr.bf16.mxu0 0
        %2044 = vmatpush1.bf16.msra.mxu0 0
        %2045 = vmatprep.subr.bf16.mxu0 0
        %2046 = vmatpush1.bf16.msra.mxu0 0
        %2047 = vmatprep.subr.bf16.mxu0 0
        %2048 = vmatpush1.bf16.msra.mxu0 0
        %2049 = vmatprep.subr.bf16.mxu0 0
        %2050 = vmatpush1.bf16.msra.mxu0 0
        %2051 = vmatprep.subr.bf16.mxu0 0
        %2052 = vmatpush1.bf16.msra.mxu0 0
        %2053 = vmatprep.subr.bf16.mxu0 0
        %2054 = vmatpush1.bf16.msra.mxu0 0
        %2055 = vmatprep.subr.bf16.mxu0 0
        %2056 = vmatpush1.bf16.msra.mxu0 0
        %2057 = vmatprep.subr.bf16.mxu0 0
        %2058 = vmatpush1.bf16.msra.mxu0 0
        %2059 = vmatprep.subr.bf16.mxu0 0
        %2060 = vmatpush1.bf16.msra.mxu0 0
        %2061 = vmatprep.subr.bf16.mxu0 0
        %2062 = vmatpush1.bf16.msra.mxu0 0
        %2063 = vmatprep.subr.bf16.mxu0 0
        %2064 = vmatpush1.bf16.msra.mxu0 0
        %2065 = vmatprep.subr.bf16.mxu0 0
        %2066 = vmatpush1.bf16.msra.mxu0 0
        %2067 = vmatprep.subr.bf16.mxu0 0
        %2068 = vmatpush1.bf16.msra.mxu0 0
        %2069 = vmatprep.mubr.bf16.mxu0 0
        %2070 = vmatmul.mubr.bf16.gmra.mrb[0].mxu0 %v2035
        %v2071 = vpop.f32.mrb[0].mxu0
        %v2072 = vadd.f32 0.0, %v2071
        %v2073 = vpop.f32.mrb[0].mxu0
        %v2074 = vpop.f32.mrb[0].mxu0
        %v2075 = vadd.f32 0.0, %v2074
        %v2076 = vpop.f32.mrb[0].mxu0
        %2077 = vdwg.mxu0
        %2079 = vrot.lane.b32.xlu0 %v2072, 1
        %v2080 = vpop.permute.xlu0 %2079
        %2082 = vrot.lane.b32.xlu0 %v2072, 2
        %v2083 = vpop.permute.xlu0 %2082
        %2085 = vrot.lane.b32.xlu0 %v2072, 3
        %v2086 = vpop.permute.xlu0 %2085
        %2088 = vrot.lane.b32.xlu0 %v2072, 4
        %v2089 = vpop.permute.xlu0 %2088
        %2091 = vrot.lane.b32.xlu0 %v2072, 5
        %v2092 = vpop.permute.xlu0 %2091
        %2094 = vrot.lane.b32.xlu0 %v2072, 6
        %v2095 = vpop.permute.xlu0 %2094
        %2097 = vrot.lane.b32.xlu0 %v2072, 7
        %v2098 = vpop.permute.xlu0 %2097
        %2101 = vrot.lane.b32.xlu0 %v2075, 8
        %v2102 = vpop.permute.xlu0 %2101
        %2104 = vrot.lane.b32.xlu0 %v2075, 9
        %v2105 = vpop.permute.xlu0 %2104
        %2107 = vrot.lane.b32.xlu0 %v2075, 10
        %v2108 = vpop.permute.xlu0 %2107
        %2110 = vrot.lane.b32.xlu0 %v2075, 11
        %v2111 = vpop.permute.xlu0 %2110
        %2113 = vrot.lane.b32.xlu0 %v2075, 12
        %v2114 = vpop.permute.xlu0 %2113
        %2116 = vrot.lane.b32.xlu0 %v2075, 13
        %v2117 = vpop.permute.xlu0 %2116
        %2119 = vrot.lane.b32.xlu0 %v2075, 14
        %v2120 = vpop.permute.xlu0 %2119
        %2122 = vrot.lane.b32.xlu0 %v2075, 15
        %v2123 = vpop.permute.xlu0 %2122
        %v2125 = vsel %vm1395, %v2072, %v2080
        %v2126 = vsel %vm1397, %v2125, %v2083
        %v2127 = vsel %vm1399, %v2126, %v2086
        %v2128 = vsel %vm1401, %v2127, %v2089
        %v2129 = vsel %vm1403, %v2128, %v2092
        %v2130 = vsel %vm1405, %v2129, %v2095
        %v2131 = vsel %vm1407, %v2130, %v2098
        %v2132 = vsel %vm1395, %v2102, %v2105
        %v2133 = vsel %vm1397, %v2132, %v2108
        %v2134 = vsel %vm1399, %v2133, %v2111
        %v2135 = vsel %vm1401, %v2134, %v2114
        %v2136 = vsel %vm1403, %v2135, %v2117
        %v2137 = vsel %vm1405, %v2136, %v2120
        %v2138 = vsel %vm1407, %v2137, %v2123
        %2139 = vrot.lane.b32.xlu0 %v1281, 80
        %v2140 = vpop.permute.xlu0 %2139
        %2141 = vrot.lane.b32.xlu0 %v1292, 80
        %v2142 = vpop.permute.xlu0 %2141
        %2145 = vrot.lane.b32.xlu0 %v2131, 113
        %v2146 = vpop.permute.xlu0 %2145
        %2147 = vrot.lane.b32.xlu0 %v2138, 113
        %v2148 = vpop.permute.xlu0 %2147
        %v2152 = vsel %vm1303, %v2140, 0
        %v2155 = vsel %vm1303, %v2142, 0
        %2157 = vmatprep.subr.bf16.mxu0 0
        %2158 = vmatpush1.bf16.xpose.msra.mxu0 %v2155
        %2159 = vmatprep.subr.bf16.mxu0 0
        %2160 = vmatpush1.bf16.xpose.msra.mxu0 0
        %2161 = vmatprep.subr.bf16.mxu0 0
        %2162 = vmatpush1.bf16.xpose.msra.mxu0 0
        %2163 = vmatprep.subr.bf16.mxu0 0
        %2164 = vmatpush1.bf16.xpose.msra.mxu0 0
        %2165 = vmatprep.subr.bf16.mxu0 0
        %2166 = vmatpush1.bf16.xpose.msra.mxu0 0
        %2167 = vmatprep.subr.bf16.mxu0 0
        %2168 = vmatpush1.bf16.xpose.msra.mxu0 0
        %2169 = vmatprep.subr.bf16.mxu0 0
        %2170 = vmatpush1.bf16.xpose.msra.mxu0 0
        %2171 = vmatprep.subr.bf16.mxu0 0
        %2172 = vmatpush1.bf16.xpose.msra.mxu0 0
        %2173 = vmatprep.subr.bf16.mxu0 0
        %2174 = vmatpush1.bf16.xpose.msra.mxu0 0
        %2175 = vmatprep.subr.bf16.mxu0 0
        %2176 = vmatpush1.bf16.xpose.msra.mxu0 0
        %2177 = vmatprep.subr.bf16.mxu0 0
        %2178 = vmatpush1.bf16.xpose.msra.mxu0 0
        %2179 = vmatprep.subr.bf16.mxu0 0
        %2180 = vmatpush1.bf16.xpose.msra.mxu0 0
        %2181 = vmatprep.subr.bf16.mxu0 0
        %2182 = vmatpush1.bf16.xpose.msra.mxu0 0
        %2183 = vmatprep.subr.bf16.mxu0 0
        %2184 = vmatpush1.bf16.xpose.msra.mxu0 0
        %2185 = vmatprep.subr.bf16.mxu0 0
        %2186 = vmatpush1.bf16.xpose.msra.mxu0 0
        %2187 = vmatprep.subr.bf16.mxu0 0
        %2188 = vmatpush1.bf16.xpose.msra.mxu0 0
        %2189 = vmatprep.mubr.bf16.mxu0 0
        %2190 = vmatmul.mubr.bf16.gmra.mrb[0].mxu0 %v2152
        %v2191 = vpop.f32.mrb[0].mxu0
        %v2192 = vadd.f32 %v2146, %v2191
        %v2193 = vpop.f32.mrb[0].mxu0
        %v2194 = vpop.f32.mrb[0].mxu0
        %v2195 = vadd.f32 %v2148, %v2194
        %v2196 = vpop.f32.mrb[0].mxu0
        %2197 = vdwg.mxu0
        %v2198 = vmul.f32 %v2192, 0.25
        %v2199 = vmul.f32 %v2195, 0.25
        %v2200 = vadd.f32 %v2198, %v1477
        %v2201 = vadd.f32 %v2199, %v1477
        %v2202 = vsel %vm1303, %v2200, -inf
        %2203 = vmax.xlane.f32.xlu0 %v2202
        %v2204 = vpop.xlane.xlu0 %2203
        %v2205 = vsel %vm1303, %v2201, -inf
        %2206 = vmax.xlane.f32.xlu0 %v2205
        %v2207 = vpop.xlane.xlu0 %2206
        %v2208 = vsub.f32 %v2200, %v2204
        %v2209 = vsub.f32 %v2201, %v2207
        %v2210 = vmul.f32 %v2208, 1.442695
        %v2211 = vpow.pop %v2210
        %v2212 = vmul.f32 %v2209, 1.442695
        %v2213 = vpow.pop %v2212
        %v2214 = vsel %vm1303, %v2211, 0.0
        %2215 = vadd.xlane.f32.xlu0 %v2214
        %v2216 = vpop.xlane.xlu0 %2215
        %v2217 = vsel %vm1303, %v2213, 0.0
        %2218 = vadd.xlane.f32.xlu0 %v2217
        %v2219 = vpop.xlane.xlu0 %2218
        %v2220 = vrcp.pop %v2216
        %v2221 = vrcp.pop %v2219
        %v2222 = vmul.f32 %v2211, %v2220
        %v2223 = vmul.f32 %v2213, %v2221
        %v2224 = vpack.c.bf16 %v2223, %v2222
        %2225 = vrot.lane.b32.xlu0 %v1293, 80
        %v2226 = vpop.permute.xlu0 %2225
        %v2229 = vsel %vm1303, %v2224, 0
        %2231 = vmatprep.subr.bf16.mxu0 0
        %2232 = vmatpush1.bf16.msra.mxu0 %v2226
        %2233 = vmatprep.subr.bf16.mxu0 0
        %2234 = vmatpush1.bf16.msra.mxu0 0
        %2235 = vmatprep.subr.bf16.mxu0 0
        %2236 = vmatpush1.bf16.msra.mxu0 0
        %2237 = vmatprep.subr.bf16.mxu0 0
        %2238 = vmatpush1.bf16.msra.mxu0 0
        %2239 = vmatprep.subr.bf16.mxu0 0
        %2240 = vmatpush1.bf16.msra.mxu0 0
        %2241 = vmatprep.subr.bf16.mxu0 0
        %2242 = vmatpush1.bf16.msra.mxu0 0
        %2243 = vmatprep.subr.bf16.mxu0 0
        %2244 = vmatpush1.bf16.msra.mxu0 0
        %2245 = vmatprep.subr.bf16.mxu0 0
        %2246 = vmatpush1.bf16.msra.mxu0 0
        %2247 = vmatprep.subr.bf16.mxu0 0
        %2248 = vmatpush1.bf16.msra.mxu0 0
        %2249 = vmatprep.subr.bf16.mxu0 0
        %2250 = vmatpush1.bf16.msra.mxu0 0
        %2251 = vmatprep.subr.bf16.mxu0 0
        %2252 = vmatpush1.bf16.msra.mxu0 0
        %2253 = vmatprep.subr.bf16.mxu0 0
        %2254 = vmatpush1.bf16.msra.mxu0 0
        %2255 = vmatprep.subr.bf16.mxu0 0
        %2256 = vmatpush1.bf16.msra.mxu0 0
        %2257 = vmatprep.subr.bf16.mxu0 0
        %2258 = vmatpush1.bf16.msra.mxu0 0
        %2259 = vmatprep.subr.bf16.mxu0 0
        %2260 = vmatpush1.bf16.msra.mxu0 0
        %2261 = vmatprep.subr.bf16.mxu0 0
        %2262 = vmatpush1.bf16.msra.mxu0 0
        %2263 = vmatprep.mubr.bf16.mxu0 0
        %2264 = vmatmul.mubr.bf16.gmra.mrb[0].mxu0 %v2229
        %v2265 = vpop.f32.mrb[0].mxu0
        %v2266 = vadd.f32 0.0, %v2265
        %v2267 = vpop.f32.mrb[0].mxu0
        %v2268 = vpop.f32.mrb[0].mxu0
        %v2269 = vadd.f32 0.0, %v2268
        %v2270 = vpop.f32.mrb[0].mxu0
        %2271 = vdwg.mxu0
        %2272 = vrot.lane.b32.xlu0 %v1291, 64
        %v2273 = vpop.permute.xlu0 %2272
        %v2275 = vsel %vm1303, %v2273, 0
        %2277 = vmatprep.subr.bf16.mxu0 0
        %2278 = vmatpush1.bf16.msra.mxu0 %v1301
        %2279 = vmatprep.subr.bf16.mxu0 0
        %2280 = vmatpush1.bf16.msra.mxu0 0
        %2281 = vmatprep.subr.bf16.mxu0 0
        %2282 = vmatpush1.bf16.msra.mxu0 0
        %2283 = vmatprep.subr.bf16.mxu0 0
        %2284 = vmatpush1.bf16.msra.mxu0 0
        %2285 = vmatprep.subr.bf16.mxu0 0
        %2286 = vmatpush1.bf16.msra.mxu0 0
        %2287 = vmatprep.subr.bf16.mxu0 0
        %2288 = vmatpush1.bf16.msra.mxu0 0
        %2289 = vmatprep.subr.bf16.mxu0 0
        %2290 = vmatpush1.bf16.msra.mxu0 0
        %2291 = vmatprep.subr.bf16.mxu0 0
        %2292 = vmatpush1.bf16.msra.mxu0 0
        %2293 = vmatprep.subr.bf16.mxu0 0
        %2294 = vmatpush1.bf16.msra.mxu0 0
        %2295 = vmatprep.subr.bf16.mxu0 0
        %2296 = vmatpush1.bf16.msra.mxu0 0
        %2297 = vmatprep.subr.bf16.mxu0 0
        %2298 = vmatpush1.bf16.msra.mxu0 0
        %2299 = vmatprep.subr.bf16.mxu0 0
        %2300 = vmatpush1.bf16.msra.mxu0 0
        %2301 = vmatprep.subr.bf16.mxu0 0
        %2302 = vmatpush1.bf16.msra.mxu0 0
        %2303 = vmatprep.subr.bf16.mxu0 0
        %2304 = vmatpush1.bf16.msra.mxu0 0
        %2305 = vmatprep.subr.bf16.mxu0 0
        %2306 = vmatpush1.bf16.msra.mxu0 0
        %2307 = vmatprep.subr.bf16.mxu0 0
        %2308 = vmatpush1.bf16.msra.mxu0 0
        %2309 = vmatprep.mubr.bf16.mxu0 0
        %2310 = vmatmul.mubr.bf16.gmra.mrb[0].mxu0 %v2275
        %v2311 = vpop.f32.mrb[0].mxu0
        %v2312 = vadd.f32 0.0, %v2311
        %v2313 = vpop.f32.mrb[0].mxu0
        %v2314 = vpop.f32.mrb[0].mxu0
        %v2315 = vadd.f32 0.0, %v2314
        %v2316 = vpop.f32.mrb[0].mxu0
        %2317 = vdwg.mxu0
        %2319 = vrot.lane.b32.xlu0 %v2312, 1
        %v2320 = vpop.permute.xlu0 %2319
        %2322 = vrot.lane.b32.xlu0 %v2312, 2
        %v2323 = vpop.permute.xlu0 %2322
        %2325 = vrot.lane.b32.xlu0 %v2312, 3
        %v2326 = vpop.permute.xlu0 %2325
        %2328 = vrot.lane.b32.xlu0 %v2312, 4
        %v2329 = vpop.permute.xlu0 %2328
        %2331 = vrot.lane.b32.xlu0 %v2312, 5
        %v2332 = vpop.permute.xlu0 %2331
        %2334 = vrot.lane.b32.xlu0 %v2312, 6
        %v2335 = vpop.permute.xlu0 %2334
        %2337 = vrot.lane.b32.xlu0 %v2312, 7
        %v2338 = vpop.permute.xlu0 %2337
        %2341 = vrot.lane.b32.xlu0 %v2315, 8
        %v2342 = vpop.permute.xlu0 %2341
        %2344 = vrot.lane.b32.xlu0 %v2315, 9
        %v2345 = vpop.permute.xlu0 %2344
        %2347 = vrot.lane.b32.xlu0 %v2315, 10
        %v2348 = vpop.permute.xlu0 %2347
        %2350 = vrot.lane.b32.xlu0 %v2315, 11
        %v2351 = vpop.permute.xlu0 %2350
        %2353 = vrot.lane.b32.xlu0 %v2315, 12
        %v2354 = vpop.permute.xlu0 %2353
        %2356 = vrot.lane.b32.xlu0 %v2315, 13
        %v2357 = vpop.permute.xlu0 %2356
        %2359 = vrot.lane.b32.xlu0 %v2315, 14
        %v2360 = vpop.permute.xlu0 %2359
        %2362 = vrot.lane.b32.xlu0 %v2315, 15
        %v2363 = vpop.permute.xlu0 %2362
        %v2365 = vsel %vm1395, %v2312, %v2320
        %v2366 = vsel %vm1397, %v2365, %v2323
        %v2367 = vsel %vm1399, %v2366, %v2326
        %v2368 = vsel %vm1401, %v2367, %v2329
        %v2369 = vsel %vm1403, %v2368, %v2332
        %v2370 = vsel %vm1405, %v2369, %v2335
        %v2371 = vsel %vm1407, %v2370, %v2338
        %v2372 = vsel %vm1395, %v2342, %v2345
        %v2373 = vsel %vm1397, %v2372, %v2348
        %v2374 = vsel %vm1399, %v2373, %v2351
        %v2375 = vsel %vm1401, %v2374, %v2354
        %v2376 = vsel %vm1403, %v2375, %v2357
        %v2377 = vsel %vm1405, %v2376, %v2360
        %v2378 = vsel %vm1407, %v2377, %v2363
        %2379 = vrot.lane.b32.xlu0 %v1281, 64
        %v2380 = vpop.permute.xlu0 %2379
        %2381 = vrot.lane.b32.xlu0 %v1292, 64
        %v2382 = vpop.permute.xlu0 %2381
        %2385 = vrot.lane.b32.xlu0 %v2371, 113
        %v2386 = vpop.permute.xlu0 %2385
        %2387 = vrot.lane.b32.xlu0 %v2378, 113
        %v2388 = vpop.permute.xlu0 %2387
        %v2392 = vsel %vm1303, %v2380, 0
        %v2395 = vsel %vm1303, %v2382, 0
        %2397 = vmatprep.subr.bf16.mxu0 0
        %2398 = vmatpush1.bf16.xpose.msra.mxu0 %v2395
        %2399 = vmatprep.subr.bf16.mxu0 0
        %2400 = vmatpush1.bf16.xpose.msra.mxu0 0
        %2401 = vmatprep.subr.bf16.mxu0 0
        %2402 = vmatpush1.bf16.xpose.msra.mxu0 0
        %2403 = vmatprep.subr.bf16.mxu0 0
        %2404 = vmatpush1.bf16.xpose.msra.mxu0 0
        %2405 = vmatprep.subr.bf16.mxu0 0
        %2406 = vmatpush1.bf16.xpose.msra.mxu0 0
        %2407 = vmatprep.subr.bf16.mxu0 0
        %2408 = vmatpush1.bf16.xpose.msra.mxu0 0
        %2409 = vmatprep.subr.bf16.mxu0 0
        %2410 = vmatpush1.bf16.xpose.msra.mxu0 0
        %2411 = vmatprep.subr.bf16.mxu0 0
        %2412 = vmatpush1.bf16.xpose.msra.mxu0 0
        %2413 = vmatprep.subr.bf16.mxu0 0
        %2414 = vmatpush1.bf16.xpose.msra.mxu0 0
        %2415 = vmatprep.subr.bf16.mxu0 0
        %2416 = vmatpush1.bf16.xpose.msra.mxu0 0
        %2417 = vmatprep.subr.bf16.mxu0 0
        %2418 = vmatpush1.bf16.xpose.msra.mxu0 0
        %2419 = vmatprep.subr.bf16.mxu0 0
        %2420 = vmatpush1.bf16.xpose.msra.mxu0 0
        %2421 = vmatprep.subr.bf16.mxu0 0
        %2422 = vmatpush1.bf16.xpose.msra.mxu0 0
        %2423 = vmatprep.subr.bf16.mxu0 0
        %2424 = vmatpush1.bf16.xpose.msra.mxu0 0
        %2425 = vmatprep.subr.bf16.mxu0 0
        %2426 = vmatpush1.bf16.xpose.msra.mxu0 0
        %2427 = vmatprep.subr.bf16.mxu0 0
        %2428 = vmatpush1.bf16.xpose.msra.mxu0 0
        %2429 = vmatprep.mubr.bf16.mxu0 0
        %2430 = vmatmul.mubr.bf16.gmra.mrb[0].mxu0 %v2392
        %v2431 = vpop.f32.mrb[0].mxu0
        %v2432 = vadd.f32 %v2386, %v2431
        %v2433 = vpop.f32.mrb[0].mxu0
        %v2434 = vpop.f32.mrb[0].mxu0
        %v2435 = vadd.f32 %v2388, %v2434
        %v2436 = vpop.f32.mrb[0].mxu0
        %2437 = vdwg.mxu0
        %v2438 = vmul.f32 %v2432, 0.25
        %v2439 = vmul.f32 %v2435, 0.25
        %v2440 = vadd.f32 %v2438, %v1477
        %v2441 = vadd.f32 %v2439, %v1477
        %v2442 = vsel %vm1303, %v2440, -inf
        %2443 = vmax.xlane.f32.xlu0 %v2442
        %v2444 = vpop.xlane.xlu0 %2443
        %v2445 = vsel %vm1303, %v2441, -inf
        %2446 = vmax.xlane.f32.xlu0 %v2445
        %v2447 = vpop.xlane.xlu0 %2446
        %v2448 = vsub.f32 %v2440, %v2444
        %v2449 = vsub.f32 %v2441, %v2447
        %v2450 = vmul.f32 %v2448, 1.442695
        %v2451 = vpow.pop %v2450
        %v2452 = vmul.f32 %v2449, 1.442695
        %v2453 = vpow.pop %v2452
        %v2454 = vsel %vm1303, %v2451, 0.0
        %2455 = vadd.xlane.f32.xlu0 %v2454
        %v2456 = vpop.xlane.xlu0 %2455
        %v2457 = vsel %vm1303, %v2453, 0.0
        %2458 = vadd.xlane.f32.xlu0 %v2457
        %v2459 = vpop.xlane.xlu0 %2458
        %v2460 = vrcp.pop %v2456
        %v2461 = vrcp.pop %v2459
        %v2462 = vmul.f32 %v2451, %v2460
        %v2463 = vmul.f32 %v2453, %v2461
        %v2464 = vpack.c.bf16 %v2463, %v2462
        %2465 = vrot.lane.b32.xlu0 %v1293, 64
        %v2466 = vpop.permute.xlu0 %2465
        %v2469 = vsel %vm1303, %v2464, 0
        %2471 = vmatprep.subr.bf16.mxu0 0
        %2472 = vmatpush1.bf16.msra.mxu0 %v2466
        %2473 = vmatprep.subr.bf16.mxu0 0
        %2474 = vmatpush1.bf16.msra.mxu0 0
        %2475 = vmatprep.subr.bf16.mxu0 0
        %2476 = vmatpush1.bf16.msra.mxu0 0
        %2477 = vmatprep.subr.bf16.mxu0 0
        %2478 = vmatpush1.bf16.msra.mxu0 0
        %2479 = vmatprep.subr.bf16.mxu0 0
        %2480 = vmatpush1.bf16.msra.mxu0 0
        %2481 = vmatprep.subr.bf16.mxu0 0
        %2482 = vmatpush1.bf16.msra.mxu0 0
        %2483 = vmatprep.subr.bf16.mxu0 0
        %2484 = vmatpush1.bf16.msra.mxu0 0
        %2485 = vmatprep.subr.bf16.mxu0 0
        %2486 = vmatpush1.bf16.msra.mxu0 0
        %2487 = vmatprep.subr.bf16.mxu0 0
        %2488 = vmatpush1.bf16.msra.mxu0 0
        %2489 = vmatprep.subr.bf16.mxu0 0
        %2490 = vmatpush1.bf16.msra.mxu0 0
        %2491 = vmatprep.subr.bf16.mxu0 0
        %2492 = vmatpush1.bf16.msra.mxu0 0
        %2493 = vmatprep.subr.bf16.mxu0 0
        %2494 = vmatpush1.bf16.msra.mxu0 0
        %2495 = vmatprep.subr.bf16.mxu0 0
        %2496 = vmatpush1.bf16.msra.mxu0 0
        %2497 = vmatprep.subr.bf16.mxu0 0
        %2498 = vmatpush1.bf16.msra.mxu0 0
        %2499 = vmatprep.subr.bf16.mxu0 0
        %2500 = vmatpush1.bf16.msra.mxu0 0
        %2501 = vmatprep.subr.bf16.mxu0 0
        %2502 = vmatpush1.bf16.msra.mxu0 0
        %2503 = vmatprep.mubr.bf16.mxu0 0
        %2504 = vmatmul.mubr.bf16.gmra.mrb[0].mxu0 %v2469
        %v2505 = vpop.f32.mrb[0].mxu0
        %v2506 = vadd.f32 0.0, %v2505
        %v2507 = vpop.f32.mrb[0].mxu0
        %v2508 = vpop.f32.mrb[0].mxu0
        %v2509 = vadd.f32 0.0, %v2508
        %v2510 = vpop.f32.mrb[0].mxu0
        %2511 = vdwg.mxu0
        %2512 = vrot.lane.b32.xlu0 %v1291, 48
        %v2513 = vpop.permute.xlu0 %2512
        %v2515 = vsel %vm1303, %v2513, 0
        %2517 = vmatprep.subr.bf16.mxu0 0
        %2518 = vmatpush1.bf16.msra.mxu0 %v1301
        %2519 = vmatprep.subr.bf16.mxu0 0
        %2520 = vmatpush1.bf16.msra.mxu0 0
        %2521 = vmatprep.subr.bf16.mxu0 0
        %2522 = vmatpush1.bf16.msra.mxu0 0
        %2523 = vmatprep.subr.bf16.mxu0 0
        %2524 = vmatpush1.bf16.msra.mxu0 0
        %2525 = vmatprep.subr.bf16.mxu0 0
        %2526 = vmatpush1.bf16.msra.mxu0 0
        %2527 = vmatprep.subr.bf16.mxu0 0
        %2528 = vmatpush1.bf16.msra.mxu0 0
        %2529 = vmatprep.subr.bf16.mxu0 0
        %2530 = vmatpush1.bf16.msra.mxu0 0
        %2531 = vmatprep.subr.bf16.mxu0 0
        %2532 = vmatpush1.bf16.msra.mxu0 0
        %2533 = vmatprep.subr.bf16.mxu0 0
        %2534 = vmatpush1.bf16.msra.mxu0 0
        %2535 = vmatprep.subr.bf16.mxu0 0
        %2536 = vmatpush1.bf16.msra.mxu0 0
        %2537 = vmatprep.subr.bf16.mxu0 0
        %2538 = vmatpush1.bf16.msra.mxu0 0
        %2539 = vmatprep.subr.bf16.mxu0 0
        %2540 = vmatpush1.bf16.msra.mxu0 0
        %2541 = vmatprep.subr.bf16.mxu0 0
        %2542 = vmatpush1.bf16.msra.mxu0 0
        %2543 = vmatprep.subr.bf16.mxu0 0
        %2544 = vmatpush1.bf16.msra.mxu0 0
        %2545 = vmatprep.subr.bf16.mxu0 0
        %2546 = vmatpush1.bf16.msra.mxu0 0
        %2547 = vmatprep.subr.bf16.mxu0 0
        %2548 = vmatpush1.bf16.msra.mxu0 0
        %2549 = vmatprep.mubr.bf16.mxu0 0
        %2550 = vmatmul.mubr.bf16.gmra.mrb[0].mxu0 %v2515
        %v2551 = vpop.f32.mrb[0].mxu0
        %v2552 = vadd.f32 0.0, %v2551
        %v2553 = vpop.f32.mrb[0].mxu0
        %v2554 = vpop.f32.mrb[0].mxu0
        %v2555 = vadd.f32 0.0, %v2554
        %v2556 = vpop.f32.mrb[0].mxu0
        %2557 = vdwg.mxu0
        %2559 = vrot.lane.b32.xlu0 %v2552, 1
        %v2560 = vpop.permute.xlu0 %2559
        %2562 = vrot.lane.b32.xlu0 %v2552, 2
        %v2563 = vpop.permute.xlu0 %2562
        %2565 = vrot.lane.b32.xlu0 %v2552, 3
        %v2566 = vpop.permute.xlu0 %2565
        %2568 = vrot.lane.b32.xlu0 %v2552, 4
        %v2569 = vpop.permute.xlu0 %2568
        %2571 = vrot.lane.b32.xlu0 %v2552, 5
        %v2572 = vpop.permute.xlu0 %2571
        %2574 = vrot.lane.b32.xlu0 %v2552, 6
        %v2575 = vpop.permute.xlu0 %2574
        %2577 = vrot.lane.b32.xlu0 %v2552, 7
        %v2578 = vpop.permute.xlu0 %2577
        %2581 = vrot.lane.b32.xlu0 %v2555, 8
        %v2582 = vpop.permute.xlu0 %2581
        %2584 = vrot.lane.b32.xlu0 %v2555, 9
        %v2585 = vpop.permute.xlu0 %2584
        %2587 = vrot.lane.b32.xlu0 %v2555, 10
        %v2588 = vpop.permute.xlu0 %2587
        %2590 = vrot.lane.b32.xlu0 %v2555, 11
        %v2591 = vpop.permute.xlu0 %2590
        %2593 = vrot.lane.b32.xlu0 %v2555, 12
        %v2594 = vpop.permute.xlu0 %2593
        %2596 = vrot.lane.b32.xlu0 %v2555, 13
        %v2597 = vpop.permute.xlu0 %2596
        %2599 = vrot.lane.b32.xlu0 %v2555, 14
        %v2600 = vpop.permute.xlu0 %2599
        %2602 = vrot.lane.b32.xlu0 %v2555, 15
        %v2603 = vpop.permute.xlu0 %2602
        %v2605 = vsel %vm1395, %v2552, %v2560
        %v2606 = vsel %vm1397, %v2605, %v2563
        %v2607 = vsel %vm1399, %v2606, %v2566
        %v2608 = vsel %vm1401, %v2607, %v2569
        %v2609 = vsel %vm1403, %v2608, %v2572
        %v2610 = vsel %vm1405, %v2609, %v2575
        %v2611 = vsel %vm1407, %v2610, %v2578
        %v2612 = vsel %vm1395, %v2582, %v2585
        %v2613 = vsel %vm1397, %v2612, %v2588
        %v2614 = vsel %vm1399, %v2613, %v2591
        %v2615 = vsel %vm1401, %v2614, %v2594
        %v2616 = vsel %vm1403, %v2615, %v2597
        %v2617 = vsel %vm1405, %v2616, %v2600
        %v2618 = vsel %vm1407, %v2617, %v2603
        %2619 = vrot.lane.b32.xlu0 %v1281, 48
        %v2620 = vpop.permute.xlu0 %2619
        %2621 = vrot.lane.b32.xlu0 %v1292, 48
        %v2622 = vpop.permute.xlu0 %2621
        %2625 = vrot.lane.b32.xlu0 %v2611, 113
        %v2626 = vpop.permute.xlu0 %2625
        %2627 = vrot.lane.b32.xlu0 %v2618, 113
        %v2628 = vpop.permute.xlu0 %2627
        %v2632 = vsel %vm1303, %v2620, 0
        %v2635 = vsel %vm1303, %v2622, 0
        %2637 = vmatprep.subr.bf16.mxu0 0
        %2638 = vmatpush1.bf16.xpose.msra.mxu0 %v2635
        %2639 = vmatprep.subr.bf16.mxu0 0
        %2640 = vmatpush1.bf16.xpose.msra.mxu0 0
        %2641 = vmatprep.subr.bf16.mxu0 0
        %2642 = vmatpush1.bf16.xpose.msra.mxu0 0
        %2643 = vmatprep.subr.bf16.mxu0 0
        %2644 = vmatpush1.bf16.xpose.msra.mxu0 0
        %2645 = vmatprep.subr.bf16.mxu0 0
        %2646 = vmatpush1.bf16.xpose.msra.mxu0 0
        %2647 = vmatprep.subr.bf16.mxu0 0
        %2648 = vmatpush1.bf16.xpose.msra.mxu0 0
        %2649 = vmatprep.subr.bf16.mxu0 0
        %2650 = vmatpush1.bf16.xpose.msra.mxu0 0
        %2651 = vmatprep.subr.bf16.mxu0 0
        %2652 = vmatpush1.bf16.xpose.msra.mxu0 0
        %2653 = vmatprep.subr.bf16.mxu0 0
        %2654 = vmatpush1.bf16.xpose.msra.mxu0 0
        %2655 = vmatprep.subr.bf16.mxu0 0
        %2656 = vmatpush1.bf16.xpose.msra.mxu0 0
        %2657 = vmatprep.subr.bf16.mxu0 0
        %2658 = vmatpush1.bf16.xpose.msra.mxu0 0
        %2659 = vmatprep.subr.bf16.mxu0 0
        %2660 = vmatpush1.bf16.xpose.msra.mxu0 0
        %2661 = vmatprep.subr.bf16.mxu0 0
        %2662 = vmatpush1.bf16.xpose.msra.mxu0 0
        %2663 = vmatprep.subr.bf16.mxu0 0
        %2664 = vmatpush1.bf16.xpose.msra.mxu0 0
        %2665 = vmatprep.subr.bf16.mxu0 0
        %2666 = vmatpush1.bf16.xpose.msra.mxu0 0
        %2667 = vmatprep.subr.bf16.mxu0 0
        %2668 = vmatpush1.bf16.xpose.msra.mxu0 0
        %2669 = vmatprep.mubr.bf16.mxu0 0
        %2670 = vmatmul.mubr.bf16.gmra.mrb[0].mxu0 %v2632
        %v2671 = vpop.f32.mrb[0].mxu0
        %v2672 = vadd.f32 %v2626, %v2671
        %v2673 = vpop.f32.mrb[0].mxu0
        %v2674 = vpop.f32.mrb[0].mxu0
        %v2675 = vadd.f32 %v2628, %v2674
        %v2676 = vpop.f32.mrb[0].mxu0
        %2677 = vdwg.mxu0
        %v2678 = vmul.f32 %v2672, 0.25
        %v2679 = vmul.f32 %v2675, 0.25
        %v2680 = vadd.f32 %v2678, %v1477
        %v2681 = vadd.f32 %v2679, %v1477
        %v2682 = vsel %vm1303, %v2680, -inf
        %2683 = vmax.xlane.f32.xlu0 %v2682
        %v2684 = vpop.xlane.xlu0 %2683
        %v2685 = vsel %vm1303, %v2681, -inf
        %2686 = vmax.xlane.f32.xlu0 %v2685
        %v2687 = vpop.xlane.xlu0 %2686
        %v2688 = vsub.f32 %v2680, %v2684
        %v2689 = vsub.f32 %v2681, %v2687
        %v2690 = vmul.f32 %v2688, 1.442695
        %v2691 = vpow.pop %v2690
        %v2692 = vmul.f32 %v2689, 1.442695
        %v2693 = vpow.pop %v2692
        %v2694 = vsel %vm1303, %v2691, 0.0
        %2695 = vadd.xlane.f32.xlu0 %v2694
        %v2696 = vpop.xlane.xlu0 %2695
        %v2697 = vsel %vm1303, %v2693, 0.0
        %2698 = vadd.xlane.f32.xlu0 %v2697
        %v2699 = vpop.xlane.xlu0 %2698
        %v2700 = vrcp.pop %v2696
        %v2701 = vrcp.pop %v2699
        %v2702 = vmul.f32 %v2691, %v2700
        %v2703 = vmul.f32 %v2693, %v2701
        %v2704 = vpack.c.bf16 %v2703, %v2702
        %2705 = vrot.lane.b32.xlu0 %v1293, 48
        %v2706 = vpop.permute.xlu0 %2705
        %v2709 = vsel %vm1303, %v2704, 0
        %2711 = vmatprep.subr.bf16.mxu0 0
        %2712 = vmatpush1.bf16.msra.mxu0 %v2706
        %2713 = vmatprep.subr.bf16.mxu0 0
        %2714 = vmatpush1.bf16.msra.mxu0 0
        %2715 = vmatprep.subr.bf16.mxu0 0
        %2716 = vmatpush1.bf16.msra.mxu0 0
        %2717 = vmatprep.subr.bf16.mxu0 0
        %2718 = vmatpush1.bf16.msra.mxu0 0
        %2719 = vmatprep.subr.bf16.mxu0 0
        %2720 = vmatpush1.bf16.msra.mxu0 0
        %2721 = vmatprep.subr.bf16.mxu0 0
        %2722 = vmatpush1.bf16.msra.mxu0 0
        %2723 = vmatprep.subr.bf16.mxu0 0
        %2724 = vmatpush1.bf16.msra.mxu0 0
        %2725 = vmatprep.subr.bf16.mxu0 0
        %2726 = vmatpush1.bf16.msra.mxu0 0
        %2727 = vmatprep.subr.bf16.mxu0 0
        %2728 = vmatpush1.bf16.msra.mxu0 0
        %2729 = vmatprep.subr.bf16.mxu0 0
        %2730 = vmatpush1.bf16.msra.mxu0 0
        %2731 = vmatprep.subr.bf16.mxu0 0
        %2732 = vmatpush1.bf16.msra.mxu0 0
        %2733 = vmatprep.subr.bf16.mxu0 0
        %2734 = vmatpush1.bf16.msra.mxu0 0
        %2735 = vmatprep.subr.bf16.mxu0 0
        %2736 = vmatpush1.bf16.msra.mxu0 0
        %2737 = vmatprep.subr.bf16.mxu0 0
        %2738 = vmatpush1.bf16.msra.mxu0 0
        %2739 = vmatprep.subr.bf16.mxu0 0
        %2740 = vmatpush1.bf16.msra.mxu0 0
        %2741 = vmatprep.subr.bf16.mxu0 0
        %2742 = vmatpush1.bf16.msra.mxu0 0
        %2743 = vmatprep.mubr.bf16.mxu0 0
        %2744 = vmatmul.mubr.bf16.gmra.mrb[0].mxu0 %v2709
        %v2745 = vpop.f32.mrb[0].mxu0
        %v2746 = vadd.f32 0.0, %v2745
        %v2747 = vpop.f32.mrb[0].mxu0
        %v2748 = vpop.f32.mrb[0].mxu0
        %v2749 = vadd.f32 0.0, %v2748
        %v2750 = vpop.f32.mrb[0].mxu0
        %2751 = vdwg.mxu0
        %2752 = vrot.lane.b32.xlu0 %v1291, 32
        %v2753 = vpop.permute.xlu0 %2752
        %v2755 = vsel %vm1303, %v2753, 0
        %2757 = vmatprep.subr.bf16.mxu0 0
        %2758 = vmatpush1.bf16.msra.mxu0 %v1301
        %2759 = vmatprep.subr.bf16.mxu0 0
        %2760 = vmatpush1.bf16.msra.mxu0 0
        %2761 = vmatprep.subr.bf16.mxu0 0
        %2762 = vmatpush1.bf16.msra.mxu0 0
        %2763 = vmatprep.subr.bf16.mxu0 0
        %2764 = vmatpush1.bf16.msra.mxu0 0
        %2765 = vmatprep.subr.bf16.mxu0 0
        %2766 = vmatpush1.bf16.msra.mxu0 0
        %2767 = vmatprep.subr.bf16.mxu0 0
        %2768 = vmatpush1.bf16.msra.mxu0 0
        %2769 = vmatprep.subr.bf16.mxu0 0
        %2770 = vmatpush1.bf16.msra.mxu0 0
        %2771 = vmatprep.subr.bf16.mxu0 0
        %2772 = vmatpush1.bf16.msra.mxu0 0
        %2773 = vmatprep.subr.bf16.mxu0 0
        %2774 = vmatpush1.bf16.msra.mxu0 0
        %2775 = vmatprep.subr.bf16.mxu0 0
        %2776 = vmatpush1.bf16.msra.mxu0 0
        %2777 = vmatprep.subr.bf16.mxu0 0
        %2778 = vmatpush1.bf16.msra.mxu0 0
        %2779 = vmatprep.subr.bf16.mxu0 0
        %2780 = vmatpush1.bf16.msra.mxu0 0
        %2781 = vmatprep.subr.bf16.mxu0 0
        %2782 = vmatpush1.bf16.msra.mxu0 0
        %2783 = vmatprep.subr.bf16.mxu0 0
        %2784 = vmatpush1.bf16.msra.mxu0 0
        %2785 = vmatprep.subr.bf16.mxu0 0
        %2786 = vmatpush1.bf16.msra.mxu0 0
        %2787 = vmatprep.subr.bf16.mxu0 0
        %2788 = vmatpush1.bf16.msra.mxu0 0
        %2789 = vmatprep.mubr.bf16.mxu0 0
        %2790 = vmatmul.mubr.bf16.gmra.mrb[0].mxu0 %v2755
        %v2791 = vpop.f32.mrb[0].mxu0
        %v2792 = vadd.f32 0.0, %v2791
        %v2793 = vpop.f32.mrb[0].mxu0
        %v2794 = vpop.f32.mrb[0].mxu0
        %v2795 = vadd.f32 0.0, %v2794
        %v2796 = vpop.f32.mrb[0].mxu0
        %2797 = vdwg.mxu0
        %2799 = vrot.lane.b32.xlu0 %v2792, 1
        %v2800 = vpop.permute.xlu0 %2799
        %2802 = vrot.lane.b32.xlu0 %v2792, 2
        %v2803 = vpop.permute.xlu0 %2802
        %2805 = vrot.lane.b32.xlu0 %v2792, 3
        %v2806 = vpop.permute.xlu0 %2805
        %2808 = vrot.lane.b32.xlu0 %v2792, 4
        %v2809 = vpop.permute.xlu0 %2808
        %2811 = vrot.lane.b32.xlu0 %v2792, 5
        %v2812 = vpop.permute.xlu0 %2811
        %2814 = vrot.lane.b32.xlu0 %v2792, 6
        %v2815 = vpop.permute.xlu0 %2814
        %2817 = vrot.lane.b32.xlu0 %v2792, 7
        %v2818 = vpop.permute.xlu0 %2817
        %2821 = vrot.lane.b32.xlu0 %v2795, 8
        %v2822 = vpop.permute.xlu0 %2821
        %2824 = vrot.lane.b32.xlu0 %v2795, 9
        %v2825 = vpop.permute.xlu0 %2824
        %2827 = vrot.lane.b32.xlu0 %v2795, 10
        %v2828 = vpop.permute.xlu0 %2827
        %2830 = vrot.lane.b32.xlu0 %v2795, 11
        %v2831 = vpop.permute.xlu0 %2830
        %2833 = vrot.lane.b32.xlu0 %v2795, 12
        %v2834 = vpop.permute.xlu0 %2833
        %2836 = vrot.lane.b32.xlu0 %v2795, 13
        %v2837 = vpop.permute.xlu0 %2836
        %2839 = vrot.lane.b32.xlu0 %v2795, 14
        %v2840 = vpop.permute.xlu0 %2839
        %2842 = vrot.lane.b32.xlu0 %v2795, 15
        %v2843 = vpop.permute.xlu0 %2842
        %v2845 = vsel %vm1395, %v2792, %v2800
        %v2846 = vsel %vm1397, %v2845, %v2803
        %v2847 = vsel %vm1399, %v2846, %v2806
        %v2848 = vsel %vm1401, %v2847, %v2809
        %v2849 = vsel %vm1403, %v2848, %v2812
        %v2850 = vsel %vm1405, %v2849, %v2815
        %v2851 = vsel %vm1407, %v2850, %v2818
        %v2852 = vsel %vm1395, %v2822, %v2825
        %v2853 = vsel %vm1397, %v2852, %v2828
        %v2854 = vsel %vm1399, %v2853, %v2831
        %v2855 = vsel %vm1401, %v2854, %v2834
        %v2856 = vsel %vm1403, %v2855, %v2837
        %v2857 = vsel %vm1405, %v2856, %v2840
        %v2858 = vsel %vm1407, %v2857, %v2843
        %2859 = vrot.lane.b32.xlu0 %v1281, 32
        %v2860 = vpop.permute.xlu0 %2859
        %2861 = vrot.lane.b32.xlu0 %v1292, 32
        %v2862 = vpop.permute.xlu0 %2861
        %2865 = vrot.lane.b32.xlu0 %v2851, 113
        %v2866 = vpop.permute.xlu0 %2865
        %2867 = vrot.lane.b32.xlu0 %v2858, 113
        %v2868 = vpop.permute.xlu0 %2867
        %v2872 = vsel %vm1303, %v2860, 0
        %v2875 = vsel %vm1303, %v2862, 0
        %2877 = vmatprep.subr.bf16.mxu0 0
        %2878 = vmatpush1.bf16.xpose.msra.mxu0 %v2875
        %2879 = vmatprep.subr.bf16.mxu0 0
        %2880 = vmatpush1.bf16.xpose.msra.mxu0 0
        %2881 = vmatprep.subr.bf16.mxu0 0
        %2882 = vmatpush1.bf16.xpose.msra.mxu0 0
        %2883 = vmatprep.subr.bf16.mxu0 0
        %2884 = vmatpush1.bf16.xpose.msra.mxu0 0
        %2885 = vmatprep.subr.bf16.mxu0 0
        %2886 = vmatpush1.bf16.xpose.msra.mxu0 0
        %2887 = vmatprep.subr.bf16.mxu0 0
        %2888 = vmatpush1.bf16.xpose.msra.mxu0 0
        %2889 = vmatprep.subr.bf16.mxu0 0
        %2890 = vmatpush1.bf16.xpose.msra.mxu0 0
        %2891 = vmatprep.subr.bf16.mxu0 0
        %2892 = vmatpush1.bf16.xpose.msra.mxu0 0
        %2893 = vmatprep.subr.bf16.mxu0 0
        %2894 = vmatpush1.bf16.xpose.msra.mxu0 0
        %2895 = vmatprep.subr.bf16.mxu0 0
        %2896 = vmatpush1.bf16.xpose.msra.mxu0 0
        %2897 = vmatprep.subr.bf16.mxu0 0
        %2898 = vmatpush1.bf16.xpose.msra.mxu0 0
        %2899 = vmatprep.subr.bf16.mxu0 0
        %2900 = vmatpush1.bf16.xpose.msra.mxu0 0
        %2901 = vmatprep.subr.bf16.mxu0 0
        %2902 = vmatpush1.bf16.xpose.msra.mxu0 0
        %2903 = vmatprep.subr.bf16.mxu0 0
        %2904 = vmatpush1.bf16.xpose.msra.mxu0 0
        %2905 = vmatprep.subr.bf16.mxu0 0
        %2906 = vmatpush1.bf16.xpose.msra.mxu0 0
        %2907 = vmatprep.subr.bf16.mxu0 0
        %2908 = vmatpush1.bf16.xpose.msra.mxu0 0
        %2909 = vmatprep.mubr.bf16.mxu0 0
        %2910 = vmatmul.mubr.bf16.gmra.mrb[0].mxu0 %v2872
        %v2911 = vpop.f32.mrb[0].mxu0
        %v2912 = vadd.f32 %v2866, %v2911
        %v2913 = vpop.f32.mrb[0].mxu0
        %v2914 = vpop.f32.mrb[0].mxu0
        %v2915 = vadd.f32 %v2868, %v2914
        %v2916 = vpop.f32.mrb[0].mxu0
        %2917 = vdwg.mxu0
        %v2918 = vmul.f32 %v2912, 0.25
        %v2919 = vmul.f32 %v2915, 0.25
        %v2920 = vadd.f32 %v2918, %v1477
        %v2921 = vadd.f32 %v2919, %v1477
        %v2922 = vsel %vm1303, %v2920, -inf
        %2923 = vmax.xlane.f32.xlu0 %v2922
        %v2924 = vpop.xlane.xlu0 %2923
        %v2925 = vsel %vm1303, %v2921, -inf
        %2926 = vmax.xlane.f32.xlu0 %v2925
        %v2927 = vpop.xlane.xlu0 %2926
        %v2928 = vsub.f32 %v2920, %v2924
        %v2929 = vsub.f32 %v2921, %v2927
        %v2930 = vmul.f32 %v2928, 1.442695
        %v2931 = vpow.pop %v2930
        %v2932 = vmul.f32 %v2929, 1.442695
        %v2933 = vpow.pop %v2932
        %v2934 = vsel %vm1303, %v2931, 0.0
        %2935 = vadd.xlane.f32.xlu0 %v2934
        %v2936 = vpop.xlane.xlu0 %2935
        %v2937 = vsel %vm1303, %v2933, 0.0
        %2938 = vadd.xlane.f32.xlu0 %v2937
        %v2939 = vpop.xlane.xlu0 %2938
        %v2940 = vrcp.pop %v2936
        %v2941 = vrcp.pop %v2939
        %v2942 = vmul.f32 %v2931, %v2940
        %v2943 = vmul.f32 %v2933, %v2941
        %v2944 = vpack.c.bf16 %v2943, %v2942
        %2945 = vrot.lane.b32.xlu0 %v1293, 32
        %v2946 = vpop.permute.xlu0 %2945
        %v2949 = vsel %vm1303, %v2944, 0
        %2951 = vmatprep.subr.bf16.mxu0 0
        %2952 = vmatpush1.bf16.msra.mxu0 %v2946
        %2953 = vmatprep.subr.bf16.mxu0 0
        %2954 = vmatpush1.bf16.msra.mxu0 0
        %2955 = vmatprep.subr.bf16.mxu0 0
        %2956 = vmatpush1.bf16.msra.mxu0 0
        %2957 = vmatprep.subr.bf16.mxu0 0
        %2958 = vmatpush1.bf16.msra.mxu0 0
        %2959 = vmatprep.subr.bf16.mxu0 0
        %2960 = vmatpush1.bf16.msra.mxu0 0
        %2961 = vmatprep.subr.bf16.mxu0 0
        %2962 = vmatpush1.bf16.msra.mxu0 0
        %2963 = vmatprep.subr.bf16.mxu0 0
        %2964 = vmatpush1.bf16.msra.mxu0 0
        %2965 = vmatprep.subr.bf16.mxu0 0
        %2966 = vmatpush1.bf16.msra.mxu0 0
        %2967 = vmatprep.subr.bf16.mxu0 0
        %2968 = vmatpush1.bf16.msra.mxu0 0
        %2969 = vmatprep.subr.bf16.mxu0 0
        %2970 = vmatpush1.bf16.msra.mxu0 0
        %2971 = vmatprep.subr.bf16.mxu0 0
        %2972 = vmatpush1.bf16.msra.mxu0 0
        %2973 = vmatprep.subr.bf16.mxu0 0
        %2974 = vmatpush1.bf16.msra.mxu0 0
        %2975 = vmatprep.subr.bf16.mxu0 0
        %2976 = vmatpush1.bf16.msra.mxu0 0
        %2977 = vmatprep.subr.bf16.mxu0 0
        %2978 = vmatpush1.bf16.msra.mxu0 0
        %2979 = vmatprep.subr.bf16.mxu0 0
        %2980 = vmatpush1.bf16.msra.mxu0 0
        %2981 = vmatprep.subr.bf16.mxu0 0
        %2982 = vmatpush1.bf16.msra.mxu0 0
        %2983 = vmatprep.mubr.bf16.mxu0 0
        %2984 = vmatmul.mubr.bf16.gmra.mrb[0].mxu0 %v2949
        %v2985 = vpop.f32.mrb[0].mxu0
        %v2986 = vadd.f32 0.0, %v2985
        %v2987 = vpop.f32.mrb[0].mxu0
        %v2988 = vpop.f32.mrb[0].mxu0
        %v2989 = vadd.f32 0.0, %v2988
        %v2990 = vpop.f32.mrb[0].mxu0
        %2991 = vdwg.mxu0
        %2992 = vrot.lane.b32.xlu0 %v1291, 16
        %v2993 = vpop.permute.xlu0 %2992
        %v2995 = vsel %vm1303, %v2993, 0
        %2997 = vmatprep.subr.bf16.mxu0 0
        %2998 = vmatpush1.bf16.msra.mxu0 %v1301
        %2999 = vmatprep.subr.bf16.mxu0 0
        %3000 = vmatpush1.bf16.msra.mxu0 0
        %3001 = vmatprep.subr.bf16.mxu0 0
        %3002 = vmatpush1.bf16.msra.mxu0 0
        %3003 = vmatprep.subr.bf16.mxu0 0
        %3004 = vmatpush1.bf16.msra.mxu0 0
        %3005 = vmatprep.subr.bf16.mxu0 0
        %3006 = vmatpush1.bf16.msra.mxu0 0
        %3007 = vmatprep.subr.bf16.mxu0 0
        %3008 = vmatpush1.bf16.msra.mxu0 0
        %3009 = vmatprep.subr.bf16.mxu0 0
        %3010 = vmatpush1.bf16.msra.mxu0 0
        %3011 = vmatprep.subr.bf16.mxu0 0
        %3012 = vmatpush1.bf16.msra.mxu0 0
        %3013 = vmatprep.subr.bf16.mxu0 0
        %3014 = vmatpush1.bf16.msra.mxu0 0
        %3015 = vmatprep.subr.bf16.mxu0 0
        %3016 = vmatpush1.bf16.msra.mxu0 0
        %3017 = vmatprep.subr.bf16.mxu0 0
        %3018 = vmatpush1.bf16.msra.mxu0 0
        %3019 = vmatprep.subr.bf16.mxu0 0
        %3020 = vmatpush1.bf16.msra.mxu0 0
        %3021 = vmatprep.subr.bf16.mxu0 0
        %3022 = vmatpush1.bf16.msra.mxu0 0
        %3023 = vmatprep.subr.bf16.mxu0 0
        %3024 = vmatpush1.bf16.msra.mxu0 0
        %3025 = vmatprep.subr.bf16.mxu0 0
        %3026 = vmatpush1.bf16.msra.mxu0 0
        %3027 = vmatprep.subr.bf16.mxu0 0
        %3028 = vmatpush1.bf16.msra.mxu0 0
        %3029 = vmatprep.mubr.bf16.mxu0 0
        %3030 = vmatmul.mubr.bf16.gmra.mrb[0].mxu0 %v2995
        %v3031 = vpop.f32.mrb[0].mxu0
        %v3032 = vadd.f32 0.0, %v3031
        %v3033 = vpop.f32.mrb[0].mxu0
        %v3034 = vpop.f32.mrb[0].mxu0
        %v3035 = vadd.f32 0.0, %v3034
        %v3036 = vpop.f32.mrb[0].mxu0
        %3037 = vdwg.mxu0
        %3039 = vrot.lane.b32.xlu0 %v3032, 1
        %v3040 = vpop.permute.xlu0 %3039
        %3042 = vrot.lane.b32.xlu0 %v3032, 2
        %v3043 = vpop.permute.xlu0 %3042
        %3045 = vrot.lane.b32.xlu0 %v3032, 3
        %v3046 = vpop.permute.xlu0 %3045
        %3048 = vrot.lane.b32.xlu0 %v3032, 4
        %v3049 = vpop.permute.xlu0 %3048
        %3051 = vrot.lane.b32.xlu0 %v3032, 5
        %v3052 = vpop.permute.xlu0 %3051
        %3054 = vrot.lane.b32.xlu0 %v3032, 6
        %v3055 = vpop.permute.xlu0 %3054
        %3057 = vrot.lane.b32.xlu0 %v3032, 7
        %v3058 = vpop.permute.xlu0 %3057
        %3061 = vrot.lane.b32.xlu0 %v3035, 8
        %v3062 = vpop.permute.xlu0 %3061
        %3064 = vrot.lane.b32.xlu0 %v3035, 9
        %v3065 = vpop.permute.xlu0 %3064
        %3067 = vrot.lane.b32.xlu0 %v3035, 10
        %v3068 = vpop.permute.xlu0 %3067
        %3070 = vrot.lane.b32.xlu0 %v3035, 11
        %v3071 = vpop.permute.xlu0 %3070
        %3073 = vrot.lane.b32.xlu0 %v3035, 12
        %v3074 = vpop.permute.xlu0 %3073
        %3076 = vrot.lane.b32.xlu0 %v3035, 13
        %v3077 = vpop.permute.xlu0 %3076
        %3079 = vrot.lane.b32.xlu0 %v3035, 14
        %v3080 = vpop.permute.xlu0 %3079
        %3082 = vrot.lane.b32.xlu0 %v3035, 15
        %v3083 = vpop.permute.xlu0 %3082
        %v3085 = vsel %vm1395, %v3032, %v3040
        %v3086 = vsel %vm1397, %v3085, %v3043
        %v3087 = vsel %vm1399, %v3086, %v3046
        %v3088 = vsel %vm1401, %v3087, %v3049
        %v3089 = vsel %vm1403, %v3088, %v3052
        %v3090 = vsel %vm1405, %v3089, %v3055
        %v3091 = vsel %vm1407, %v3090, %v3058
        %v3092 = vsel %vm1395, %v3062, %v3065
        %v3093 = vsel %vm1397, %v3092, %v3068
        %v3094 = vsel %vm1399, %v3093, %v3071
        %v3095 = vsel %vm1401, %v3094, %v3074
        %v3096 = vsel %vm1403, %v3095, %v3077
        %v3097 = vsel %vm1405, %v3096, %v3080
        %v3098 = vsel %vm1407, %v3097, %v3083
        %3099 = vrot.lane.b32.xlu0 %v1281, 16
        %v3100 = vpop.permute.xlu0 %3099
        %3101 = vrot.lane.b32.xlu0 %v1292, 16
        %v3102 = vpop.permute.xlu0 %3101
        %3105 = vrot.lane.b32.xlu0 %v3091, 113
        %v3106 = vpop.permute.xlu0 %3105
        %3107 = vrot.lane.b32.xlu0 %v3098, 113
        %v3108 = vpop.permute.xlu0 %3107
        %v3112 = vsel %vm1303, %v3100, 0
        %v3115 = vsel %vm1303, %v3102, 0
        %3117 = vmatprep.subr.bf16.mxu0 0
        %3118 = vmatpush1.bf16.xpose.msra.mxu0 %v3115
        %3119 = vmatprep.subr.bf16.mxu0 0
        %3120 = vmatpush1.bf16.xpose.msra.mxu0 0
        %3121 = vmatprep.subr.bf16.mxu0 0
        %3122 = vmatpush1.bf16.xpose.msra.mxu0 0
        %3123 = vmatprep.subr.bf16.mxu0 0
        %3124 = vmatpush1.bf16.xpose.msra.mxu0 0
        %3125 = vmatprep.subr.bf16.mxu0 0
        %3126 = vmatpush1.bf16.xpose.msra.mxu0 0
        %3127 = vmatprep.subr.bf16.mxu0 0
        %3128 = vmatpush1.bf16.xpose.msra.mxu0 0
        %3129 = vmatprep.subr.bf16.mxu0 0
        %3130 = vmatpush1.bf16.xpose.msra.mxu0 0
        %3131 = vmatprep.subr.bf16.mxu0 0
        %3132 = vmatpush1.bf16.xpose.msra.mxu0 0
        %3133 = vmatprep.subr.bf16.mxu0 0
        %3134 = vmatpush1.bf16.xpose.msra.mxu0 0
        %3135 = vmatprep.subr.bf16.mxu0 0
        %3136 = vmatpush1.bf16.xpose.msra.mxu0 0
        %3137 = vmatprep.subr.bf16.mxu0 0
        %3138 = vmatpush1.bf16.xpose.msra.mxu0 0
        %3139 = vmatprep.subr.bf16.mxu0 0
        %3140 = vmatpush1.bf16.xpose.msra.mxu0 0
        %3141 = vmatprep.subr.bf16.mxu0 0
        %3142 = vmatpush1.bf16.xpose.msra.mxu0 0
        %3143 = vmatprep.subr.bf16.mxu0 0
        %3144 = vmatpush1.bf16.xpose.msra.mxu0 0
        %3145 = vmatprep.subr.bf16.mxu0 0
        %3146 = vmatpush1.bf16.xpose.msra.mxu0 0
        %3147 = vmatprep.subr.bf16.mxu0 0
        %3148 = vmatpush1.bf16.xpose.msra.mxu0 0
        %3149 = vmatprep.mubr.bf16.mxu0 0
        %3150 = vmatmul.mubr.bf16.gmra.mrb[0].mxu0 %v3112
        %v3151 = vpop.f32.mrb[0].mxu0
        %v3152 = vadd.f32 %v3106, %v3151
        %v3153 = vpop.f32.mrb[0].mxu0
        %v3154 = vpop.f32.mrb[0].mxu0
        %v3155 = vadd.f32 %v3108, %v3154
        %v3156 = vpop.f32.mrb[0].mxu0
        %3157 = vdwg.mxu0
        %v3158 = vmul.f32 %v3152, 0.25
        %v3159 = vmul.f32 %v3155, 0.25
        %v3160 = vadd.f32 %v3158, %v1477
        %v3161 = vadd.f32 %v3159, %v1477
        %v3162 = vsel %vm1303, %v3160, -inf
        %3163 = vmax.xlane.f32.xlu0 %v3162
        %v3164 = vpop.xlane.xlu0 %3163
        %v3165 = vsel %vm1303, %v3161, -inf
        %3166 = vmax.xlane.f32.xlu0 %v3165
        %v3167 = vpop.xlane.xlu0 %3166
        %v3168 = vsub.f32 %v3160, %v3164
        %v3169 = vsub.f32 %v3161, %v3167
        %v3170 = vmul.f32 %v3168, 1.442695
        %v3171 = vpow.pop %v3170
        %v3172 = vmul.f32 %v3169, 1.442695
        %v3173 = vpow.pop %v3172
        %v3174 = vsel %vm1303, %v3171, 0.0
        %3175 = vadd.xlane.f32.xlu0 %v3174
        %v3176 = vpop.xlane.xlu0 %3175
        %v3177 = vsel %vm1303, %v3173, 0.0
        %3178 = vadd.xlane.f32.xlu0 %v3177
        %v3179 = vpop.xlane.xlu0 %3178
        %v3180 = vrcp.pop %v3176
        %v3181 = vrcp.pop %v3179
        %v3182 = vmul.f32 %v3171, %v3180
        %v3183 = vmul.f32 %v3173, %v3181
        %v3184 = vpack.c.bf16 %v3183, %v3182
        %3185 = vrot.lane.b32.xlu0 %v1293, 16
        %v3186 = vpop.permute.xlu0 %3185
        %v3189 = vsel %vm1303, %v3184, 0
        %3191 = vmatprep.subr.bf16.mxu0 0
        %3192 = vmatpush1.bf16.msra.mxu0 %v3186
        %3193 = vmatprep.subr.bf16.mxu0 0
        %3194 = vmatpush1.bf16.msra.mxu0 0
        %3195 = vmatprep.subr.bf16.mxu0 0
        %3196 = vmatpush1.bf16.msra.mxu0 0
        %3197 = vmatprep.subr.bf16.mxu0 0
        %3198 = vmatpush1.bf16.msra.mxu0 0
        %3199 = vmatprep.subr.bf16.mxu0 0
        %3200 = vmatpush1.bf16.msra.mxu0 0
        %3201 = vmatprep.subr.bf16.mxu0 0
        %3202 = vmatpush1.bf16.msra.mxu0 0
        %3203 = vmatprep.subr.bf16.mxu0 0
        %3204 = vmatpush1.bf16.msra.mxu0 0
        %3205 = vmatprep.subr.bf16.mxu0 0
        %3206 = vmatpush1.bf16.msra.mxu0 0
        %3207 = vmatprep.subr.bf16.mxu0 0
        %3208 = vmatpush1.bf16.msra.mxu0 0
        %3209 = vmatprep.subr.bf16.mxu0 0
        %3210 = vmatpush1.bf16.msra.mxu0 0
        %3211 = vmatprep.subr.bf16.mxu0 0
        %3212 = vmatpush1.bf16.msra.mxu0 0
        %3213 = vmatprep.subr.bf16.mxu0 0
        %3214 = vmatpush1.bf16.msra.mxu0 0
        %3215 = vmatprep.subr.bf16.mxu0 0
        %3216 = vmatpush1.bf16.msra.mxu0 0
        %3217 = vmatprep.subr.bf16.mxu0 0
        %3218 = vmatpush1.bf16.msra.mxu0 0
        %3219 = vmatprep.subr.bf16.mxu0 0
        %3220 = vmatpush1.bf16.msra.mxu0 0
        %3221 = vmatprep.subr.bf16.mxu0 0
        %3222 = vmatpush1.bf16.msra.mxu0 0
        %3223 = vmatprep.mubr.bf16.mxu0 0
        %3224 = vmatmul.mubr.bf16.gmra.mrb[0].mxu0 %v3189
        %v3225 = vpop.f32.mrb[0].mxu0
        %v3226 = vadd.f32 0.0, %v3225
        %v3227 = vpop.f32.mrb[0].mxu0
        %v3228 = vpop.f32.mrb[0].mxu0
        %v3229 = vadd.f32 0.0, %v3228
        %v3230 = vpop.f32.mrb[0].mxu0
        %3231 = vdwg.mxu0
        %3234 = vrot.lane.b32.xlu0 %v1786, 16
        %v3235 = vpop.permute.xlu0 %3234
        %3236 = vrot.lane.b32.xlu0 %v1789, 16
        %v3237 = vpop.permute.xlu0 %3236
        %3242 = vrot.lane.b32.xlu0 %v2026, 32
        %v3243 = vpop.permute.xlu0 %3242
        %3244 = vrot.lane.b32.xlu0 %v2029, 32
        %v3245 = vpop.permute.xlu0 %3244
        %3250 = vrot.lane.b32.xlu0 %v2266, 48
        %v3251 = vpop.permute.xlu0 %3250
        %3252 = vrot.lane.b32.xlu0 %v2269, 48
        %v3253 = vpop.permute.xlu0 %3252
        %3258 = vrot.lane.b32.xlu0 %v2506, 64
        %v3259 = vpop.permute.xlu0 %3258
        %3260 = vrot.lane.b32.xlu0 %v2509, 64
        %v3261 = vpop.permute.xlu0 %3260
        %3266 = vrot.lane.b32.xlu0 %v2746, 80
        %v3267 = vpop.permute.xlu0 %3266
        %3268 = vrot.lane.b32.xlu0 %v2749, 80
        %v3269 = vpop.permute.xlu0 %3268
        %3274 = vrot.lane.b32.xlu0 %v2986, 96
        %v3275 = vpop.permute.xlu0 %3274
        %3276 = vrot.lane.b32.xlu0 %v2989, 96
        %v3277 = vpop.permute.xlu0 %3276
        %3282 = vrot.lane.b32.xlu0 %v3226, 112
        %v3283 = vpop.permute.xlu0 %3282
        %3284 = vrot.lane.b32.xlu0 %v3229, 112
        %v3285 = vpop.permute.xlu0 %3284
        %v3288 = vsel %vm1303, %v1542, %v3235
        %v3289 = vsel %vm1303, %v1545, %v3237
        %vm3290 = vcmask 261120
        %v3291 = vsel %vm3290, %v3288, %v3243
        %v3292 = vsel %vm3290, %v3289, %v3245
        %vm3293 = vcmask 392192
        %v3294 = vsel %vm3293, %v3291, %v3251
        %v3295 = vsel %vm3293, %v3292, %v3253
        %vm3296 = vcmask 523264
        %v3297 = vsel %vm3296, %v3294, %v3259
        %v3298 = vsel %vm3296, %v3295, %v3261
        %vm3299 = vcmask 654336
        %v3300 = vsel %vm3299, %v3297, %v3267
        %v3301 = vsel %vm3299, %v3298, %v3269
        %vm3302 = vcmask 785408
        %v3303 = vsel %vm3302, %v3300, %v3275
        %v3304 = vsel %vm3302, %v3301, %v3277
        %vm3305 = vcmask 916480
        %v3306 = vsel %vm3305, %v3303, %v3283
        %v3307 = vsel %vm3305, %v3304, %v3285
        %v3308 = vpack.c.bf16 %v3307, %v3306
        %v3309 = vld [vmem:[%s790] sm:$0xf]
        %v3310 = vld [vmem:[%s790 + $0x4] sm:$0xf]
        %v3311 = vld [vmem:[%s790 + $0x8] sm:$0xf]
        %v3312 = vld [vmem:[%s790 + $0xc] sm:$0xf]
        %v3313 = vld [vmem:[%s790 + $0x10] sm:$0xf]
        %v3314 = vld [vmem:[%s790 + $0x14] sm:$0xf]
        %v3315 = vld [vmem:[%s790 + $0x18] sm:$0xf]
        %v3316 = vld [vmem:[%s790 + $0x1c] sm:$0xf]
        %v3317 = vld [vmem:[%s790 + $0x20] sm:$0xf]
        %v3318 = vld [vmem:[%s790 + $0x24] sm:$0xf]
        %v3319 = vld [vmem:[%s790 + $0x28] sm:$0xf]
        %v3320 = vld [vmem:[%s790 + $0x2c] sm:$0xf]
        %v3321 = vld [vmem:[%s790 + $0x30] sm:$0xf]
        %v3322 = vld [vmem:[%s790 + $0x34] sm:$0xf]
        %v3323 = vld [vmem:[%s790 + $0x38] sm:$0xf]
        %v3324 = vld [vmem:[%s790 + $0x3c] sm:$0xf]
        %v3341 = vunpack.c.l.b16 %v3309
        %v3342 = vunpack.c.l.b16 %v3310
        %v3343 = vunpack.c.l.b16 %v3311
        %v3344 = vunpack.c.l.b16 %v3312
        %v3345 = vunpack.c.l.b16 %v3313
        %v3346 = vunpack.c.l.b16 %v3314
        %v3347 = vunpack.c.l.b16 %v3315
        %v3348 = vunpack.c.l.b16 %v3316
        %v3349 = vunpack.c.l.b16 %v3317
        %v3350 = vunpack.c.l.b16 %v3318
        %v3351 = vunpack.c.l.b16 %v3319
        %v3352 = vunpack.c.l.b16 %v3320
        %v3353 = vunpack.c.l.b16 %v3321
        %v3354 = vunpack.c.l.b16 %v3322
        %v3355 = vunpack.c.l.b16 %v3323
        %v3356 = vunpack.c.l.b16 %v3324
        %v3357 = vpack.c.b16 %v3342, %v3341
        %v3358 = vpack.c.b16 %v3344, %v3343
        %v3359 = vpack.c.b16 %v3346, %v3345
        %v3360 = vpack.c.b16 %v3348, %v3347
        %v3361 = vpack.c.b16 %v3350, %v3349
        %v3362 = vpack.c.b16 %v3352, %v3351
        %v3363 = vpack.c.b16 %v3354, %v3353
        %v3364 = vpack.c.b16 %v3356, %v3355
        %3373 = vmatprep.subr.bf16.mxu0 0
        %3374 = vmatpush1.bf16.msra.mxu0 %v3357
        %3375 = vmatprep.subr.bf16.mxu0 0
        %3376 = vmatpush1.bf16.msra.mxu0 %v3358
        %3377 = vmatprep.subr.bf16.mxu0 0
        %3378 = vmatpush1.bf16.msra.mxu0 %v3359
        %3379 = vmatprep.subr.bf16.mxu0 0
        %3380 = vmatpush1.bf16.msra.mxu0 %v3360
        %3381 = vmatprep.subr.bf16.mxu0 0
        %3382 = vmatpush1.bf16.msra.mxu0 %v3361
        %3383 = vmatprep.subr.bf16.mxu0 0
        %3384 = vmatpush1.bf16.msra.mxu0 %v3362
        %3385 = vmatprep.subr.bf16.mxu0 0
        %3386 = vmatpush1.bf16.msra.mxu0 %v3363
        %3387 = vmatprep.subr.bf16.mxu0 0
        %3388 = vmatpush1.bf16.msra.mxu0 %v3364
        %3389 = vmatprep.subr.bf16.mxu0 0
        %3390 = vmatpush1.bf16.msra.mxu0 0
        %3391 = vmatprep.subr.bf16.mxu0 0
        %3392 = vmatpush1.bf16.msra.mxu0 0
        %3393 = vmatprep.subr.bf16.mxu0 0
        %3394 = vmatpush1.bf16.msra.mxu0 0
        %3395 = vmatprep.subr.bf16.mxu0 0
        %3396 = vmatpush1.bf16.msra.mxu0 0
        %3397 = vmatprep.subr.bf16.mxu0 0
        %3398 = vmatpush1.bf16.msra.mxu0 0
        %3399 = vmatprep.subr.bf16.mxu0 0
        %3400 = vmatpush1.bf16.msra.mxu0 0
        %3401 = vmatprep.subr.bf16.mxu0 0
        %3402 = vmatpush1.bf16.msra.mxu0 0
        %3403 = vmatprep.subr.bf16.mxu0 0
        %3404 = vmatpush1.bf16.msra.mxu0 0
        %3405 = vmatprep.mubr.bf16.mxu0 0
        %3406 = vmatmul.mubr.bf16.gmra.mrb[0].mxu0 %v3308
        %v3407 = vpop.f32.mrb[0].mxu0
        %v3408 = vadd.f32 0.0, %v3407
        %v3409 = vpop.f32.mrb[0].mxu0
        %v3410 = vpop.f32.mrb[0].mxu0
        %v3411 = vadd.f32 0.0, %v3410
        %v3412 = vpop.f32.mrb[0].mxu0
        %3413 = vdwg.mxu0
        %v3414 = vadd.f32 %v954, %v3408
        %v3415 = vadd.f32 %v955, %v3411
        %v3416 = vld [vmem:[%s928] sm:$0x1]
        %v3417 = vld [vmem:[%s931] sm:$0x1]
        %3418 = vadd.xlane.f32.xlu0 %v3414
        %v3419 = vpop.xlane.xlu0 %3418
        %3420 = vadd.xlane.f32.xlu0 %v3415
        %v3421 = vpop.xlane.xlu0 %3420
        %v3422 = vrcp.pop 128.0
        %v3423 = vmul.f32 %v3419, %v3422
        %v3424 = vmul.f32 %v3421, %v3422
        %v3425 = vsub.f32 %v3414, %v3423
        %v3426 = vsub.f32 %v3415, %v3424
        %v3427 = vmul.f32 %v3425, %v3425
        %v3428 = vmul.f32 %v3426, %v3426
        %3429 = vadd.xlane.f32.xlu0 %v3427
        %v3430 = vpop.xlane.xlu0 %3429
        %3431 = vadd.xlane.f32.xlu0 %v3428
        %v3432 = vpop.xlane.xlu0 %3431
        %v3433 = vmul.f32 %v3430, %v3422
        %v3434 = vmul.f32 %v3432, %v3422
        %v3435 = vadd.f32 %v3433, 1e-05
        %v3436 = vadd.f32 %v3434, 1e-05
        %v3437 = vrsqrt.pop %v3435
        %v3438 = vrsqrt.pop %v3436
        %v3439 = vmul.f32 %v3425, %v3437
        %v3440 = vmul.f32 %v3426, %v3438
        %v3442 = vlaneseq
        %v3443 = vshrl.u32 %v3442, 7
        %v3444 = vsub.s32 0, %v3443
        %v3445 = vrot.slane %v3416, %v3444
        %v3447 = vmul.f32 %v3439, %v3445
        %v3448 = vmul.f32 %v3440, %v3445
        %v3450 = vlaneseq
        %v3451 = vshrl.u32 %v3450, 7
        %v3452 = vsub.s32 0, %v3451
        %v3453 = vrot.slane %v3417, %v3452
        %v3455 = vadd.f32 %v3447, %v3453
        %v3456 = vadd.f32 %v3448, %v3453
        %v3457 = vpack.c.bf16 %v3456, %v3455
        %v3458 = vld [vmem:[%s799] sm:$0xff]
        %v3459 = vld [vmem:[%s799 + $0x8] sm:$0xff]
        %v3460 = vld [vmem:[%s799 + $0x10] sm:$0xff]
        %v3461 = vld [vmem:[%s799 + $0x18] sm:$0xff]
        %v3462 = vld [vmem:[%s799 + $0x20] sm:$0xff]
        %v3463 = vld [vmem:[%s799 + $0x28] sm:$0xff]
        %v3464 = vld [vmem:[%s799 + $0x30] sm:$0xff]
        %v3465 = vld [vmem:[%s799 + $0x38] sm:$0xff]
        %v3466 = vld [vmem:[%s799 + $0x40] sm:$0xff]
        %v3467 = vld [vmem:[%s799 + $0x48] sm:$0xff]
        %v3468 = vld [vmem:[%s799 + $0x50] sm:$0xff]
        %v3469 = vld [vmem:[%s799 + $0x58] sm:$0xff]
        %v3470 = vld [vmem:[%s799 + $0x60] sm:$0xff]
        %v3471 = vld [vmem:[%s799 + $0x68] sm:$0xff]
        %v3472 = vld [vmem:[%s799 + $0x70] sm:$0xff]
        %v3473 = vld [vmem:[%s799 + $0x78] sm:$0xff]
        %v3474 = vld [vmem:[%s935] sm:$0x3]
        %v3476 = vlaneseq
        %v3477 = vshrl.u32 %v3476, 7
        %v3478 = vsub.s32 0, %v3477
        %v3479 = vrot.slane %v3474, %v3478
        %v3480 = vlaneseq
        %v3481 = vshrl.u32 %v3480, 7
        %v3482 = vsub.s32 1, %v3481
        %v3483 = vrot.slane %v3474, %v3482
        %v3502 = vunpack.c.l.b16 %v3458
        %v3503 = vunpack.c.h.b16 %v3458
        %v3504 = vunpack.c.l.b16 %v3459
        %v3505 = vunpack.c.h.b16 %v3459
        %v3506 = vunpack.c.l.b16 %v3460
        %v3507 = vunpack.c.h.b16 %v3460
        %v3508 = vunpack.c.l.b16 %v3461
        %v3509 = vunpack.c.h.b16 %v3461
        %v3510 = vunpack.c.l.b16 %v3462
        %v3511 = vunpack.c.h.b16 %v3462
        %v3512 = vunpack.c.l.b16 %v3463
        %v3513 = vunpack.c.h.b16 %v3463
        %v3514 = vunpack.c.l.b16 %v3464
        %v3515 = vunpack.c.h.b16 %v3464
        %v3516 = vunpack.c.l.b16 %v3465
        %v3517 = vunpack.c.h.b16 %v3465
        %v3518 = vunpack.c.l.b16 %v3466
        %v3519 = vunpack.c.h.b16 %v3466
        %v3520 = vunpack.c.l.b16 %v3467
        %v3521 = vunpack.c.h.b16 %v3467
        %v3522 = vunpack.c.l.b16 %v3468
        %v3523 = vunpack.c.h.b16 %v3468
        %v3524 = vunpack.c.l.b16 %v3469
        %v3525 = vunpack.c.h.b16 %v3469
        %v3526 = vunpack.c.l.b16 %v3470
        %v3527 = vunpack.c.h.b16 %v3470
        %v3528 = vunpack.c.l.b16 %v3471
        %v3529 = vunpack.c.h.b16 %v3471
        %v3530 = vunpack.c.l.b16 %v3472
        %v3531 = vunpack.c.h.b16 %v3472
        %v3532 = vunpack.c.l.b16 %v3473
        %v3533 = vunpack.c.h.b16 %v3473
        %v3534 = vpack.c.b16 %v3504, %v3502
        %v3535 = vpack.c.b16 %v3505, %v3503
        %v3536 = vpack.c.b16 %v3508, %v3506
        %v3537 = vpack.c.b16 %v3509, %v3507
        %v3538 = vpack.c.b16 %v3512, %v3510
        %v3539 = vpack.c.b16 %v3513, %v3511
        %v3540 = vpack.c.b16 %v3516, %v3514
        %v3541 = vpack.c.b16 %v3517, %v3515
        %v3542 = vpack.c.b16 %v3520, %v3518
        %v3543 = vpack.c.b16 %v3521, %v3519
        %v3544 = vpack.c.b16 %v3524, %v3522
        %v3545 = vpack.c.b16 %v3525, %v3523
        %v3546 = vpack.c.b16 %v3528, %v3526
        %v3547 = vpack.c.b16 %v3529, %v3527
        %v3548 = vpack.c.b16 %v3532, %v3530
        %v3549 = vpack.c.b16 %v3533, %v3531
        %3566 = vmatprep.subr.bf16.mxu0 %v3535
        %3567 = vmatpush1.bf16.msra.mxu0 %v3534
        %3568 = vmatprep.subr.bf16.mxu0 %v3537
        %3569 = vmatpush1.bf16.msra.mxu0 %v3536
        %3570 = vmatprep.subr.bf16.mxu0 %v3539
        %3571 = vmatpush1.bf16.msra.mxu0 %v3538
        %3572 = vmatprep.subr.bf16.mxu0 %v3541
        %3573 = vmatpush1.bf16.msra.mxu0 %v3540
        %3574 = vmatprep.subr.bf16.mxu0 %v3543
        %3575 = vmatpush1.bf16.msra.mxu0 %v3542
        %3576 = vmatprep.subr.bf16.mxu0 %v3545
        %3577 = vmatpush1.bf16.msra.mxu0 %v3544
        %3578 = vmatprep.subr.bf16.mxu0 %v3547
        %3579 = vmatpush1.bf16.msra.mxu0 %v3546
        %3580 = vmatprep.subr.bf16.mxu0 %v3549
        %3581 = vmatpush1.bf16.msra.mxu0 %v3548
        %3582 = vmatprep.subr.bf16.mxu0 0
        %3583 = vmatpush1.bf16.msra.mxu0 0
        %3584 = vmatprep.subr.bf16.mxu0 0
        %3585 = vmatpush1.bf16.msra.mxu0 0
        %3586 = vmatprep.subr.bf16.mxu0 0
        %3587 = vmatpush1.bf16.msra.mxu0 0
        %3588 = vmatprep.subr.bf16.mxu0 0
        %3589 = vmatpush1.bf16.msra.mxu0 0
        %3590 = vmatprep.subr.bf16.mxu0 0
        %3591 = vmatpush1.bf16.msra.mxu0 0
        %3592 = vmatprep.subr.bf16.mxu0 0
        %3593 = vmatpush1.bf16.msra.mxu0 0
        %3594 = vmatprep.subr.bf16.mxu0 0
        %3595 = vmatpush1.bf16.msra.mxu0 0
        %3596 = vmatprep.subr.bf16.mxu0 0
        %3597 = vmatpush1.bf16.msra.mxu0 0
        %3598 = vmatprep.mubr.bf16.mxu0 0
        %3599 = vmatmul.mubr.bf16.gmra.mrb[0].mxu0 %v3457
        %v3600 = vpop.f32.mrb[0].mxu0
        %v3601 = vadd.f32 %v3479, %v3600
        %v3602 = vpop.f32.mrb[0].mxu0
        %v3603 = vadd.f32 %v3483, %v3602
        %v3604 = vpop.f32.mrb[0].mxu0
        %v3605 = vadd.f32 %v3479, %v3604
        %v3606 = vpop.f32.mrb[0].mxu0
        %v3607 = vadd.f32 %v3483, %v3606
        %3608 = vdwg.mxu0
        %v3609 = vmax.f32 %v3601, 0.0
        %v3610 = vmax.f32 %v3603, 0.0
        %v3611 = vmax.f32 %v3605, 0.0
        %v3612 = vmax.f32 %v3607, 0.0
        %v3613 = vpack.c.bf16 %v3611, %v3609
        %v3614 = vpack.c.bf16 %v3612, %v3610
        %v3615 = vld [vmem:[%s808] sm:$0xf]
        %v3616 = vld [vmem:[%s808 + $0x4] sm:$0xf]
        %v3617 = vld [vmem:[%s808 + $0x8] sm:$0xf]
        %v3618 = vld [vmem:[%s808 + $0xc] sm:$0xf]
        %v3619 = vld [vmem:[%s808 + $0x10] sm:$0xf]
        %v3620 = vld [vmem:[%s808 + $0x14] sm:$0xf]
        %v3621 = vld [vmem:[%s808 + $0x18] sm:$0xf]
        %v3622 = vld [vmem:[%s808 + $0x1c] sm:$0xf]
        %v3623 = vld [vmem:[%s808 + $0x20] sm:$0xf]
        %v3624 = vld [vmem:[%s808 + $0x24] sm:$0xf]
        %v3625 = vld [vmem:[%s808 + $0x28] sm:$0xf]
        %v3626 = vld [vmem:[%s808 + $0x2c] sm:$0xf]
        %v3627 = vld [vmem:[%s808 + $0x30] sm:$0xf]
        %v3628 = vld [vmem:[%s808 + $0x34] sm:$0xf]
        %v3629 = vld [vmem:[%s808 + $0x38] sm:$0xf]
        %v3630 = vld [vmem:[%s808 + $0x3c] sm:$0xf]
        %v3631 = vld [vmem:[%s808 + $0x40] sm:$0xf]
        %v3632 = vld [vmem:[%s808 + $0x44] sm:$0xf]
        %v3633 = vld [vmem:[%s808 + $0x48] sm:$0xf]
        %v3634 = vld [vmem:[%s808 + $0x4c] sm:$0xf]
        %v3635 = vld [vmem:[%s808 + $0x50] sm:$0xf]
        %v3636 = vld [vmem:[%s808 + $0x54] sm:$0xf]
        %v3637 = vld [vmem:[%s808 + $0x58] sm:$0xf]
        %v3638 = vld [vmem:[%s808 + $0x5c] sm:$0xf]
        %v3639 = vld [vmem:[%s808 + $0x60] sm:$0xf]
        %v3640 = vld [vmem:[%s808 + $0x64] sm:$0xf]
        %v3641 = vld [vmem:[%s808 + $0x68] sm:$0xf]
        %v3642 = vld [vmem:[%s808 + $0x6c] sm:$0xf]
        %v3643 = vld [vmem:[%s808 + $0x70] sm:$0xf]
        %v3644 = vld [vmem:[%s808 + $0x74] sm:$0xf]
        %v3645 = vld [vmem:[%s808 + $0x78] sm:$0xf]
        %v3646 = vld [vmem:[%s808 + $0x7c] sm:$0xf]
        %v3647 = vld [vmem:[%s938] sm:$0x1]
        %v3649 = vlaneseq
        %v3650 = vshrl.u32 %v3649, 7
        %v3651 = vsub.s32 0, %v3650
        %v3652 = vrot.slane %v3647, %v3651
        %v3686 = vunpack.c.l.b16 %v3615
        %v3687 = vunpack.c.l.b16 %v3616
        %v3688 = vunpack.c.l.b16 %v3617
        %v3689 = vunpack.c.l.b16 %v3618
        %v3690 = vunpack.c.l.b16 %v3619
        %v3691 = vunpack.c.l.b16 %v3620
        %v3692 = vunpack.c.l.b16 %v3621
        %v3693 = vunpack.c.l.b16 %v3622
        %v3694 = vunpack.c.l.b16 %v3623
        %v3695 = vunpack.c.l.b16 %v3624
        %v3696 = vunpack.c.l.b16 %v3625
        %v3697 = vunpack.c.l.b16 %v3626
        %v3698 = vunpack.c.l.b16 %v3627
        %v3699 = vunpack.c.l.b16 %v3628
        %v3700 = vunpack.c.l.b16 %v3629
        %v3701 = vunpack.c.l.b16 %v3630
        %v3702 = vunpack.c.l.b16 %v3631
        %v3703 = vunpack.c.l.b16 %v3632
        %v3704 = vunpack.c.l.b16 %v3633
        %v3705 = vunpack.c.l.b16 %v3634
        %v3706 = vunpack.c.l.b16 %v3635
        %v3707 = vunpack.c.l.b16 %v3636
        %v3708 = vunpack.c.l.b16 %v3637
        %v3709 = vunpack.c.l.b16 %v3638
        %v3710 = vunpack.c.l.b16 %v3639
        %v3711 = vunpack.c.l.b16 %v3640
        %v3712 = vunpack.c.l.b16 %v3641
        %v3713 = vunpack.c.l.b16 %v3642
        %v3714 = vunpack.c.l.b16 %v3643
        %v3715 = vunpack.c.l.b16 %v3644
        %v3716 = vunpack.c.l.b16 %v3645
        %v3717 = vunpack.c.l.b16 %v3646
        %v3718 = vpack.c.b16 %v3687, %v3686
        %v3719 = vpack.c.b16 %v3689, %v3688
        %v3720 = vpack.c.b16 %v3691, %v3690
        %v3721 = vpack.c.b16 %v3693, %v3692
        %v3722 = vpack.c.b16 %v3695, %v3694
        %v3723 = vpack.c.b16 %v3697, %v3696
        %v3724 = vpack.c.b16 %v3699, %v3698
        %v3725 = vpack.c.b16 %v3701, %v3700
        %v3726 = vpack.c.b16 %v3703, %v3702
        %v3727 = vpack.c.b16 %v3705, %v3704
        %v3728 = vpack.c.b16 %v3707, %v3706
        %v3729 = vpack.c.b16 %v3709, %v3708
        %v3730 = vpack.c.b16 %v3711, %v3710
        %v3731 = vpack.c.b16 %v3713, %v3712
        %v3732 = vpack.c.b16 %v3715, %v3714
        %v3733 = vpack.c.b16 %v3717, %v3716
        %3750 = vmatprep.subr.bf16.mxu0 0
        %3751 = vmatpush1.bf16.msra.mxu0 %v3718
        %3752 = vmatprep.subr.bf16.mxu0 0
        %3753 = vmatpush1.bf16.msra.mxu0 %v3719
        %3754 = vmatprep.subr.bf16.mxu0 0
        %3755 = vmatpush1.bf16.msra.mxu0 %v3720
        %3756 = vmatprep.subr.bf16.mxu0 0
        %3757 = vmatpush1.bf16.msra.mxu0 %v3721
        %3758 = vmatprep.subr.bf16.mxu0 0
        %3759 = vmatpush1.bf16.msra.mxu0 %v3722
        %3760 = vmatprep.subr.bf16.mxu0 0
        %3761 = vmatpush1.bf16.msra.mxu0 %v3723
        %3762 = vmatprep.subr.bf16.mxu0 0
        %3763 = vmatpush1.bf16.msra.mxu0 %v3724
        %3764 = vmatprep.subr.bf16.mxu0 0
        %3765 = vmatpush1.bf16.msra.mxu0 %v3725
        %3766 = vmatprep.subr.bf16.mxu0 0
        %3767 = vmatpush1.bf16.msra.mxu0 %v3726
        %3768 = vmatprep.subr.bf16.mxu0 0
        %3769 = vmatpush1.bf16.msra.mxu0 %v3727
        %3770 = vmatprep.subr.bf16.mxu0 0
        %3771 = vmatpush1.bf16.msra.mxu0 %v3728
        %3772 = vmatprep.subr.bf16.mxu0 0
        %3773 = vmatpush1.bf16.msra.mxu0 %v3729
        %3774 = vmatprep.subr.bf16.mxu0 0
        %3775 = vmatpush1.bf16.msra.mxu0 %v3730
        %3776 = vmatprep.subr.bf16.mxu0 0
        %3777 = vmatpush1.bf16.msra.mxu0 %v3731
        %3778 = vmatprep.subr.bf16.mxu0 0
        %3779 = vmatpush1.bf16.msra.mxu0 %v3732
        %3780 = vmatprep.subr.bf16.mxu0 0
        %3781 = vmatpush1.bf16.msra.mxu0 %v3733
        %3782 = vmatprep.mubr.bf16.mxu0 %v3614
        %3783 = vmatmul.mubr.bf16.gmra.mrb[0].mxu0 %v3613
        %v3784 = vpop.f32.mrb[0].mxu0
        %v3785 = vadd.f32 %v3652, %v3784
        %v3786 = vpop.f32.mrb[0].mxu0
        %v3787 = vpop.f32.mrb[0].mxu0
        %v3788 = vadd.f32 %v3652, %v3787
        %v3789 = vpop.f32.mrb[0].mxu0
        %3790 = vdwg.mxu0
        %v3791 = vadd.f32 %v3455, %v3785
        %v3792 = vadd.f32 %v3456, %v3788
        %v3793 = vld [vmem:[%s941] sm:$0x1]
        %v3794 = vld [vmem:[%s944] sm:$0x1]
        %3795 = vadd.xlane.f32.xlu0 %v3791
        %v3796 = vpop.xlane.xlu0 %3795
        %3797 = vadd.xlane.f32.xlu0 %v3792
        %v3798 = vpop.xlane.xlu0 %3797
        %v3799 = vmul.f32 %v3796, %v3422
        %v3800 = vmul.f32 %v3798, %v3422
        %v3801 = vsub.f32 %v3791, %v3799
        %v3802 = vsub.f32 %v3792, %v3800
        %v3803 = vmul.f32 %v3801, %v3801
        %v3804 = vmul.f32 %v3802, %v3802
        %3805 = vadd.xlane.f32.xlu0 %v3803
        %v3806 = vpop.xlane.xlu0 %3805
        %3807 = vadd.xlane.f32.xlu0 %v3804
        %v3808 = vpop.xlane.xlu0 %3807
        %v3809 = vmul.f32 %v3806, %v3422
        %v3810 = vmul.f32 %v3808, %v3422
        %v3811 = vadd.f32 %v3809, 1e-05
        %v3812 = vadd.f32 %v3810, 1e-05
        %v3813 = vrsqrt.pop %v3811
        %v3814 = vrsqrt.pop %v3812
        %v3815 = vmul.f32 %v3801, %v3813
        %v3816 = vmul.f32 %v3802, %v3814
        %v3818 = vlaneseq
        %v3819 = vshrl.u32 %v3818, 7
        %v3820 = vsub.s32 0, %v3819
        %v3821 = vrot.slane %v3793, %v3820
        %v3823 = vmul.f32 %v3815, %v3821
        %v3824 = vmul.f32 %v3816, %v3821
        %v3826 = vlaneseq
        %v3827 = vshrl.u32 %v3826, 7
        %v3828 = vsub.s32 0, %v3827
        %v3829 = vrot.slane %v3794, %v3828
        %v3831 = vadd.f32 %v3823, %v3829
        %v3832 = vadd.f32 %v3824, %v3829
        %3833 = vst [vmem:[#allocation2] sm:$0xff] %v3831
        %3834 = vst [vmem:[#allocation2 + $0x8] sm:$0xff] %v3832
        %p3835 = scmp.eq.s32.totalorder %s40, 1
        // Predicated region
        $region125: #{tpu_custom_call.1} parent=87 // pred_check
          %p3836 = pneg %p3835
        $region126: #{tpu_custom_call.1} parent=87 // pred_check_branch
          %3838 = sbr.rel (%p3836) target = $region128
        $region127: #{tpu_custom_call.1} parent=87 // pred_region
          %3839 = vst [vmem:[%s916] sm:$0xff] %v3831
          %3840 = vst [vmem:[%s916 + $0x8] sm:$0xff] %v3832
        $region128: #{tpu_custom_call.1} parent=87 // pred_fallthru
          _
        %s3841 = sand.u32 %s492, 1
        %s3842 = scalar_lea.sflag [#allocation5], %s3841
        %s3843 = sand.u32 %s492, 1
        %s3844 = smul.addr %s3843, 16
        %s3845 = scalar_lea.vmem [#allocation14], %s3844
        // Predicated region
        $region129: #{tpu_custom_call.1} parent=87 // pred_check
          %p3846 = pneg %p502
        $region130: #{tpu_custom_call.1} parent=87 // pred_check_branch
          %3848 = sbr.rel (%p3846) target = $region132
        $region131: #{tpu_custom_call.1} parent=87 // pred_region
          %s3850 = ssub.s32 256, 256
          %3851 = vsyncadd %s3842, %s3850
          %s3852 = smul.addr %s39, 2
          %s3853 = smul.addr %s3852, 128
          %s3854 = scalar_lea.hbm %s17, %s3853
          %s3855 = sshll.u32 %s3845, 4
          %s3856 = int_to_ptr.vmem [resolvable:$true] %s3855
          %3861 = dma.vmem_to_hbm [thread:$0]  %s3856, 256, %s3854, %s3842, 128, 128, 8
        $region132: #{tpu_custom_call.1} parent=87 // pred_fallthru
          _
      $region88: #{tpu_custom_call.1} parent=5 // pred_fallthru
        _
      %p3862 = scmp.le.s32.totalorder 2, %s30
      // Predicated region
      $region133: #{tpu_custom_call.1} parent=5 // pred_check
        %p3863 = pneg %p3862
      $region134: #{tpu_custom_call.1} parent=5 // pred_check_branch
        %3865 = sbr.rel (%p3863) target = $region136
      $region135: #{tpu_custom_call.1} parent=5 // pred_region
        %s3866 = ssub.s32 %s30, 2
        // Predicated region
        $region137: #{tpu_custom_call.1} parent=135 // pred_check
          %p3867 = pneg %p508
        $region138: #{tpu_custom_call.1} parent=135 // pred_check_branch
          %3869 = sbr.rel (%p3867) target = $region140
        $region139: #{tpu_custom_call.1} parent=135 // pred_region
          %s3870 = sand.u32 %s493, 1
          %s3871 = scalar_lea.sflag [#allocation5], %s3870
          %s3872 = sand.u32 %s493, 1
          %s3873 = smul.addr %s3872, 16
          %s3874 = scalar_lea.vmem [#allocation14], %s3873
          %3875 = dma.done %s3871, 256
        $region140: #{tpu_custom_call.1} parent=135 // pred_fallthru
          _
      $region136: #{tpu_custom_call.1} parent=5 // pred_fallthru
        _
    $region6: #{tpu_custom_call.1} parent=1 // loop_footer
      %s34 = sadd.s32 1, %s30
    $region7: #{tpu_custom_call.1} parent=1 // loop_footer_branch
      %29 = sbr.rel target = $region3
    $region8: #{tpu_custom_call.1} parent=1 // loop_exit
      _
    %3876 = vsyncpa [#allocation4], 1
    %s3877 = scalar_lea.sflag [#allocation4], 1
    %3878 = vsyncpa %s3877, 1
    %3879 = vsyncpa [#allocation7], 1
    %3880 = vsyncpa [#allocation5], 1
    %s3881 = scalar_lea.sflag [#allocation5], 1
    %3882 = vsyncpa %s3881, 1

</llo_original>
